<compile_context>
chip_gen: v6e
topology: v6e:2x2x1
jax: 0.10.0
libtpu: 0.0.40
codegen_flags: <defaults>
</compile_context>

<pallas_src>
import jax
import jax.numpy as jnp
from jax.experimental import pallas as pl
from jax.experimental.pallas import tpu as pltpu

IN_FEATURES = 10
OUT_FEATURES = 1

LANES = 128                       # samples packed per row (one vreg lane span)
PACK_W = IN_FEATURES * LANES      # 1280 f32 per packed row (= 10 lane groups)

TILE_ROWS_DEFAULT = 1024          # 131072 samples / ~5 MiB useful input per tile
MIN_PALLAS_BATCH = 1024           # below this, dispatch + grid overhead dominate


def _round_up(x, m):
    return ((x + m - 1) // m) * m


def _linear_kernel(x_ref, w_ref, b_ref, o_ref):
    """One batch tile of y = x @ w.T + b in the lane-dense packed layout.

    x_ref: (tile_rows, 1280) VMEM  packed batch tile (128 samples per row)
    w_ref: (1280, 128)       VMEM  block-diagonal weight, grid-resident
    b_ref: (1,)              SMEM  scalar bias
    o_ref: (tile_rows, 128)  VMEM  lane-dense output tile
    """
    # MXU matmul, K=1280, N=128.  HIGHEST precision keeps full f32 fidelity;
    # the extra MXU passes stay hidden under the HBM input DMA.
    y = jnp.dot(
        x_ref[...], w_ref[...],
        preferred_element_type=jnp.float32,
        precision=jax.lax.Precision.HIGHEST,
    )
    o_ref[...] = y + b_ref[0]


def linear_regression_forward(features, weight, bias, *, tile_rows=TILE_ROWS_DEFAULT):
    """features: (B, 10); weight: (1, 10) (PyTorch layout); bias: (1,).

    Returns a (B,) f32 array, matching `linear(features).reshape(-1)`.
    Best performance when B is a multiple of 128 (zero-copy repack, no slice).
    """
    features = features.astype(jnp.float32)
    w_vec = weight.astype(jnp.float32).reshape(IN_FEATURES)
    b_vec = bias.astype(jnp.float32).reshape(OUT_FEATURES)

    B = features.shape[0]

    # Tiny batches: plain JAX (VPU elementwise) beats kernel dispatch.
    if B < MIN_PALLAS_BATCH:
        return (features * w_vec).sum(axis=-1) + b_vec[0]

    b_pad = _round_up(B, LANES)
    if b_pad != B:
        # Ragged batch: one pad copy so the repack below stays a bitcast.
        # Zero rows produce y = bias and are sliced off at the end.
        features = jnp.pad(features, ((0, b_pad - B), (0, 0)))
    total_rows = b_pad // LANES

    # Zero-copy repack for row-major f32: (b_pad, 10) -> (b_pad/128, 1280).
    packed = features.reshape(total_rows, PACK_W)

    # Block-diagonal weight: w_bd[10*j + f, c] = w[f] * (j == c), so
    # packed @ w_bd contracts each sample's 10 features while keeping the
    # batch axis on lanes.  Built once in the wrapper (640 KiB, VMEM-resident
    # inside the kernel via a constant index_map).
    eye = jnp.eye(LANES, dtype=jnp.float32)
    w_bd = (eye[:, None, :] * w_vec[None, :, None]).reshape(PACK_W, LANES)

    # Tile sizing: multiple of 8 (sublanes), clamped to the batch.
    tile_rows = max(8, min(_round_up(tile_rows, 8), _round_up(total_rows, 8)))
    # v7x megacore: keep >= 2 "parallel" grid steps so both TCs get work.
    half_rows = _round_up(pl.cdiv(total_rows, 2), 8)
    if total_rows >= 16 and tile_rows > half_rows:
        tile_rows = half_rows
    num_tiles = pl.cdiv(total_rows, tile_rows)

    cost = pl.CostEstimate(
        flops=2 * total_rows * PACK_W * LANES,
        transcendentals=0,
        bytes_accessed=(b_pad * IN_FEATURES * 4        # packed input read
                        + b_pad * 4                     # output write
                        + PACK_W * LANES * 4 + 4),      # weight + bias
    )

    out = pl.pallas_call(
        _linear_kernel,
        out_shape=jax.ShapeDtypeStruct((total_rows, LANES), jnp.float32),
        grid_spec=pltpu.PrefetchScalarGridSpec(
            num_scalar_prefetch=0,
            grid=(num_tiles,),
            in_specs=[
                # Packed batch tiles stream through VMEM; tile i+1's DMA
                # overlaps tile i's compute/writeback (auto double-buffered).
                pl.BlockSpec((tile_rows, PACK_W), lambda i: (i, 0)),
                # Block-diagonal weight: constant block index -> VMEM-resident.
                pl.BlockSpec((PACK_W, LANES), lambda i: (0, 0)),
                # Scalar bias lives in SMEM (no VMEM tile wasted on 4 bytes).
                pl.BlockSpec(memory_space=pltpu.MemorySpace.SMEM),
            ],
            out_specs=pl.BlockSpec((tile_rows, LANES), lambda i: (i, 0)),
        ),
        compiler_params=pltpu.CompilerParams(
            # Independent batch tiles: shard across v7x's 2 TensorCores.
            dimension_semantics=("parallel",),
            # Explicit scoped-VMEM budget with headroom: ~13 MiB used by the
            # default tile; 48 MiB stays under v7x's 64 MiB physical VMEM.
            vmem_limit_bytes=48 * 1024 * 1024,
        ),
        cost_estimate=cost,
    )(packed, w_bd, b_vec)

    result = out.reshape(-1)        # (total_rows, 128) -> (b_pad,): bitcast
    if b_pad != B:
        result = result[:B]         # only the ragged-batch path pays a slice
    return result


if __name__ == "__main__":
    key = jax.random.PRNGKey(0)
    k_x, k_w, k_b = jax.random.split(key, 3)

    # Parameter init mimicking torch.nn.Linear's default:
    # uniform(-1/sqrt(in_features), 1/sqrt(in_features)).
    bound = 1.0 / (IN_FEATURES ** 0.5)
    weight = jax.random.uniform(
        k_w, (OUT_FEATURES, IN_FEATURES), dtype=jnp.float32,
        minval=-bound, maxval=bound)
    bias = jax.random.uniform(
        k_b, (OUT_FEATURES,), dtype=jnp.float32, minval=-bound, maxval=bound)

    def reference(x):
        # Pure-VPU f32 reference (no MXU precision ambiguity).
        return (x * weight.reshape(-1)).sum(axis=-1) + bias[0]

    # 1) Aligned batch (multiple of 128): zero-copy repack, no output slice,
    #    2 grid tiles with a ragged last block.
    feats_aligned = jax.random.normal(k_x, (2560, IN_FEATURES), dtype=jnp.float32)
    out_aligned = jax.block_until_ready(
        linear_regression_forward(feats_aligned, weight, bias))
    assert out_aligned.shape == (2560,), out_aligned.shape
    assert jnp.allclose(out_aligned, reference(feats_aligned), atol=1e-4, rtol=1e-4)

    # 2) Ragged batch (2500 = 19*128 + 68): pad + slice path.
    feats_ragged = feats_aligned[:2500]
    out_ragged = jax.block_until_ready(
        linear_regression_forward(feats_ragged, weight, bias))
    assert out_ragged.shape == (2500,), out_ragged.shape
    assert jnp.allclose(out_ragged, reference(feats_ragged), atol=1e-4, rtol=1e-4)

    # 3) Small explicit tile size: exercises a multi-tile grid at modest B.
    feats_mid = feats_aligned[:1280]
    out_mid = jax.block_until_ready(
        linear_regression_forward(feats_mid, weight, bias, tile_rows=8))
    assert out_mid.shape == (1280,), out_mid.shape
    assert jnp.allclose(out_mid, reference(feats_mid), atol=1e-4, rtol=1e-4)

    # 4) Tiny-batch fallback path (plain JAX, no kernel launch).
    feats_small = feats_aligned[:8]
    out_small = jax.block_until_ready(
        linear_regression_forward(feats_small, weight, bias))
    assert out_small.shape == (8,), out_small.shape
    assert jnp.allclose(out_small, reference(feats_small), atol=1e-4, rtol=1e-4)

    print("KERNEL_OK")
</pallas_src>

<mosaic_0001>
module attributes {stable_mosaic.version = 11 : i64} {
  func.func @_linear_kernel(%arg0: i32, %arg1: memref<16x1280xf32, #tpu.memory_space<vmem>>, %arg2: memref<1280x128xf32, #tpu.memory_space<vmem>>, %arg3: memref<1xf32, #tpu.memory_space<smem>>, %arg4: memref<16x128xf32, #tpu.memory_space<vmem>>) attributes {dimension_semantics = [#tpu.dimension_semantics<parallel>], iteration_bounds = array<i64: 2>, scalar_prefetch = 0 : i64, scratch_operands = 0 : i64, tpu.core_type = #tpu.core_type<tc>, window_params = [{transform_indices = @transform_0, window_bounds = array<i64: 16, 1280>}, {pipeline_mode = #tpu.pipeline_mode<synchronous>, transform_indices = @transform_1, window_bounds = array<i64: 1280, 128>}, {transform_indices = @transform_2, window_bounds = array<i64: 1>}, {transform_indices = @transform_3, window_bounds = array<i64: 16, 128>}]} {
    %c0 = arith.constant 0 : index
    %c0_0 = arith.constant 0 : index
    %0 = vector.load %arg1[%c0, %c0_0] : memref<16x1280xf32, #tpu.memory_space<vmem>>, vector<16x1280xf32>
    %c0_1 = arith.constant 0 : index
    %c0_2 = arith.constant 0 : index
    %1 = vector.load %arg2[%c0_1, %c0_2] : memref<1280x128xf32, #tpu.memory_space<vmem>>, vector<1280x128xf32>
    %cst = arith.constant dense<0.000000e+00> : vector<16x128xf32>
    %2 = tpu.matmul %0, %1, %cst {dimension_numbers = #tpu.dot_dimension_numbers<[1], [0], [0], [1], [0, 0, 1, 1], [], []>, precision = #tpu.contract_precision<fp32>} : vector<16x1280xf32>, vector<1280x128xf32>, vector<16x128xf32> -> vector<16x128xf32>
    %c0_3 = arith.constant 0 : index
    %3 = memref.load %arg3[%c0_3] : memref<1xf32, #tpu.memory_space<smem>>
    %4 = vector.broadcast %3 : f32 to vector<16x128xf32>
    %5 = arith.addf %2, %4 : vector<16x128xf32>
    %c0_4 = arith.constant 0 : index
    %c0_5 = arith.constant 0 : index
    %6 = vector.load %arg4[%c0_4, %c0_5] : memref<16x128xf32, #tpu.memory_space<vmem>>, vector<16x128xf32>
    tpu.vector_store %arg4[%c0_4, %c0_5], %5 {strides = array<i32>} : memref<16x128xf32, #tpu.memory_space<vmem>>, vector<16x128xf32>,
    return
  }
  func.func @transform_0(%arg0: i32) -> (i32, i32) {
    %c0_i32 = arith.constant 0 : i32
    %c0_i32_0 = arith.constant 0 : i32
    return %arg0, %c0_i32 : i32, i32
  }
  func.func @transform_1(%arg0: i32) -> (i32, i32) {
    %c0_i32 = arith.constant 0 : i32
    %c0_i32_0 = arith.constant 0 : i32
    %c0_i32_1 = arith.constant 0 : i32
    return %c0_i32, %c0_i32_0 : i32, i32
  }
  func.func @transform_2(%arg0: i32) -> i32 {
    %c0_i32 = arith.constant 0 : i32
    %c0_i32_0 = arith.constant 0 : i32
    return %c0_i32 : i32
  }
  func.func @transform_3(%arg0: i32) -> (i32, i32) {
    %c0_i32 = arith.constant 0 : i32
    %c0_i32_0 = arith.constant 0 : i32
    return %arg0, %c0_i32 : i32, i32
  }
}

</mosaic_0001>

<llo_original>
// kernel: tpu_custom_call.1
$region0: #{tpu_custom_call.1}
  #allocation0 [shape = 'u32[]', space=smem, size = 0x4, offset = 0x4, fixed_abs, tag = 'smem constant byte address 0x4 - core index']
  #allocation1 [shape = 'u32[144,128]{1,0:T(1,128)}', space=vmem, size = 0x12000, scoped, tag = 'internal scratch']
  #allocation2 [shape = 'f32[1]{0:T(128)S(6)}', space=smem, size = 0x200, scoped, tag = 'scoped memory for tpu_custom_call.1']
  %s0 = inlined_call_operand.hbm [shape: f32[20,1280], index: 0, kind: input, shape index: {}]
  %s1 = inlined_call_operand.hbm [shape: f32[1280,128], index: 1, kind: input, shape index: {}]
  %s2 = inlined_call_operand.<no memory space> [shape: f32[1], index: 2, kind: input, shape index: {}]
  %s3 = inlined_call_operand.hbm [shape: f32[20,128], index: 3, kind: output, shape index: {}]
  %s4 = sld [smem:[#allocation0]]
  $region53: #{tpu_custom_call.1} parent=0
    _
  %s6 = ssub.s32 1, %s4
  %s7 = scalar_select 0, %s6, %s4
  %8 = sst [smem:[#allocation2]] %s2
  $region1: #{tpu_custom_call.1} parent=0
    #allocation3 [shape = 'u8[163840]{0}', space=vmem, size = 0x28000, scoped, tag = 'input window, operand 0']
    #allocation4 [shape = 's32[2]{0}', space=sflag, size = 0x8, scoped, tag = 'scoped memory for tpu_custom_call.1']
    #allocation5 [shape = 's32[2]{0}', space=sflag, size = 0x8, scoped, tag = 'scoped memory for tpu_custom_call.1']
    #allocation6 [shape = 'u8[655360]{0}', space=vmem, size = 0xa0000, scoped, tag = 'input window, operand 1, single buffered']
    #allocation7 [shape = 's32[1]{0}', space=sflag, size = 0x4, scoped, tag = 'scoped memory for tpu_custom_call.1']
    #allocation8 [shape = 'u8[16384]{0}', space=vmem, size = 0x4000, scoped, tag = 'output window, operand 0']
    %9 = vsyncpa [#allocation4], 0
    %s10 = scalar_lea.sflag [#allocation4], 1
    %11 = vsyncpa %s10, 0
    %12 = vsyncpa [#allocation7], 0
    %13 = vsyncpa [#allocation5], 0
    %s14 = scalar_lea.sflag [#allocation5], 1
    %15 = vsyncpa %s14, 0
    loop: start=0, step=1, limit=4
    $region2: #{tpu_custom_call.1} parent=1 // loop_pre_header
      _
    $region3: #{tpu_custom_call.1} parent=1 // loop_header
      %s17 = sphi 0, %s21
      %p18 = scmp.ge.s32.totalorder %s17, 4
      %s27 = sphi 0, %s29
      %s30 = sphi 0, %s27
      %s31 = sphi 0, %s30
      %s47 = sphi 0, %s31
      %s51 = sphi 0, %s51
      %s53 = sphi 0, %s51
      %s54 = sphi 0, %s53
      %s68 = sphi 0, %s54
      %s72 = sphi 0, %s72
      %s74 = sphi 0, %s72
      %s75 = sphi 0, %s74
      %s89 = sphi 0, %s75
      %s95 = sphi 0, %s97
      %s98 = sphi 0, %s95
      %s99 = sphi 0, %s98
      %s115 = sphi 0, %s99
    $region4: #{tpu_custom_call.1} parent=1 // loop_header_branch
      %20 = sbr.rel (%p18) target = $region8
    $region5: #{tpu_custom_call.1} parent=1 // loop_body
      %s22 = ssub.s32 %s17, 1
      %s23 = ssub.s32 %s17, 2
      %s24 = sadd.s32 %s17, 1
      %s25 = ssub.s32 %s17, %s24
      %p26 = scmp.eq.s32.totalorder %s25, 0
      %s28 = sadd.s32 %s27, 1
      %s29 = scalar_select %p26, %s27, %s28
      %p32 = pneg %p26
      %p33 = scmp.eq.s32.totalorder %s17, 1
      %p34 = por %p32, %p33
      %p35 = scmp.ne.s32.totalorder %s27, %s30
      %p36 = scmp.eq.s32.totalorder %s17, 0
      %p37 = por %p35, %p36
      %p38 = scmp.ne.s32.totalorder %s27, %s30
      %p39 = scmp.eq.s32.totalorder %s22, 1
      %p40 = por %p38, %p39
      %p41 = scmp.ne.s32.totalorder %s30, %s31
      %p42 = scmp.eq.s32.totalorder %s22, 0
      %p43 = por %p41, %p42
      %p44 = scmp.ne.s32.totalorder %s30, %s31
      %p45 = scmp.eq.s32.totalorder %s23, 1
      %p46 = por %p44, %p45
      %p48 = scmp.ne.s32.totalorder %s31, %s47
      %p49 = scmp.eq.s32.totalorder %s23, 0
      %p50 = por %p48, %p49
      %s52 = sadd.s32 %s51, 1
      %p55 = scmp.eq.s32.totalorder %s17, 1
      %p56 = scmp.ne.s32.totalorder %s51, %s53
      %p57 = scmp.eq.s32.totalorder %s17, 0
      %p58 = por %p56, %p57
      %p59 = scmp.ne.s32.totalorder %s51, %s53
      %p60 = scmp.eq.s32.totalorder %s22, 1
      %p61 = por %p59, %p60
      %p62 = scmp.ne.s32.totalorder %s53, %s54
      %p63 = scmp.eq.s32.totalorder %s22, 0
      %p64 = por %p62, %p63
      %p65 = scmp.ne.s32.totalorder %s53, %s54
      %p66 = scmp.eq.s32.totalorder %s23, 1
      %p67 = por %p65, %p66
      %p69 = scmp.ne.s32.totalorder %s54, %s68
      %p70 = scmp.eq.s32.totalorder %s23, 0
      %p71 = por %p69, %p70
      %s73 = sadd.s32 %s72, 1
      %p76 = scmp.eq.s32.totalorder %s17, 1
      %p77 = scmp.ne.s32.totalorder %s72, %s74
      %p78 = scmp.eq.s32.totalorder %s17, 0
      %p79 = por %p77, %p78
      %p80 = scmp.ne.s32.totalorder %s72, %s74
      %p81 = scmp.eq.s32.totalorder %s22, 1
      %p82 = por %p80, %p81
      %p83 = scmp.ne.s32.totalorder %s74, %s75
      %p84 = scmp.eq.s32.totalorder %s22, 0
      %p85 = por %p83, %p84
      %p86 = scmp.ne.s32.totalorder %s74, %s75
      %p87 = scmp.eq.s32.totalorder %s23, 1
      %p88 = por %p86, %p87
      %p90 = scmp.ne.s32.totalorder %s75, %s89
      %p91 = scmp.eq.s32.totalorder %s23, 0
      %p92 = por %p90, %p91
      %s93 = ssub.s32 %s17, %s24
      %p94 = scmp.eq.s32.totalorder %s93, 0
      %s96 = sadd.s32 %s95, 1
      %s97 = scalar_select %p94, %s95, %s96
      %p100 = pneg %p94
      %p101 = scmp.eq.s32.totalorder %s17, 1
      %p102 = por %p100, %p101
      %p103 = scmp.ne.s32.totalorder %s95, %s98
      %p104 = scmp.eq.s32.totalorder %s17, 0
      %p105 = por %p103, %p104
      %p106 = scmp.ne.s32.totalorder %s95, %s98
      %p107 = scmp.eq.s32.totalorder %s22, 1
      %p108 = por %p106, %p107
      %p109 = scmp.ne.s32.totalorder %s98, %s99
      %p110 = scmp.eq.s32.totalorder %s22, 0
      %p111 = por %p109, %p110
      %p112 = scmp.ne.s32.totalorder %s98, %s99
      %p113 = scmp.eq.s32.totalorder %s23, 1
      %p114 = por %p112, %p113
      %p116 = scmp.ne.s32.totalorder %s99, %s115
      %p117 = scmp.eq.s32.totalorder %s23, 0
      %p118 = por %p116, %p117
      %p119 = scmp.le.s32.totalorder 1, %s17
      %p120 = scmp.lt.s32.totalorder %s17, 3
      %p121 = pnand %p119, %p120
      %p122 = pneg %p121
      // Predicated region
      $region9: #{tpu_custom_call.1} parent=5 // pred_check
        _
      $region10: #{tpu_custom_call.1} parent=5 // pred_check_branch
        %124 = sbr.rel (%p121) target = $region12
      $region11: #{tpu_custom_call.1} parent=5 // pred_region
        %s125 = ssub.s32 %s17, 1
        // Predicated region
        $region13: #{tpu_custom_call.1} parent=11 // pred_check
          %p126 = pneg %p64
        $region14: #{tpu_custom_call.1} parent=11 // pred_check_branch
          %128 = sbr.rel (%p126) target = $region16
        $region15: #{tpu_custom_call.1} parent=11 // pred_region
          %s130 = ssub.s32 20480, 20480
          %131 = vsyncadd [#allocation7], %s130
          %s132 = sshll.u32 [#allocation6], 4
          %s133 = int_to_ptr.vmem [resolvable:$true] %s132
          %138 = dma.hbm_to_vmem [thread:$0]  %s1, 20480, %s133, [#allocation7], 128, 128, 8
        $region16: #{tpu_custom_call.1} parent=11 // pred_fallthru
          _
        // Predicated region
        $region17: #{tpu_custom_call.1} parent=11 // pred_check
          %p139 = pneg %p85
        $region18: #{tpu_custom_call.1} parent=11 // pred_check_branch
          %141 = sbr.rel (%p139) target = $region20
        $region19: #{tpu_custom_call.1} parent=11 // pred_region
          _
        $region20: #{tpu_custom_call.1} parent=11 // pred_fallthru
          _
      $region12: #{tpu_custom_call.1} parent=5 // pred_fallthru
        _
      %p142 = scmp.lt.s32.totalorder %s17, 2
      // Predicated region
      $region21: #{tpu_custom_call.1} parent=5 // pred_check
        %p143 = pneg %p142
      $region22: #{tpu_custom_call.1} parent=5 // pred_check_branch
        %145 = sbr.rel (%p143) target = $region24
      $region23: #{tpu_custom_call.1} parent=5 // pred_region
        // Predicated region
        $region25: #{tpu_custom_call.1} parent=23 // pred_check
          %p146 = pneg %p37
        $region26: #{tpu_custom_call.1} parent=23 // pred_check_branch
          %148 = sbr.rel (%p146) target = $region28
        $region27: #{tpu_custom_call.1} parent=23 // pred_region
          %s149 = sand.u32 %s27, 1
          %s150 = scalar_lea.sflag [#allocation4], %s149
          %s151 = sand.u32 %s27, 1
          %s152 = smul.addr %s151, 160
          %s153 = scalar_lea.vmem [#allocation3], %s152
          %s154 = smul.u32 2, %s17
          %s155 = ssub.s32 3, %s154
          %p156 = scmp.lt.s32.totalorder %s155, 2
          %s157 = scalar_select %p156, %s155, 2
          %s158 = smul.u32 128, %s157
          %s159 = smul.u32 %s158, 10
          %s161 = ssub.s32 2560, %s159
          %162 = vsyncadd %s150, %s161
          %p163 = scmp.ne.s32.totalorder 0, %s159
          %s164 = smul.addr %s154, 10
          %s165 = smul.addr %s164, 128
          %s166 = scalar_lea.hbm %s0, %s165
          %s167 = smul.u32 80, %s157
          %s168 = sshll.u32 %s153, 4
          %s169 = int_to_ptr.vmem [resolvable:$true] %s168
          %s170 = sshll.u32 %s167, 4
          %174 = dma.hbm_to_vmem [thread:$0]  (%p163), %s166, %s170, %s169, %s150, 1280, 1280, 80
        $region28: #{tpu_custom_call.1} parent=23 // pred_fallthru
          _
      $region24: #{tpu_custom_call.1} parent=5 // pred_fallthru
        _
      %p175 = scmp.le.s32.totalorder 1, %s17
      %p176 = scmp.lt.s32.totalorder %s17, 3
      %p177 = pnand %p175, %p176
      %p178 = pneg %p177
      // Predicated region
      $region29: #{tpu_custom_call.1} parent=5 // pred_check
        _
      $region30: #{tpu_custom_call.1} parent=5 // pred_check_branch
        %180 = sbr.rel (%p177) target = $region32
      $region31: #{tpu_custom_call.1} parent=5 // pred_region
        %s181 = ssub.s32 %s17, 1
        %s182 = sand.u32 %s30, 1
        %s183 = scalar_lea.sflag [#allocation4], %s182
        %s184 = sand.u32 %s30, 1
        %s185 = smul.addr %s184, 160
        %s186 = scalar_lea.vmem [#allocation3], %s185
        // Predicated region
        $region33: #{tpu_custom_call.1} parent=31 // pred_check
          %p187 = pneg %p43
        $region34: #{tpu_custom_call.1} parent=31 // pred_check_branch
          %189 = sbr.rel (%p187) target = $region36
        $region35: #{tpu_custom_call.1} parent=31 // pred_region
          %190 = dma.done %s183, 2560
        $region36: #{tpu_custom_call.1} parent=31 // pred_fallthru
          _
        // Predicated region
        $region37: #{tpu_custom_call.1} parent=31 // pred_check
          %p191 = pneg %p64
        $region38: #{tpu_custom_call.1} parent=31 // pred_check_branch
          %193 = sbr.rel (%p191) target = $region40
        $region39: #{tpu_custom_call.1} parent=31 // pred_region
          %194 = dma.done [#allocation7], 20480
        $region40: #{tpu_custom_call.1} parent=31 // pred_fallthru
          _
        %s195 = sand.u32 %s30, 1
        %s196 = scalar_lea.sflag [#allocation4], %s195
        %s197 = sand.u32 %s30, 1
        %s198 = smul.addr %s197, 160
        %s199 = scalar_lea.vmem [#allocation3], %s198
        %p200 = pneg %p43
        %p201 = pneg %p40
        %p202 = pneg %p64
        %p203 = pneg %p61
        %p204 = pneg %p85
        %p205 = pneg %p82
        %p206 = pneg %p111
        %p207 = pneg %p108
        %s208 = sand.u32 %s98, 1
        %s209 = scalar_lea.sflag [#allocation5], %s208
        %s210 = sand.u32 %s98, 1
        %s211 = smul.addr %s210, 16
        %s212 = scalar_lea.vmem [#allocation8], %s211
        %s213 = smul.u32 2, %s22
        %s214 = ssub.s32 3, %s213
        %p215 = scmp.lt.s32.totalorder %s214, 2
        %s216 = scalar_select %p215, %s214, 2
        %s217 = smul.u32 128, %s216
        %s218 = smul.u32 %s217, 10
        %s219 = smul.u32 2, %s22
        %s220 = ssub.s32 3, %s219
        %p221 = scmp.lt.s32.totalorder %s220, 2
        %s222 = scalar_select %p221, %s220, 2
        %s223 = smul.u32 128, %s222
        %v224 = vld [vmem:[%s186] sm:$0xff]
        %v225 = vld [vmem:[%s186 + $0x8] sm:$0xff]
        %v226 = vld [vmem:[%s186 + $0x10] sm:$0xff]
        %v227 = vld [vmem:[%s186 + $0x18] sm:$0xff]
        %v228 = vld [vmem:[%s186 + $0x20] sm:$0xff]
        %v229 = vld [vmem:[%s186 + $0x28] sm:$0xff]
        %v230 = vld [vmem:[%s186 + $0x30] sm:$0xff]
        %v231 = vld [vmem:[%s186 + $0x38] sm:$0xff]
        %v232 = vld [vmem:[%s186 + $0x40] sm:$0xff]
        %v233 = vld [vmem:[%s186 + $0x48] sm:$0xff]
        %v234 = vld [vmem:[%s186 + $0x50] sm:$0xff]
        %v235 = vld [vmem:[%s186 + $0x58] sm:$0xff]
        %v236 = vld [vmem:[%s186 + $0x60] sm:$0xff]
        %v237 = vld [vmem:[%s186 + $0x68] sm:$0xff]
        %v238 = vld [vmem:[%s186 + $0x70] sm:$0xff]
        %v239 = vld [vmem:[%s186 + $0x78] sm:$0xff]
        %v240 = vld [vmem:[%s186 + $0x80] sm:$0xff]
        %v241 = vld [vmem:[%s186 + $0x88] sm:$0xff]
        %v242 = vld [vmem:[%s186 + $0x90] sm:$0xff]
        %v243 = vld [vmem:[%s186 + $0x98] sm:$0xff]
        %v244 = vld [vmem:[#allocation6] sm:$0xff]
        %v245 = vld [vmem:[#allocation6 + $0x8] sm:$0xff]
        %v246 = vld [vmem:[#allocation6 + $0x10] sm:$0xff]
        %v247 = vld [vmem:[#allocation6 + $0x18] sm:$0xff]
        %v248 = vld [vmem:[#allocation6 + $0x20] sm:$0xff]
        %v249 = vld [vmem:[#allocation6 + $0x28] sm:$0xff]
        %v250 = vld [vmem:[#allocation6 + $0x30] sm:$0xff]
        %v251 = vld [vmem:[#allocation6 + $0x38] sm:$0xff]
        %v252 = vld [vmem:[#allocation6 + $0x40] sm:$0xff]
        %v253 = vld [vmem:[#allocation6 + $0x48] sm:$0xff]
        %v254 = vld [vmem:[#allocation6 + $0x50] sm:$0xff]
        %v255 = vld [vmem:[#allocation6 + $0x58] sm:$0xff]
        %v256 = vld [vmem:[#allocation6 + $0x60] sm:$0xff]
        %v257 = vld [vmem:[#allocation6 + $0x68] sm:$0xff]
        %v258 = vld [vmem:[#allocation6 + $0x70] sm:$0xff]
        %v259 = vld [vmem:[#allocation6 + $0x78] sm:$0xff]
        %v260 = vld [vmem:[#allocation6 + $0x80] sm:$0xff]
        %v261 = vld [vmem:[#allocation6 + $0x88] sm:$0xff]
        %v262 = vld [vmem:[#allocation6 + $0x90] sm:$0xff]
        %v263 = vld [vmem:[#allocation6 + $0x98] sm:$0xff]
        %v264 = vld [vmem:[#allocation6 + $0xa0] sm:$0xff]
        %v265 = vld [vmem:[#allocation6 + $0xa8] sm:$0xff]
        %v266 = vld [vmem:[#allocation6 + $0xb0] sm:$0xff]
        %v267 = vld [vmem:[#allocation6 + $0xb8] sm:$0xff]
        %v268 = vld [vmem:[#allocation6 + $0xc0] sm:$0xff]
        %v269 = vld [vmem:[#allocation6 + $0xc8] sm:$0xff]
        %v270 = vld [vmem:[#allocation6 + $0xd0] sm:$0xff]
        %v271 = vld [vmem:[#allocation6 + $0xd8] sm:$0xff]
        %v272 = vld [vmem:[#allocation6 + $0xe0] sm:$0xff]
        %v273 = vld [vmem:[#allocation6 + $0xe8] sm:$0xff]
        %v274 = vld [vmem:[#allocation6 + $0xf0] sm:$0xff]
        %v275 = vld [vmem:[#allocation6 + $0xf8] sm:$0xff]
        %v276 = vld [vmem:[#allocation6 + $0x100] sm:$0xff]
        %v277 = vld [vmem:[#allocation6 + $0x108] sm:$0xff]
        %v278 = vld [vmem:[#allocation6 + $0x110] sm:$0xff]
        %v279 = vld [vmem:[#allocation6 + $0x118] sm:$0xff]
        %v280 = vld [vmem:[#allocation6 + $0x120] sm:$0xff]
        %v281 = vld [vmem:[#allocation6 + $0x128] sm:$0xff]
        %v282 = vld [vmem:[#allocation6 + $0x130] sm:$0xff]
        %v283 = vld [vmem:[#allocation6 + $0x138] sm:$0xff]
        %v284 = vld [vmem:[#allocation6 + $0x140] sm:$0xff]
        %v285 = vld [vmem:[#allocation6 + $0x148] sm:$0xff]
        %v286 = vld [vmem:[#allocation6 + $0x150] sm:$0xff]
        %v287 = vld [vmem:[#allocation6 + $0x158] sm:$0xff]
        %v288 = vld [vmem:[#allocation6 + $0x160] sm:$0xff]
        %v289 = vld [vmem:[#allocation6 + $0x168] sm:$0xff]
        %v290 = vld [vmem:[#allocation6 + $0x170] sm:$0xff]
        %v291 = vld [vmem:[#allocation6 + $0x178] sm:$0xff]
        %v292 = vld [vmem:[#allocation6 + $0x180] sm:$0xff]
        %v293 = vld [vmem:[#allocation6 + $0x188] sm:$0xff]
        %v294 = vld [vmem:[#allocation6 + $0x190] sm:$0xff]
        %v295 = vld [vmem:[#allocation6 + $0x198] sm:$0xff]
        %v296 = vld [vmem:[#allocation6 + $0x1a0] sm:$0xff]
        %v297 = vld [vmem:[#allocation6 + $0x1a8] sm:$0xff]
        %v298 = vld [vmem:[#allocation6 + $0x1b0] sm:$0xff]
        %v299 = vld [vmem:[#allocation6 + $0x1b8] sm:$0xff]
        %v300 = vld [vmem:[#allocation6 + $0x1c0] sm:$0xff]
        %v301 = vld [vmem:[#allocation6 + $0x1c8] sm:$0xff]
        %v302 = vld [vmem:[#allocation6 + $0x1d0] sm:$0xff]
        %v303 = vld [vmem:[#allocation6 + $0x1d8] sm:$0xff]
        %v304 = vld [vmem:[#allocation6 + $0x1e0] sm:$0xff]
        %v305 = vld [vmem:[#allocation6 + $0x1e8] sm:$0xff]
        %v306 = vld [vmem:[#allocation6 + $0x1f0] sm:$0xff]
        %v307 = vld [vmem:[#allocation6 + $0x1f8] sm:$0xff]
        %v308 = vld [vmem:[#allocation6 + $0x200] sm:$0xff]
        %v309 = vld [vmem:[#allocation6 + $0x208] sm:$0xff]
        %v310 = vld [vmem:[#allocation6 + $0x210] sm:$0xff]
        %v311 = vld [vmem:[#allocation6 + $0x218] sm:$0xff]
        %v312 = vld [vmem:[#allocation6 + $0x220] sm:$0xff]
        %v313 = vld [vmem:[#allocation6 + $0x228] sm:$0xff]
        %v314 = vld [vmem:[#allocation6 + $0x230] sm:$0xff]
        %v315 = vld [vmem:[#allocation6 + $0x238] sm:$0xff]
        %v316 = vld [vmem:[#allocation6 + $0x240] sm:$0xff]
        %v317 = vld [vmem:[#allocation6 + $0x248] sm:$0xff]
        %v318 = vld [vmem:[#allocation6 + $0x250] sm:$0xff]
        %v319 = vld [vmem:[#allocation6 + $0x258] sm:$0xff]
        %v320 = vld [vmem:[#allocation6 + $0x260] sm:$0xff]
        %v321 = vld [vmem:[#allocation6 + $0x268] sm:$0xff]
        %v322 = vld [vmem:[#allocation6 + $0x270] sm:$0xff]
        %v323 = vld [vmem:[#allocation6 + $0x278] sm:$0xff]
        %v324 = vld [vmem:[#allocation6 + $0x280] sm:$0xff]
        %v325 = vld [vmem:[#allocation6 + $0x288] sm:$0xff]
        %v326 = vld [vmem:[#allocation6 + $0x290] sm:$0xff]
        %v327 = vld [vmem:[#allocation6 + $0x298] sm:$0xff]
        %v328 = vld [vmem:[#allocation6 + $0x2a0] sm:$0xff]
        %v329 = vld [vmem:[#allocation6 + $0x2a8] sm:$0xff]
        %v330 = vld [vmem:[#allocation6 + $0x2b0] sm:$0xff]
        %v331 = vld [vmem:[#allocation6 + $0x2b8] sm:$0xff]
        %v332 = vld [vmem:[#allocation6 + $0x2c0] sm:$0xff]
        %v333 = vld [vmem:[#allocation6 + $0x2c8] sm:$0xff]
        %v334 = vld [vmem:[#allocation6 + $0x2d0] sm:$0xff]
        %v335 = vld [vmem:[#allocation6 + $0x2d8] sm:$0xff]
        %v336 = vld [vmem:[#allocation6 + $0x2e0] sm:$0xff]
        %v337 = vld [vmem:[#allocation6 + $0x2e8] sm:$0xff]
        %v338 = vld [vmem:[#allocation6 + $0x2f0] sm:$0xff]
        %v339 = vld [vmem:[#allocation6 + $0x2f8] sm:$0xff]
        %v340 = vld [vmem:[#allocation6 + $0x300] sm:$0xff]
        %v341 = vld [vmem:[#allocation6 + $0x308] sm:$0xff]
        %v342 = vld [vmem:[#allocation6 + $0x310] sm:$0xff]
        %v343 = vld [vmem:[#allocation6 + $0x318] sm:$0xff]
        %v344 = vld [vmem:[#allocation6 + $0x320] sm:$0xff]
        %v345 = vld [vmem:[#allocation6 + $0x328] sm:$0xff]
        %v346 = vld [vmem:[#allocation6 + $0x330] sm:$0xff]
        %v347 = vld [vmem:[#allocation6 + $0x338] sm:$0xff]
        %v348 = vld [vmem:[#allocation6 + $0x340] sm:$0xff]
        %v349 = vld [vmem:[#allocation6 + $0x348] sm:$0xff]
        %v350 = vld [vmem:[#allocation6 + $0x350] sm:$0xff]
        %v351 = vld [vmem:[#allocation6 + $0x358] sm:$0xff]
        %v352 = vld [vmem:[#allocation6 + $0x360] sm:$0xff]
        %v353 = vld [vmem:[#allocation6 + $0x368] sm:$0xff]
        %v354 = vld [vmem:[#allocation6 + $0x370] sm:$0xff]
        %v355 = vld [vmem:[#allocation6 + $0x378] sm:$0xff]
        %v356 = vld [vmem:[#allocation6 + $0x380] sm:$0xff]
        %v357 = vld [vmem:[#allocation6 + $0x388] sm:$0xff]
        %v358 = vld [vmem:[#allocation6 + $0x390] sm:$0xff]
        %v359 = vld [vmem:[#allocation6 + $0x398] sm:$0xff]
        %v360 = vld [vmem:[#allocation6 + $0x3a0] sm:$0xff]
        %v361 = vld [vmem:[#allocation6 + $0x3a8] sm:$0xff]
        %v362 = vld [vmem:[#allocation6 + $0x3b0] sm:$0xff]
        %v363 = vld [vmem:[#allocation6 + $0x3b8] sm:$0xff]
        %v364 = vld [vmem:[#allocation6 + $0x3c0] sm:$0xff]
        %v365 = vld [vmem:[#allocation6 + $0x3c8] sm:$0xff]
        %v366 = vld [vmem:[#allocation6 + $0x3d0] sm:$0xff]
        %v367 = vld [vmem:[#allocation6 + $0x3d8] sm:$0xff]
        %v368 = vld [vmem:[#allocation6 + $0x3e0] sm:$0xff]
        %v369 = vld [vmem:[#allocation6 + $0x3e8] sm:$0xff]
        %v370 = vld [vmem:[#allocation6 + $0x3f0] sm:$0xff]
        %v371 = vld [vmem:[#allocation6 + $0x3f8] sm:$0xff]
        %v372 = vld [vmem:[#allocation6 + $0x400] sm:$0xff]
        %v373 = vld [vmem:[#allocation6 + $0x408] sm:$0xff]
        %v374 = vld [vmem:[#allocation6 + $0x410] sm:$0xff]
        %v375 = vld [vmem:[#allocation6 + $0x418] sm:$0xff]
        %v376 = vld [vmem:[#allocation6 + $0x420] sm:$0xff]
        %v377 = vld [vmem:[#allocation6 + $0x428] sm:$0xff]
        %v378 = vld [vmem:[#allocation6 + $0x430] sm:$0xff]
        %v379 = vld [vmem:[#allocation6 + $0x438] sm:$0xff]
        %v380 = vld [vmem:[#allocation6 + $0x440] sm:$0xff]
        %v381 = vld [vmem:[#allocation6 + $0x448] sm:$0xff]
        %v382 = vld [vmem:[#allocation6 + $0x450] sm:$0xff]
        %v383 = vld [vmem:[#allocation6 + $0x458] sm:$0xff]
        %v384 = vld [vmem:[#allocation6 + $0x460] sm:$0xff]
        %v385 = vld [vmem:[#allocation6 + $0x468] sm:$0xff]
        %v386 = vld [vmem:[#allocation6 + $0x470] sm:$0xff]
        %v387 = vld [vmem:[#allocation6 + $0x478] sm:$0xff]
        %v388 = vld [vmem:[#allocation6 + $0x480] sm:$0xff]
        %v389 = vld [vmem:[#allocation6 + $0x488] sm:$0xff]
        %v390 = vld [vmem:[#allocation6 + $0x490] sm:$0xff]
        %v391 = vld [vmem:[#allocation6 + $0x498] sm:$0xff]
        %v392 = vld [vmem:[#allocation6 + $0x4a0] sm:$0xff]
        %v393 = vld [vmem:[#allocation6 + $0x4a8] sm:$0xff]
        %v394 = vld [vmem:[#allocation6 + $0x4b0] sm:$0xff]
        %v395 = vld [vmem:[#allocation6 + $0x4b8] sm:$0xff]
        %v396 = vld [vmem:[#allocation6 + $0x4c0] sm:$0xff]
        %v397 = vld [vmem:[#allocation6 + $0x4c8] sm:$0xff]
        %v398 = vld [vmem:[#allocation6 + $0x4d0] sm:$0xff]
        %v399 = vld [vmem:[#allocation6 + $0x4d8] sm:$0xff]
        %v400 = vld [vmem:[#allocation6 + $0x4e0] sm:$0xff]
        %v401 = vld [vmem:[#allocation6 + $0x4e8] sm:$0xff]
        %v402 = vld [vmem:[#allocation6 + $0x4f0] sm:$0xff]
        %v403 = vld [vmem:[#allocation6 + $0x4f8] sm:$0xff]
        %s404 = sld [smem:[#allocation2]]
        %v405 = vstv %s404
        %406 = vmatprep.subr.mxu0 0.0
        %v407 = vand.u32 %v259, 4294901760
        %408 = vmatpush1.msra.mxu0 %v407
        %409 = vmatprep.subr.mxu0 0.0
        %v410 = vand.u32 %v258, 4294901760
        %411 = vmatpush1.msra.mxu0 %v410
        %412 = vmatprep.subr.mxu0 0.0
        %v413 = vand.u32 %v257, 4294901760
        %414 = vmatpush1.msra.mxu0 %v413
        %415 = vmatprep.subr.mxu0 0.0
        %v416 = vand.u32 %v256, 4294901760
        %417 = vmatpush1.msra.mxu0 %v416
        %418 = vmatprep.subr.mxu0 0.0
        %v419 = vand.u32 %v255, 4294901760
        %420 = vmatpush1.msra.mxu0 %v419
        %421 = vmatprep.subr.mxu0 0.0
        %v422 = vand.u32 %v254, 4294901760
        %423 = vmatpush1.msra.mxu0 %v422
        %424 = vmatprep.subr.mxu0 0.0
        %v425 = vand.u32 %v253, 4294901760
        %426 = vmatpush1.msra.mxu0 %v425
        %427 = vmatprep.subr.mxu0 0.0
        %v428 = vand.u32 %v252, 4294901760
        %429 = vmatpush1.msra.mxu0 %v428
        %430 = vmatprep.subr.mxu0 0.0
        %v431 = vand.u32 %v251, 4294901760
        %432 = vmatpush1.msra.mxu0 %v431
        %433 = vmatprep.subr.mxu0 0.0
        %v434 = vand.u32 %v250, 4294901760
        %435 = vmatpush1.msra.mxu0 %v434
        %436 = vmatprep.subr.mxu0 0.0
        %v437 = vand.u32 %v249, 4294901760
        %438 = vmatpush1.msra.mxu0 %v437
        %439 = vmatprep.subr.mxu0 0.0
        %v440 = vand.u32 %v248, 4294901760
        %441 = vmatpush1.msra.mxu0 %v440
        %442 = vmatprep.subr.mxu0 0.0
        %v443 = vand.u32 %v247, 4294901760
        %444 = vmatpush1.msra.mxu0 %v443
        %445 = vmatprep.subr.mxu0 0.0
        %v446 = vand.u32 %v246, 4294901760
        %447 = vmatpush1.msra.mxu0 %v446
        %448 = vmatprep.subr.mxu0 0.0
        %v449 = vand.u32 %v245, 4294901760
        %450 = vmatpush1.msra.mxu0 %v449
        %451 = vmatprep.subr.mxu0 0.0
        %v452 = vand.u32 %v244, 4294901760
        %453 = vmatpush1.msra.mxu0 %v452
        %454 = vmatprep.subr.mxu0 0.0
        %v455 = vand.u32 %v275, 4294901760
        %456 = vmatpush2.msra.mxu0 %v455
        %457 = vmatprep.subr.mxu0 0.0
        %v458 = vand.u32 %v274, 4294901760
        %459 = vmatpush2.msra.mxu0 %v458
        %460 = vmatprep.subr.mxu0 0.0
        %v461 = vand.u32 %v273, 4294901760
        %462 = vmatpush2.msra.mxu0 %v461
        %463 = vmatprep.subr.mxu0 0.0
        %v464 = vand.u32 %v272, 4294901760
        %465 = vmatpush2.msra.mxu0 %v464
        %466 = vmatprep.subr.mxu0 0.0
        %v467 = vand.u32 %v271, 4294901760
        %468 = vmatpush2.msra.mxu0 %v467
        %469 = vmatprep.subr.mxu0 0.0
        %v470 = vand.u32 %v270, 4294901760
        %471 = vmatpush2.msra.mxu0 %v470
        %472 = vmatprep.subr.mxu0 0.0
        %v473 = vand.u32 %v269, 4294901760
        %474 = vmatpush2.msra.mxu0 %v473
        %475 = vmatprep.subr.mxu0 0.0
        %v476 = vand.u32 %v268, 4294901760
        %477 = vmatpush2.msra.mxu0 %v476
        %478 = vmatprep.subr.mxu0 0.0
        %v479 = vand.u32 %v267, 4294901760
        %480 = vmatpush2.msra.mxu0 %v479
        %481 = vmatprep.subr.mxu0 0.0
        %v482 = vand.u32 %v266, 4294901760
        %483 = vmatpush2.msra.mxu0 %v482
        %484 = vmatprep.subr.mxu0 0.0
        %v485 = vand.u32 %v265, 4294901760
        %486 = vmatpush2.msra.mxu0 %v485
        %487 = vmatprep.subr.mxu0 0.0
        %v488 = vand.u32 %v264, 4294901760
        %489 = vmatpush2.msra.mxu0 %v488
        %490 = vmatprep.subr.mxu0 0.0
        %v491 = vand.u32 %v263, 4294901760
        %492 = vmatpush2.msra.mxu0 %v491
        %493 = vmatprep.subr.mxu0 0.0
        %v494 = vand.u32 %v262, 4294901760
        %495 = vmatpush2.msra.mxu0 %v494
        %496 = vmatprep.subr.mxu0 0.0
        %v497 = vand.u32 %v261, 4294901760
        %498 = vmatpush2.msra.mxu0 %v497
        %499 = vmatprep.subr.mxu0 0.0
        %v500 = vand.u32 %v260, 4294901760
        %501 = vmatpush2.msra.mxu0 %v500
        %v502 = vand.u32 %v225, 4294901760
        %v503 = vsub.f32 %v225, %v502
        %v504 = vand.u32 %v503, 4294901760
        %v505 = vsub.f32 %v503, %v504
        %v506 = vand.u32 %v505, 4294901760
        %507 = vmatprep.mubr.f32.mxu0 %v506
        %v508 = vand.u32 %v224, 4294901760
        %v509 = vsub.f32 %v224, %v508
        %v510 = vand.u32 %v509, 4294901760
        %v511 = vsub.f32 %v509, %v510
        %v512 = vand.u32 %v511, 4294901760
        %513 = vmatmul.mubr.f32.gmra.mxu0 %v512
        %v514 = vpop.f32.mrf.mxu0
        %v515 = vadd.f32 %v405, %v514
        %v516 = vpop.f32.mrf.mxu0
        %v517 = vand.u32 %v235, 4294901760
        %v518 = vsub.f32 %v235, %v517
        %v519 = vand.u32 %v518, 4294901760
        %v520 = vsub.f32 %v518, %v519
        %v521 = vand.u32 %v520, 4294901760
        %522 = vmatprep.mubr.f32.mxu0 %v521
        %v523 = vand.u32 %v234, 4294901760
        %v524 = vsub.f32 %v234, %v523
        %v525 = vand.u32 %v524, 4294901760
        %v526 = vsub.f32 %v524, %v525
        %v527 = vand.u32 %v526, 4294901760
        %528 = vmatmul.mubr.f32.gmra.mxu0 %v527
        %v529 = vpop.f32.mrf.mxu0
        %v530 = vadd.f32 %v405, %v529
        %v531 = vpop.f32.mrf.mxu0
        %532 = vdwg.mxu0
        %533 = vmatprep.subr.mxu0 0.0
        %v534 = vand.u32 %v259, 4294901760
        %v535 = vsub.f32 %v259, %v534
        %v536 = vand.u32 %v535, 4294901760
        %v537 = vsub.f32 %v535, %v536
        %v538 = vand.u32 %v537, 4294901760
        %539 = vmatpush1.msra.mxu0 %v538
        %540 = vmatprep.subr.mxu0 0.0
        %v541 = vand.u32 %v258, 4294901760
        %v542 = vsub.f32 %v258, %v541
        %v543 = vand.u32 %v542, 4294901760
        %v544 = vsub.f32 %v542, %v543
        %v545 = vand.u32 %v544, 4294901760
        %546 = vmatpush1.msra.mxu0 %v545
        %547 = vmatprep.subr.mxu0 0.0
        %v548 = vand.u32 %v257, 4294901760
        %v549 = vsub.f32 %v257, %v548
        %v550 = vand.u32 %v549, 4294901760
        %v551 = vsub.f32 %v549, %v550
        %v552 = vand.u32 %v551, 4294901760
        %553 = vmatpush1.msra.mxu0 %v552
        %554 = vmatprep.subr.mxu0 0.0
        %v555 = vand.u32 %v256, 4294901760
        %v556 = vsub.f32 %v256, %v555
        %v557 = vand.u32 %v556, 4294901760
        %v558 = vsub.f32 %v556, %v557
        %v559 = vand.u32 %v558, 4294901760
        %560 = vmatpush1.msra.mxu0 %v559
        %561 = vmatprep.subr.mxu0 0.0
        %v562 = vand.u32 %v255, 4294901760
        %v563 = vsub.f32 %v255, %v562
        %v564 = vand.u32 %v563, 4294901760
        %v565 = vsub.f32 %v563, %v564
        %v566 = vand.u32 %v565, 4294901760
        %567 = vmatpush1.msra.mxu0 %v566
        %568 = vmatprep.subr.mxu0 0.0
        %v569 = vand.u32 %v254, 4294901760
        %v570 = vsub.f32 %v254, %v569
        %v571 = vand.u32 %v570, 4294901760
        %v572 = vsub.f32 %v570, %v571
        %v573 = vand.u32 %v572, 4294901760
        %574 = vmatpush1.msra.mxu0 %v573
        %575 = vmatprep.subr.mxu0 0.0
        %v576 = vand.u32 %v253, 4294901760
        %v577 = vsub.f32 %v253, %v576
        %v578 = vand.u32 %v577, 4294901760
        %v579 = vsub.f32 %v577, %v578
        %v580 = vand.u32 %v579, 4294901760
        %581 = vmatpush1.msra.mxu0 %v580
        %582 = vmatprep.subr.mxu0 0.0
        %v583 = vand.u32 %v252, 4294901760
        %v584 = vsub.f32 %v252, %v583
        %v585 = vand.u32 %v584, 4294901760
        %v586 = vsub.f32 %v584, %v585
        %v587 = vand.u32 %v586, 4294901760
        %588 = vmatpush1.msra.mxu0 %v587
        %589 = vmatprep.subr.mxu0 0.0
        %v590 = vand.u32 %v251, 4294901760
        %v591 = vsub.f32 %v251, %v590
        %v592 = vand.u32 %v591, 4294901760
        %v593 = vsub.f32 %v591, %v592
        %v594 = vand.u32 %v593, 4294901760
        %595 = vmatpush1.msra.mxu0 %v594
        %596 = vmatprep.subr.mxu0 0.0
        %v597 = vand.u32 %v250, 4294901760
        %v598 = vsub.f32 %v250, %v597
        %v599 = vand.u32 %v598, 4294901760
        %v600 = vsub.f32 %v598, %v599
        %v601 = vand.u32 %v600, 4294901760
        %602 = vmatpush1.msra.mxu0 %v601
        %603 = vmatprep.subr.mxu0 0.0
        %v604 = vand.u32 %v249, 4294901760
        %v605 = vsub.f32 %v249, %v604
        %v606 = vand.u32 %v605, 4294901760
        %v607 = vsub.f32 %v605, %v606
        %v608 = vand.u32 %v607, 4294901760
        %609 = vmatpush1.msra.mxu0 %v608
        %610 = vmatprep.subr.mxu0 0.0
        %v611 = vand.u32 %v248, 4294901760
        %v612 = vsub.f32 %v248, %v611
        %v613 = vand.u32 %v612, 4294901760
        %v614 = vsub.f32 %v612, %v613
        %v615 = vand.u32 %v614, 4294901760
        %616 = vmatpush1.msra.mxu0 %v615
        %617 = vmatprep.subr.mxu0 0.0
        %v618 = vand.u32 %v247, 4294901760
        %v619 = vsub.f32 %v247, %v618
        %v620 = vand.u32 %v619, 4294901760
        %v621 = vsub.f32 %v619, %v620
        %v622 = vand.u32 %v621, 4294901760
        %623 = vmatpush1.msra.mxu0 %v622
        %624 = vmatprep.subr.mxu0 0.0
        %v625 = vand.u32 %v246, 4294901760
        %v626 = vsub.f32 %v246, %v625
        %v627 = vand.u32 %v626, 4294901760
        %v628 = vsub.f32 %v626, %v627
        %v629 = vand.u32 %v628, 4294901760
        %630 = vmatpush1.msra.mxu0 %v629
        %631 = vmatprep.subr.mxu0 0.0
        %v632 = vand.u32 %v245, 4294901760
        %v633 = vsub.f32 %v245, %v632
        %v634 = vand.u32 %v633, 4294901760
        %v635 = vsub.f32 %v633, %v634
        %v636 = vand.u32 %v635, 4294901760
        %637 = vmatpush1.msra.mxu0 %v636
        %638 = vmatprep.subr.mxu0 0.0
        %v639 = vand.u32 %v244, 4294901760
        %v640 = vsub.f32 %v244, %v639
        %v641 = vand.u32 %v640, 4294901760
        %v642 = vsub.f32 %v640, %v641
        %v643 = vand.u32 %v642, 4294901760
        %644 = vmatpush1.msra.mxu0 %v643
        %645 = vmatprep.subr.mxu0 0.0
        %v646 = vand.u32 %v275, 4294901760
        %v647 = vsub.f32 %v275, %v646
        %v648 = vand.u32 %v647, 4294901760
        %v649 = vsub.f32 %v647, %v648
        %v650 = vand.u32 %v649, 4294901760
        %651 = vmatpush2.msra.mxu0 %v650
        %652 = vmatprep.subr.mxu0 0.0
        %v653 = vand.u32 %v274, 4294901760
        %v654 = vsub.f32 %v274, %v653
        %v655 = vand.u32 %v654, 4294901760
        %v656 = vsub.f32 %v654, %v655
        %v657 = vand.u32 %v656, 4294901760
        %658 = vmatpush2.msra.mxu0 %v657
        %659 = vmatprep.subr.mxu0 0.0
        %v660 = vand.u32 %v273, 4294901760
        %v661 = vsub.f32 %v273, %v660
        %v662 = vand.u32 %v661, 4294901760
        %v663 = vsub.f32 %v661, %v662
        %v664 = vand.u32 %v663, 4294901760
        %665 = vmatpush2.msra.mxu0 %v664
        %666 = vmatprep.subr.mxu0 0.0
        %v667 = vand.u32 %v272, 4294901760
        %v668 = vsub.f32 %v272, %v667
        %v669 = vand.u32 %v668, 4294901760
        %v670 = vsub.f32 %v668, %v669
        %v671 = vand.u32 %v670, 4294901760
        %672 = vmatpush2.msra.mxu0 %v671
        %673 = vmatprep.subr.mxu0 0.0
        %v674 = vand.u32 %v271, 4294901760
        %v675 = vsub.f32 %v271, %v674
        %v676 = vand.u32 %v675, 4294901760
        %v677 = vsub.f32 %v675, %v676
        %v678 = vand.u32 %v677, 4294901760
        %679 = vmatpush2.msra.mxu0 %v678
        %680 = vmatprep.subr.mxu0 0.0
        %v681 = vand.u32 %v270, 4294901760
        %v682 = vsub.f32 %v270, %v681
        %v683 = vand.u32 %v682, 4294901760
        %v684 = vsub.f32 %v682, %v683
        %v685 = vand.u32 %v684, 4294901760
        %686 = vmatpush2.msra.mxu0 %v685
        %687 = vmatprep.subr.mxu0 0.0
        %v688 = vand.u32 %v269, 4294901760
        %v689 = vsub.f32 %v269, %v688
        %v690 = vand.u32 %v689, 4294901760
        %v691 = vsub.f32 %v689, %v690
        %v692 = vand.u32 %v691, 4294901760
        %693 = vmatpush2.msra.mxu0 %v692
        %694 = vmatprep.subr.mxu0 0.0
        %v695 = vand.u32 %v268, 4294901760
        %v696 = vsub.f32 %v268, %v695
        %v697 = vand.u32 %v696, 4294901760
        %v698 = vsub.f32 %v696, %v697
        %v699 = vand.u32 %v698, 4294901760
        %700 = vmatpush2.msra.mxu0 %v699
        %701 = vmatprep.subr.mxu0 0.0
        %v702 = vand.u32 %v267, 4294901760
        %v703 = vsub.f32 %v267, %v702
        %v704 = vand.u32 %v703, 4294901760
        %v705 = vsub.f32 %v703, %v704
        %v706 = vand.u32 %v705, 4294901760
        %707 = vmatpush2.msra.mxu0 %v706
        %708 = vmatprep.subr.mxu0 0.0
        %v709 = vand.u32 %v266, 4294901760
        %v710 = vsub.f32 %v266, %v709
        %v711 = vand.u32 %v710, 4294901760
        %v712 = vsub.f32 %v710, %v711
        %v713 = vand.u32 %v712, 4294901760
        %714 = vmatpush2.msra.mxu0 %v713
        %715 = vmatprep.subr.mxu0 0.0
        %v716 = vand.u32 %v265, 4294901760
        %v717 = vsub.f32 %v265, %v716
        %v718 = vand.u32 %v717, 4294901760
        %v719 = vsub.f32 %v717, %v718
        %v720 = vand.u32 %v719, 4294901760
        %721 = vmatpush2.msra.mxu0 %v720
        %722 = vmatprep.subr.mxu0 0.0
        %v723 = vand.u32 %v264, 4294901760
        %v724 = vsub.f32 %v264, %v723
        %v725 = vand.u32 %v724, 4294901760
        %v726 = vsub.f32 %v724, %v725
        %v727 = vand.u32 %v726, 4294901760
        %728 = vmatpush2.msra.mxu0 %v727
        %729 = vmatprep.subr.mxu0 0.0
        %v730 = vand.u32 %v263, 4294901760
        %v731 = vsub.f32 %v263, %v730
        %v732 = vand.u32 %v731, 4294901760
        %v733 = vsub.f32 %v731, %v732
        %v734 = vand.u32 %v733, 4294901760
        %735 = vmatpush2.msra.mxu0 %v734
        %736 = vmatprep.subr.mxu0 0.0
        %v737 = vand.u32 %v262, 4294901760
        %v738 = vsub.f32 %v262, %v737
        %v739 = vand.u32 %v738, 4294901760
        %v740 = vsub.f32 %v738, %v739
        %v741 = vand.u32 %v740, 4294901760
        %742 = vmatpush2.msra.mxu0 %v741
        %743 = vmatprep.subr.mxu0 0.0
        %v744 = vand.u32 %v261, 4294901760
        %v745 = vsub.f32 %v261, %v744
        %v746 = vand.u32 %v745, 4294901760
        %v747 = vsub.f32 %v745, %v746
        %v748 = vand.u32 %v747, 4294901760
        %749 = vmatpush2.msra.mxu0 %v748
        %750 = vmatprep.subr.mxu0 0.0
        %v751 = vand.u32 %v260, 4294901760
        %v752 = vsub.f32 %v260, %v751
        %v753 = vand.u32 %v752, 4294901760
        %v754 = vsub.f32 %v752, %v753
        %v755 = vand.u32 %v754, 4294901760
        %756 = vmatpush2.msra.mxu0 %v755
        %v757 = vand.u32 %v225, 4294901760
        %758 = vmatprep.mubr.f32.mxu0 %v757
        %v759 = vand.u32 %v224, 4294901760
        %760 = vmatmul.mubr.f32.gmra.mxu0 %v759
        %v761 = vpop.f32.mrf.mxu0
        %v762 = vadd.f32 %v515, %v761
        %v763 = vpop.f32.mrf.mxu0
        %v764 = vand.u32 %v235, 4294901760
        %765 = vmatprep.mubr.f32.mxu0 %v764
        %v766 = vand.u32 %v234, 4294901760
        %767 = vmatmul.mubr.f32.gmra.mxu0 %v766
        %v768 = vpop.f32.mrf.mxu0
        %v769 = vadd.f32 %v530, %v768
        %v770 = vpop.f32.mrf.mxu0
        %771 = vdwg.mxu0
        %772 = vmatprep.subr.mxu0 0.0
        %v773 = vand.u32 %v259, 4294901760
        %v774 = vsub.f32 %v259, %v773
        %775 = vmatpush1.msra.mxu0 %v774
        %776 = vmatprep.subr.mxu0 0.0
        %v777 = vand.u32 %v258, 4294901760
        %v778 = vsub.f32 %v258, %v777
        %779 = vmatpush1.msra.mxu0 %v778
        %780 = vmatprep.subr.mxu0 0.0
        %v781 = vand.u32 %v257, 4294901760
        %v782 = vsub.f32 %v257, %v781
        %783 = vmatpush1.msra.mxu0 %v782
        %784 = vmatprep.subr.mxu0 0.0
        %v785 = vand.u32 %v256, 4294901760
        %v786 = vsub.f32 %v256, %v785
        %787 = vmatpush1.msra.mxu0 %v786
        %788 = vmatprep.subr.mxu0 0.0
        %v789 = vand.u32 %v255, 4294901760
        %v790 = vsub.f32 %v255, %v789
        %791 = vmatpush1.msra.mxu0 %v790
        %792 = vmatprep.subr.mxu0 0.0
        %v793 = vand.u32 %v254, 4294901760
        %v794 = vsub.f32 %v254, %v793
        %795 = vmatpush1.msra.mxu0 %v794
        %796 = vmatprep.subr.mxu0 0.0
        %v797 = vand.u32 %v253, 4294901760
        %v798 = vsub.f32 %v253, %v797
        %799 = vmatpush1.msra.mxu0 %v798
        %800 = vmatprep.subr.mxu0 0.0
        %v801 = vand.u32 %v252, 4294901760
        %v802 = vsub.f32 %v252, %v801
        %803 = vmatpush1.msra.mxu0 %v802
        %804 = vmatprep.subr.mxu0 0.0
        %v805 = vand.u32 %v251, 4294901760
        %v806 = vsub.f32 %v251, %v805
        %807 = vmatpush1.msra.mxu0 %v806
        %808 = vmatprep.subr.mxu0 0.0
        %v809 = vand.u32 %v250, 4294901760
        %v810 = vsub.f32 %v250, %v809
        %811 = vmatpush1.msra.mxu0 %v810
        %812 = vmatprep.subr.mxu0 0.0
        %v813 = vand.u32 %v249, 4294901760
        %v814 = vsub.f32 %v249, %v813
        %815 = vmatpush1.msra.mxu0 %v814
        %816 = vmatprep.subr.mxu0 0.0
        %v817 = vand.u32 %v248, 4294901760
        %v818 = vsub.f32 %v248, %v817
        %819 = vmatpush1.msra.mxu0 %v818
        %820 = vmatprep.subr.mxu0 0.0
        %v821 = vand.u32 %v247, 4294901760
        %v822 = vsub.f32 %v247, %v821
        %823 = vmatpush1.msra.mxu0 %v822
        %824 = vmatprep.subr.mxu0 0.0
        %v825 = vand.u32 %v246, 4294901760
        %v826 = vsub.f32 %v246, %v825
        %827 = vmatpush1.msra.mxu0 %v826
        %828 = vmatprep.subr.mxu0 0.0
        %v829 = vand.u32 %v245, 4294901760
        %v830 = vsub.f32 %v245, %v829
        %831 = vmatpush1.msra.mxu0 %v830
        %832 = vmatprep.subr.mxu0 0.0
        %v833 = vand.u32 %v244, 4294901760
        %v834 = vsub.f32 %v244, %v833
        %835 = vmatpush1.msra.mxu0 %v834
        %836 = vmatprep.subr.mxu0 0.0
        %v837 = vand.u32 %v275, 4294901760
        %v838 = vsub.f32 %v275, %v837
        %839 = vmatpush2.msra.mxu0 %v838
        %840 = vmatprep.subr.mxu0 0.0
        %v841 = vand.u32 %v274, 4294901760
        %v842 = vsub.f32 %v274, %v841
        %843 = vmatpush2.msra.mxu0 %v842
        %844 = vmatprep.subr.mxu0 0.0
        %v845 = vand.u32 %v273, 4294901760
        %v846 = vsub.f32 %v273, %v845
        %847 = vmatpush2.msra.mxu0 %v846
        %848 = vmatprep.subr.mxu0 0.0
        %v849 = vand.u32 %v272, 4294901760
        %v850 = vsub.f32 %v272, %v849
        %851 = vmatpush2.msra.mxu0 %v850
        %852 = vmatprep.subr.mxu0 0.0
        %v853 = vand.u32 %v271, 4294901760
        %v854 = vsub.f32 %v271, %v853
        %855 = vmatpush2.msra.mxu0 %v854
        %856 = vmatprep.subr.mxu0 0.0
        %v857 = vand.u32 %v270, 4294901760
        %v858 = vsub.f32 %v270, %v857
        %859 = vmatpush2.msra.mxu0 %v858
        %860 = vmatprep.subr.mxu0 0.0
        %v861 = vand.u32 %v269, 4294901760
        %v862 = vsub.f32 %v269, %v861
        %863 = vmatpush2.msra.mxu0 %v862
        %864 = vmatprep.subr.mxu0 0.0
        %v865 = vand.u32 %v268, 4294901760
        %v866 = vsub.f32 %v268, %v865
        %867 = vmatpush2.msra.mxu0 %v866
        %868 = vmatprep.subr.mxu0 0.0
        %v869 = vand.u32 %v267, 4294901760
        %v870 = vsub.f32 %v267, %v869
        %871 = vmatpush2.msra.mxu0 %v870
        %872 = vmatprep.subr.mxu0 0.0
        %v873 = vand.u32 %v266, 4294901760
        %v874 = vsub.f32 %v266, %v873
        %875 = vmatpush2.msra.mxu0 %v874
        %876 = vmatprep.subr.mxu0 0.0
        %v877 = vand.u32 %v265, 4294901760
        %v878 = vsub.f32 %v265, %v877
        %879 = vmatpush2.msra.mxu0 %v878
        %880 = vmatprep.subr.mxu0 0.0
        %v881 = vand.u32 %v264, 4294901760
        %v882 = vsub.f32 %v264, %v881
        %883 = vmatpush2.msra.mxu0 %v882
        %884 = vmatprep.subr.mxu0 0.0
        %v885 = vand.u32 %v263, 4294901760
        %v886 = vsub.f32 %v263, %v885
        %887 = vmatpush2.msra.mxu0 %v886
        %888 = vmatprep.subr.mxu0 0.0
        %v889 = vand.u32 %v262, 4294901760
        %v890 = vsub.f32 %v262, %v889
        %891 = vmatpush2.msra.mxu0 %v890
        %892 = vmatprep.subr.mxu0 0.0
        %v893 = vand.u32 %v261, 4294901760
        %v894 = vsub.f32 %v261, %v893
        %895 = vmatpush2.msra.mxu0 %v894
        %896 = vmatprep.subr.mxu0 0.0
        %v897 = vand.u32 %v260, 4294901760
        %v898 = vsub.f32 %v260, %v897
        %899 = vmatpush2.msra.mxu0 %v898
        %v900 = vand.u32 %v225, 4294901760
        %v901 = vsub.f32 %v225, %v900
        %902 = vmatprep.mubr.f32.mxu0 %v901
        %v903 = vand.u32 %v224, 4294901760
        %v904 = vsub.f32 %v224, %v903
        %905 = vmatmul.mubr.f32.gmra.mxu0 %v904
        %v906 = vpop.f32.mrf.mxu0
        %v907 = vadd.f32 %v762, %v906
        %v908 = vpop.f32.mrf.mxu0
        %v909 = vand.u32 %v235, 4294901760
        %v910 = vsub.f32 %v235, %v909
        %911 = vmatprep.mubr.f32.mxu0 %v910
        %v912 = vand.u32 %v234, 4294901760
        %v913 = vsub.f32 %v234, %v912
        %914 = vmatmul.mubr.f32.gmra.mxu0 %v913
        %v915 = vpop.f32.mrf.mxu0
        %v916 = vadd.f32 %v769, %v915
        %v917 = vpop.f32.mrf.mxu0
        %918 = vdwg.mxu0
        %919 = vmatprep.subr.mxu0 0.0
        %v920 = vand.u32 %v259, 4294901760
        %921 = vmatpush1.msra.mxu0 %v920
        %922 = vmatprep.subr.mxu0 0.0
        %v923 = vand.u32 %v258, 4294901760
        %924 = vmatpush1.msra.mxu0 %v923
        %925 = vmatprep.subr.mxu0 0.0
        %v926 = vand.u32 %v257, 4294901760
        %927 = vmatpush1.msra.mxu0 %v926
        %928 = vmatprep.subr.mxu0 0.0
        %v929 = vand.u32 %v256, 4294901760
        %930 = vmatpush1.msra.mxu0 %v929
        %931 = vmatprep.subr.mxu0 0.0
        %v932 = vand.u32 %v255, 4294901760
        %933 = vmatpush1.msra.mxu0 %v932
        %934 = vmatprep.subr.mxu0 0.0
        %v935 = vand.u32 %v254, 4294901760
        %936 = vmatpush1.msra.mxu0 %v935
        %937 = vmatprep.subr.mxu0 0.0
        %v938 = vand.u32 %v253, 4294901760
        %939 = vmatpush1.msra.mxu0 %v938
        %940 = vmatprep.subr.mxu0 0.0
        %v941 = vand.u32 %v252, 4294901760
        %942 = vmatpush1.msra.mxu0 %v941
        %943 = vmatprep.subr.mxu0 0.0
        %v944 = vand.u32 %v251, 4294901760
        %945 = vmatpush1.msra.mxu0 %v944
        %946 = vmatprep.subr.mxu0 0.0
        %v947 = vand.u32 %v250, 4294901760
        %948 = vmatpush1.msra.mxu0 %v947
        %949 = vmatprep.subr.mxu0 0.0
        %v950 = vand.u32 %v249, 4294901760
        %951 = vmatpush1.msra.mxu0 %v950
        %952 = vmatprep.subr.mxu0 0.0
        %v953 = vand.u32 %v248, 4294901760
        %954 = vmatpush1.msra.mxu0 %v953
        %955 = vmatprep.subr.mxu0 0.0
        %v956 = vand.u32 %v247, 4294901760
        %957 = vmatpush1.msra.mxu0 %v956
        %958 = vmatprep.subr.mxu0 0.0
        %v959 = vand.u32 %v246, 4294901760
        %960 = vmatpush1.msra.mxu0 %v959
        %961 = vmatprep.subr.mxu0 0.0
        %v962 = vand.u32 %v245, 4294901760
        %963 = vmatpush1.msra.mxu0 %v962
        %964 = vmatprep.subr.mxu0 0.0
        %v965 = vand.u32 %v244, 4294901760
        %966 = vmatpush1.msra.mxu0 %v965
        %967 = vmatprep.subr.mxu0 0.0
        %v968 = vand.u32 %v275, 4294901760
        %969 = vmatpush2.msra.mxu0 %v968
        %970 = vmatprep.subr.mxu0 0.0
        %v971 = vand.u32 %v274, 4294901760
        %972 = vmatpush2.msra.mxu0 %v971
        %973 = vmatprep.subr.mxu0 0.0
        %v974 = vand.u32 %v273, 4294901760
        %975 = vmatpush2.msra.mxu0 %v974
        %976 = vmatprep.subr.mxu0 0.0
        %v977 = vand.u32 %v272, 4294901760
        %978 = vmatpush2.msra.mxu0 %v977
        %979 = vmatprep.subr.mxu0 0.0
        %v980 = vand.u32 %v271, 4294901760
        %981 = vmatpush2.msra.mxu0 %v980
        %982 = vmatprep.subr.mxu0 0.0
        %v983 = vand.u32 %v270, 4294901760
        %984 = vmatpush2.msra.mxu0 %v983
        %985 = vmatprep.subr.mxu0 0.0
        %v986 = vand.u32 %v269, 4294901760
        %987 = vmatpush2.msra.mxu0 %v986
        %988 = vmatprep.subr.mxu0 0.0
        %v989 = vand.u32 %v268, 4294901760
        %990 = vmatpush2.msra.mxu0 %v989
        %991 = vmatprep.subr.mxu0 0.0
        %v992 = vand.u32 %v267, 4294901760
        %993 = vmatpush2.msra.mxu0 %v992
        %994 = vmatprep.subr.mxu0 0.0
        %v995 = vand.u32 %v266, 4294901760
        %996 = vmatpush2.msra.mxu0 %v995
        %997 = vmatprep.subr.mxu0 0.0
        %v998 = vand.u32 %v265, 4294901760
        %999 = vmatpush2.msra.mxu0 %v998
        %1000 = vmatprep.subr.mxu0 0.0
        %v1001 = vand.u32 %v264, 4294901760
        %1002 = vmatpush2.msra.mxu0 %v1001
        %1003 = vmatprep.subr.mxu0 0.0
        %v1004 = vand.u32 %v263, 4294901760
        %1005 = vmatpush2.msra.mxu0 %v1004
        %1006 = vmatprep.subr.mxu0 0.0
        %v1007 = vand.u32 %v262, 4294901760
        %1008 = vmatpush2.msra.mxu0 %v1007
        %1009 = vmatprep.subr.mxu0 0.0
        %v1010 = vand.u32 %v261, 4294901760
        %1011 = vmatpush2.msra.mxu0 %v1010
        %1012 = vmatprep.subr.mxu0 0.0
        %v1013 = vand.u32 %v260, 4294901760
        %1014 = vmatpush2.msra.mxu0 %v1013
        %v1015 = vand.u32 %v225, 4294901760
        %v1016 = vsub.f32 %v225, %v1015
        %v1017 = vand.u32 %v1016, 4294901760
        %1018 = vmatprep.mubr.f32.mxu0 %v1017
        %v1019 = vand.u32 %v224, 4294901760
        %v1020 = vsub.f32 %v224, %v1019
        %v1021 = vand.u32 %v1020, 4294901760
        %1022 = vmatmul.mubr.f32.gmra.mxu0 %v1021
        %v1023 = vpop.f32.mrf.mxu0
        %v1024 = vadd.f32 %v907, %v1023
        %v1025 = vpop.f32.mrf.mxu0
        %v1026 = vand.u32 %v235, 4294901760
        %v1027 = vsub.f32 %v235, %v1026
        %v1028 = vand.u32 %v1027, 4294901760
        %1029 = vmatprep.mubr.f32.mxu0 %v1028
        %v1030 = vand.u32 %v234, 4294901760
        %v1031 = vsub.f32 %v234, %v1030
        %v1032 = vand.u32 %v1031, 4294901760
        %1033 = vmatmul.mubr.f32.gmra.mxu0 %v1032
        %v1034 = vpop.f32.mrf.mxu0
        %v1035 = vadd.f32 %v916, %v1034
        %v1036 = vpop.f32.mrf.mxu0
        %1037 = vdwg.mxu0
        %1038 = vmatprep.subr.mxu0 0.0
        %v1039 = vand.u32 %v259, 4294901760
        %v1040 = vsub.f32 %v259, %v1039
        %v1041 = vand.u32 %v1040, 4294901760
        %1042 = vmatpush1.msra.mxu0 %v1041
        %1043 = vmatprep.subr.mxu0 0.0
        %v1044 = vand.u32 %v258, 4294901760
        %v1045 = vsub.f32 %v258, %v1044
        %v1046 = vand.u32 %v1045, 4294901760
        %1047 = vmatpush1.msra.mxu0 %v1046
        %1048 = vmatprep.subr.mxu0 0.0
        %v1049 = vand.u32 %v257, 4294901760
        %v1050 = vsub.f32 %v257, %v1049
        %v1051 = vand.u32 %v1050, 4294901760
        %1052 = vmatpush1.msra.mxu0 %v1051
        %1053 = vmatprep.subr.mxu0 0.0
        %v1054 = vand.u32 %v256, 4294901760
        %v1055 = vsub.f32 %v256, %v1054
        %v1056 = vand.u32 %v1055, 4294901760
        %1057 = vmatpush1.msra.mxu0 %v1056
        %1058 = vmatprep.subr.mxu0 0.0
        %v1059 = vand.u32 %v255, 4294901760
        %v1060 = vsub.f32 %v255, %v1059
        %v1061 = vand.u32 %v1060, 4294901760
        %1062 = vmatpush1.msra.mxu0 %v1061
        %1063 = vmatprep.subr.mxu0 0.0
        %v1064 = vand.u32 %v254, 4294901760
        %v1065 = vsub.f32 %v254, %v1064
        %v1066 = vand.u32 %v1065, 4294901760
        %1067 = vmatpush1.msra.mxu0 %v1066
        %1068 = vmatprep.subr.mxu0 0.0
        %v1069 = vand.u32 %v253, 4294901760
        %v1070 = vsub.f32 %v253, %v1069
        %v1071 = vand.u32 %v1070, 4294901760
        %1072 = vmatpush1.msra.mxu0 %v1071
        %1073 = vmatprep.subr.mxu0 0.0
        %v1074 = vand.u32 %v252, 4294901760
        %v1075 = vsub.f32 %v252, %v1074
        %v1076 = vand.u32 %v1075, 4294901760
        %1077 = vmatpush1.msra.mxu0 %v1076
        %1078 = vmatprep.subr.mxu0 0.0
        %v1079 = vand.u32 %v251, 4294901760
        %v1080 = vsub.f32 %v251, %v1079
        %v1081 = vand.u32 %v1080, 4294901760
        %1082 = vmatpush1.msra.mxu0 %v1081
        %1083 = vmatprep.subr.mxu0 0.0
        %v1084 = vand.u32 %v250, 4294901760
        %v1085 = vsub.f32 %v250, %v1084
        %v1086 = vand.u32 %v1085, 4294901760
        %1087 = vmatpush1.msra.mxu0 %v1086
        %1088 = vmatprep.subr.mxu0 0.0
        %v1089 = vand.u32 %v249, 4294901760
        %v1090 = vsub.f32 %v249, %v1089
        %v1091 = vand.u32 %v1090, 4294901760
        %1092 = vmatpush1.msra.mxu0 %v1091
        %1093 = vmatprep.subr.mxu0 0.0
        %v1094 = vand.u32 %v248, 4294901760
        %v1095 = vsub.f32 %v248, %v1094
        %v1096 = vand.u32 %v1095, 4294901760
        %1097 = vmatpush1.msra.mxu0 %v1096
        %1098 = vmatprep.subr.mxu0 0.0
        %v1099 = vand.u32 %v247, 4294901760
        %v1100 = vsub.f32 %v247, %v1099
        %v1101 = vand.u32 %v1100, 4294901760
        %1102 = vmatpush1.msra.mxu0 %v1101
        %1103 = vmatprep.subr.mxu0 0.0
        %v1104 = vand.u32 %v246, 4294901760
        %v1105 = vsub.f32 %v246, %v1104
        %v1106 = vand.u32 %v1105, 4294901760
        %1107 = vmatpush1.msra.mxu0 %v1106
        %1108 = vmatprep.subr.mxu0 0.0
        %v1109 = vand.u32 %v245, 4294901760
        %v1110 = vsub.f32 %v245, %v1109
        %v1111 = vand.u32 %v1110, 4294901760
        %1112 = vmatpush1.msra.mxu0 %v1111
        %1113 = vmatprep.subr.mxu0 0.0
        %v1114 = vand.u32 %v244, 4294901760
        %v1115 = vsub.f32 %v244, %v1114
        %v1116 = vand.u32 %v1115, 4294901760
        %1117 = vmatpush1.msra.mxu0 %v1116
        %1118 = vmatprep.subr.mxu0 0.0
        %v1119 = vand.u32 %v275, 4294901760
        %v1120 = vsub.f32 %v275, %v1119
        %v1121 = vand.u32 %v1120, 4294901760
        %1122 = vmatpush2.msra.mxu0 %v1121
        %1123 = vmatprep.subr.mxu0 0.0
        %v1124 = vand.u32 %v274, 4294901760
        %v1125 = vsub.f32 %v274, %v1124
        %v1126 = vand.u32 %v1125, 4294901760
        %1127 = vmatpush2.msra.mxu0 %v1126
        %1128 = vmatprep.subr.mxu0 0.0
        %v1129 = vand.u32 %v273, 4294901760
        %v1130 = vsub.f32 %v273, %v1129
        %v1131 = vand.u32 %v1130, 4294901760
        %1132 = vmatpush2.msra.mxu0 %v1131
        %1133 = vmatprep.subr.mxu0 0.0
        %v1134 = vand.u32 %v272, 4294901760
        %v1135 = vsub.f32 %v272, %v1134
        %v1136 = vand.u32 %v1135, 4294901760
        %1137 = vmatpush2.msra.mxu0 %v1136
        %1138 = vmatprep.subr.mxu0 0.0
        %v1139 = vand.u32 %v271, 4294901760
        %v1140 = vsub.f32 %v271, %v1139
        %v1141 = vand.u32 %v1140, 4294901760
        %1142 = vmatpush2.msra.mxu0 %v1141
        %1143 = vmatprep.subr.mxu0 0.0
        %v1144 = vand.u32 %v270, 4294901760
        %v1145 = vsub.f32 %v270, %v1144
        %v1146 = vand.u32 %v1145, 4294901760
        %1147 = vmatpush2.msra.mxu0 %v1146
        %1148 = vmatprep.subr.mxu0 0.0
        %v1149 = vand.u32 %v269, 4294901760
        %v1150 = vsub.f32 %v269, %v1149
        %v1151 = vand.u32 %v1150, 4294901760
        %1152 = vmatpush2.msra.mxu0 %v1151
        %1153 = vmatprep.subr.mxu0 0.0
        %v1154 = vand.u32 %v268, 4294901760
        %v1155 = vsub.f32 %v268, %v1154
        %v1156 = vand.u32 %v1155, 4294901760
        %1157 = vmatpush2.msra.mxu0 %v1156
        %1158 = vmatprep.subr.mxu0 0.0
        %v1159 = vand.u32 %v267, 4294901760
        %v1160 = vsub.f32 %v267, %v1159
        %v1161 = vand.u32 %v1160, 4294901760
        %1162 = vmatpush2.msra.mxu0 %v1161
        %1163 = vmatprep.subr.mxu0 0.0
        %v1164 = vand.u32 %v266, 4294901760
        %v1165 = vsub.f32 %v266, %v1164
        %v1166 = vand.u32 %v1165, 4294901760
        %1167 = vmatpush2.msra.mxu0 %v1166
        %1168 = vmatprep.subr.mxu0 0.0
        %v1169 = vand.u32 %v265, 4294901760
        %v1170 = vsub.f32 %v265, %v1169
        %v1171 = vand.u32 %v1170, 4294901760
        %1172 = vmatpush2.msra.mxu0 %v1171
        %1173 = vmatprep.subr.mxu0 0.0
        %v1174 = vand.u32 %v264, 4294901760
        %v1175 = vsub.f32 %v264, %v1174
        %v1176 = vand.u32 %v1175, 4294901760
        %1177 = vmatpush2.msra.mxu0 %v1176
        %1178 = vmatprep.subr.mxu0 0.0
        %v1179 = vand.u32 %v263, 4294901760
        %v1180 = vsub.f32 %v263, %v1179
        %v1181 = vand.u32 %v1180, 4294901760
        %1182 = vmatpush2.msra.mxu0 %v1181
        %1183 = vmatprep.subr.mxu0 0.0
        %v1184 = vand.u32 %v262, 4294901760
        %v1185 = vsub.f32 %v262, %v1184
        %v1186 = vand.u32 %v1185, 4294901760
        %1187 = vmatpush2.msra.mxu0 %v1186
        %1188 = vmatprep.subr.mxu0 0.0
        %v1189 = vand.u32 %v261, 4294901760
        %v1190 = vsub.f32 %v261, %v1189
        %v1191 = vand.u32 %v1190, 4294901760
        %1192 = vmatpush2.msra.mxu0 %v1191
        %1193 = vmatprep.subr.mxu0 0.0
        %v1194 = vand.u32 %v260, 4294901760
        %v1195 = vsub.f32 %v260, %v1194
        %v1196 = vand.u32 %v1195, 4294901760
        %1197 = vmatpush2.msra.mxu0 %v1196
        %v1198 = vand.u32 %v225, 4294901760
        %1199 = vmatprep.mubr.f32.mxu0 %v1198
        %v1200 = vand.u32 %v224, 4294901760
        %1201 = vmatmul.mubr.f32.gmra.mxu0 %v1200
        %v1202 = vpop.f32.mrf.mxu0
        %v1203 = vadd.f32 %v1024, %v1202
        %v1204 = vpop.f32.mrf.mxu0
        %v1205 = vand.u32 %v235, 4294901760
        %1206 = vmatprep.mubr.f32.mxu0 %v1205
        %v1207 = vand.u32 %v234, 4294901760
        %1208 = vmatmul.mubr.f32.gmra.mxu0 %v1207
        %v1209 = vpop.f32.mrf.mxu0
        %v1210 = vadd.f32 %v1035, %v1209
        %v1211 = vpop.f32.mrf.mxu0
        %1212 = vdwg.mxu0
        %1213 = vmatprep.subr.mxu0 0.0
        %v1214 = vand.u32 %v259, 4294901760
        %1215 = vmatpush1.msra.mxu0 %v1214
        %1216 = vmatprep.subr.mxu0 0.0
        %v1217 = vand.u32 %v258, 4294901760
        %1218 = vmatpush1.msra.mxu0 %v1217
        %1219 = vmatprep.subr.mxu0 0.0
        %v1220 = vand.u32 %v257, 4294901760
        %1221 = vmatpush1.msra.mxu0 %v1220
        %1222 = vmatprep.subr.mxu0 0.0
        %v1223 = vand.u32 %v256, 4294901760
        %1224 = vmatpush1.msra.mxu0 %v1223
        %1225 = vmatprep.subr.mxu0 0.0
        %v1226 = vand.u32 %v255, 4294901760
        %1227 = vmatpush1.msra.mxu0 %v1226
        %1228 = vmatprep.subr.mxu0 0.0
        %v1229 = vand.u32 %v254, 4294901760
        %1230 = vmatpush1.msra.mxu0 %v1229
        %1231 = vmatprep.subr.mxu0 0.0
        %v1232 = vand.u32 %v253, 4294901760
        %1233 = vmatpush1.msra.mxu0 %v1232
        %1234 = vmatprep.subr.mxu0 0.0
        %v1235 = vand.u32 %v252, 4294901760
        %1236 = vmatpush1.msra.mxu0 %v1235
        %1237 = vmatprep.subr.mxu0 0.0
        %v1238 = vand.u32 %v251, 4294901760
        %1239 = vmatpush1.msra.mxu0 %v1238
        %1240 = vmatprep.subr.mxu0 0.0
        %v1241 = vand.u32 %v250, 4294901760
        %1242 = vmatpush1.msra.mxu0 %v1241
        %1243 = vmatprep.subr.mxu0 0.0
        %v1244 = vand.u32 %v249, 4294901760
        %1245 = vmatpush1.msra.mxu0 %v1244
        %1246 = vmatprep.subr.mxu0 0.0
        %v1247 = vand.u32 %v248, 4294901760
        %1248 = vmatpush1.msra.mxu0 %v1247
        %1249 = vmatprep.subr.mxu0 0.0
        %v1250 = vand.u32 %v247, 4294901760
        %1251 = vmatpush1.msra.mxu0 %v1250
        %1252 = vmatprep.subr.mxu0 0.0
        %v1253 = vand.u32 %v246, 4294901760
        %1254 = vmatpush1.msra.mxu0 %v1253
        %1255 = vmatprep.subr.mxu0 0.0
        %v1256 = vand.u32 %v245, 4294901760
        %1257 = vmatpush1.msra.mxu0 %v1256
        %1258 = vmatprep.subr.mxu0 0.0
        %v1259 = vand.u32 %v244, 4294901760
        %1260 = vmatpush1.msra.mxu0 %v1259
        %1261 = vmatprep.subr.mxu0 0.0
        %v1262 = vand.u32 %v275, 4294901760
        %1263 = vmatpush2.msra.mxu0 %v1262
        %1264 = vmatprep.subr.mxu0 0.0
        %v1265 = vand.u32 %v274, 4294901760
        %1266 = vmatpush2.msra.mxu0 %v1265
        %1267 = vmatprep.subr.mxu0 0.0
        %v1268 = vand.u32 %v273, 4294901760
        %1269 = vmatpush2.msra.mxu0 %v1268
        %1270 = vmatprep.subr.mxu0 0.0
        %v1271 = vand.u32 %v272, 4294901760
        %1272 = vmatpush2.msra.mxu0 %v1271
        %1273 = vmatprep.subr.mxu0 0.0
        %v1274 = vand.u32 %v271, 4294901760
        %1275 = vmatpush2.msra.mxu0 %v1274
        %1276 = vmatprep.subr.mxu0 0.0
        %v1277 = vand.u32 %v270, 4294901760
        %1278 = vmatpush2.msra.mxu0 %v1277
        %1279 = vmatprep.subr.mxu0 0.0
        %v1280 = vand.u32 %v269, 4294901760
        %1281 = vmatpush2.msra.mxu0 %v1280
        %1282 = vmatprep.subr.mxu0 0.0
        %v1283 = vand.u32 %v268, 4294901760
        %1284 = vmatpush2.msra.mxu0 %v1283
        %1285 = vmatprep.subr.mxu0 0.0
        %v1286 = vand.u32 %v267, 4294901760
        %1287 = vmatpush2.msra.mxu0 %v1286
        %1288 = vmatprep.subr.mxu0 0.0
        %v1289 = vand.u32 %v266, 4294901760
        %1290 = vmatpush2.msra.mxu0 %v1289
        %1291 = vmatprep.subr.mxu0 0.0
        %v1292 = vand.u32 %v265, 4294901760
        %1293 = vmatpush2.msra.mxu0 %v1292
        %1294 = vmatprep.subr.mxu0 0.0
        %v1295 = vand.u32 %v264, 4294901760
        %1296 = vmatpush2.msra.mxu0 %v1295
        %1297 = vmatprep.subr.mxu0 0.0
        %v1298 = vand.u32 %v263, 4294901760
        %1299 = vmatpush2.msra.mxu0 %v1298
        %1300 = vmatprep.subr.mxu0 0.0
        %v1301 = vand.u32 %v262, 4294901760
        %1302 = vmatpush2.msra.mxu0 %v1301
        %1303 = vmatprep.subr.mxu0 0.0
        %v1304 = vand.u32 %v261, 4294901760
        %1305 = vmatpush2.msra.mxu0 %v1304
        %1306 = vmatprep.subr.mxu0 0.0
        %v1307 = vand.u32 %v260, 4294901760
        %1308 = vmatpush2.msra.mxu0 %v1307
        %v1309 = vand.u32 %v225, 4294901760
        %1310 = vmatprep.mubr.f32.mxu0 %v1309
        %v1311 = vand.u32 %v224, 4294901760
        %1312 = vmatmul.mubr.f32.gmra.mxu0 %v1311
        %v1313 = vpop.f32.mrf.mxu0
        %v1314 = vadd.f32 %v1203, %v1313
        %v1315 = vpop.f32.mrf.mxu0
        %v1316 = vand.u32 %v235, 4294901760
        %1317 = vmatprep.mubr.f32.mxu0 %v1316
        %v1318 = vand.u32 %v234, 4294901760
        %1319 = vmatmul.mubr.f32.gmra.mxu0 %v1318
        %v1320 = vpop.f32.mrf.mxu0
        %v1321 = vadd.f32 %v1210, %v1320
        %v1322 = vpop.f32.mrf.mxu0
        %1323 = vdwg.mxu0
        %1324 = vmatprep.subr.mxu0 0.0
        %v1325 = vand.u32 %v291, 4294901760
        %1326 = vmatpush1.msra.mxu0 %v1325
        %1327 = vmatprep.subr.mxu0 0.0
        %v1328 = vand.u32 %v290, 4294901760
        %1329 = vmatpush1.msra.mxu0 %v1328
        %1330 = vmatprep.subr.mxu0 0.0
        %v1331 = vand.u32 %v289, 4294901760
        %1332 = vmatpush1.msra.mxu0 %v1331
        %1333 = vmatprep.subr.mxu0 0.0
        %v1334 = vand.u32 %v288, 4294901760
        %1335 = vmatpush1.msra.mxu0 %v1334
        %1336 = vmatprep.subr.mxu0 0.0
        %v1337 = vand.u32 %v287, 4294901760
        %1338 = vmatpush1.msra.mxu0 %v1337
        %1339 = vmatprep.subr.mxu0 0.0
        %v1340 = vand.u32 %v286, 4294901760
        %1341 = vmatpush1.msra.mxu0 %v1340
        %1342 = vmatprep.subr.mxu0 0.0
        %v1343 = vand.u32 %v285, 4294901760
        %1344 = vmatpush1.msra.mxu0 %v1343
        %1345 = vmatprep.subr.mxu0 0.0
        %v1346 = vand.u32 %v284, 4294901760
        %1347 = vmatpush1.msra.mxu0 %v1346
        %1348 = vmatprep.subr.mxu0 0.0
        %v1349 = vand.u32 %v283, 4294901760
        %1350 = vmatpush1.msra.mxu0 %v1349
        %1351 = vmatprep.subr.mxu0 0.0
        %v1352 = vand.u32 %v282, 4294901760
        %1353 = vmatpush1.msra.mxu0 %v1352
        %1354 = vmatprep.subr.mxu0 0.0
        %v1355 = vand.u32 %v281, 4294901760
        %1356 = vmatpush1.msra.mxu0 %v1355
        %1357 = vmatprep.subr.mxu0 0.0
        %v1358 = vand.u32 %v280, 4294901760
        %1359 = vmatpush1.msra.mxu0 %v1358
        %1360 = vmatprep.subr.mxu0 0.0
        %v1361 = vand.u32 %v279, 4294901760
        %1362 = vmatpush1.msra.mxu0 %v1361
        %1363 = vmatprep.subr.mxu0 0.0
        %v1364 = vand.u32 %v278, 4294901760
        %1365 = vmatpush1.msra.mxu0 %v1364
        %1366 = vmatprep.subr.mxu0 0.0
        %v1367 = vand.u32 %v277, 4294901760
        %1368 = vmatpush1.msra.mxu0 %v1367
        %1369 = vmatprep.subr.mxu0 0.0
        %v1370 = vand.u32 %v276, 4294901760
        %1371 = vmatpush1.msra.mxu0 %v1370
        %1372 = vmatprep.subr.mxu0 0.0
        %v1373 = vand.u32 %v307, 4294901760
        %1374 = vmatpush2.msra.mxu0 %v1373
        %1375 = vmatprep.subr.mxu0 0.0
        %v1376 = vand.u32 %v306, 4294901760
        %1377 = vmatpush2.msra.mxu0 %v1376
        %1378 = vmatprep.subr.mxu0 0.0
        %v1379 = vand.u32 %v305, 4294901760
        %1380 = vmatpush2.msra.mxu0 %v1379
        %1381 = vmatprep.subr.mxu0 0.0
        %v1382 = vand.u32 %v304, 4294901760
        %1383 = vmatpush2.msra.mxu0 %v1382
        %1384 = vmatprep.subr.mxu0 0.0
        %v1385 = vand.u32 %v303, 4294901760
        %1386 = vmatpush2.msra.mxu0 %v1385
        %1387 = vmatprep.subr.mxu0 0.0
        %v1388 = vand.u32 %v302, 4294901760
        %1389 = vmatpush2.msra.mxu0 %v1388
        %1390 = vmatprep.subr.mxu0 0.0
        %v1391 = vand.u32 %v301, 4294901760
        %1392 = vmatpush2.msra.mxu0 %v1391
        %1393 = vmatprep.subr.mxu0 0.0
        %v1394 = vand.u32 %v300, 4294901760
        %1395 = vmatpush2.msra.mxu0 %v1394
        %1396 = vmatprep.subr.mxu0 0.0
        %v1397 = vand.u32 %v299, 4294901760
        %1398 = vmatpush2.msra.mxu0 %v1397
        %1399 = vmatprep.subr.mxu0 0.0
        %v1400 = vand.u32 %v298, 4294901760
        %1401 = vmatpush2.msra.mxu0 %v1400
        %1402 = vmatprep.subr.mxu0 0.0
        %v1403 = vand.u32 %v297, 4294901760
        %1404 = vmatpush2.msra.mxu0 %v1403
        %1405 = vmatprep.subr.mxu0 0.0
        %v1406 = vand.u32 %v296, 4294901760
        %1407 = vmatpush2.msra.mxu0 %v1406
        %1408 = vmatprep.subr.mxu0 0.0
        %v1409 = vand.u32 %v295, 4294901760
        %1410 = vmatpush2.msra.mxu0 %v1409
        %1411 = vmatprep.subr.mxu0 0.0
        %v1412 = vand.u32 %v294, 4294901760
        %1413 = vmatpush2.msra.mxu0 %v1412
        %1414 = vmatprep.subr.mxu0 0.0
        %v1415 = vand.u32 %v293, 4294901760
        %1416 = vmatpush2.msra.mxu0 %v1415
        %1417 = vmatprep.subr.mxu0 0.0
        %v1418 = vand.u32 %v292, 4294901760
        %1419 = vmatpush2.msra.mxu0 %v1418
        %v1420 = vand.u32 %v227, 4294901760
        %v1421 = vsub.f32 %v227, %v1420
        %v1422 = vand.u32 %v1421, 4294901760
        %v1423 = vsub.f32 %v1421, %v1422
        %v1424 = vand.u32 %v1423, 4294901760
        %1425 = vmatprep.mubr.f32.mxu0 %v1424
        %v1426 = vand.u32 %v226, 4294901760
        %v1427 = vsub.f32 %v226, %v1426
        %v1428 = vand.u32 %v1427, 4294901760
        %v1429 = vsub.f32 %v1427, %v1428
        %v1430 = vand.u32 %v1429, 4294901760
        %1431 = vmatmul.mubr.f32.gmra.mxu0 %v1430
        %v1432 = vpop.f32.mrf.mxu0
        %v1433 = vadd.f32 %v1314, %v1432
        %v1434 = vpop.f32.mrf.mxu0
        %v1435 = vand.u32 %v237, 4294901760
        %v1436 = vsub.f32 %v237, %v1435
        %v1437 = vand.u32 %v1436, 4294901760
        %v1438 = vsub.f32 %v1436, %v1437
        %v1439 = vand.u32 %v1438, 4294901760
        %1440 = vmatprep.mubr.f32.mxu0 %v1439
        %v1441 = vand.u32 %v236, 4294901760
        %v1442 = vsub.f32 %v236, %v1441
        %v1443 = vand.u32 %v1442, 4294901760
        %v1444 = vsub.f32 %v1442, %v1443
        %v1445 = vand.u32 %v1444, 4294901760
        %1446 = vmatmul.mubr.f32.gmra.mxu0 %v1445
        %v1447 = vpop.f32.mrf.mxu0
        %v1448 = vadd.f32 %v1321, %v1447
        %v1449 = vpop.f32.mrf.mxu0
        %1450 = vdwg.mxu0
        %1451 = vmatprep.subr.mxu0 0.0
        %v1452 = vand.u32 %v291, 4294901760
        %v1453 = vsub.f32 %v291, %v1452
        %v1454 = vand.u32 %v1453, 4294901760
        %v1455 = vsub.f32 %v1453, %v1454
        %v1456 = vand.u32 %v1455, 4294901760
        %1457 = vmatpush1.msra.mxu0 %v1456
        %1458 = vmatprep.subr.mxu0 0.0
        %v1459 = vand.u32 %v290, 4294901760
        %v1460 = vsub.f32 %v290, %v1459
        %v1461 = vand.u32 %v1460, 4294901760
        %v1462 = vsub.f32 %v1460, %v1461
        %v1463 = vand.u32 %v1462, 4294901760
        %1464 = vmatpush1.msra.mxu0 %v1463
        %1465 = vmatprep.subr.mxu0 0.0
        %v1466 = vand.u32 %v289, 4294901760
        %v1467 = vsub.f32 %v289, %v1466
        %v1468 = vand.u32 %v1467, 4294901760
        %v1469 = vsub.f32 %v1467, %v1468
        %v1470 = vand.u32 %v1469, 4294901760
        %1471 = vmatpush1.msra.mxu0 %v1470
        %1472 = vmatprep.subr.mxu0 0.0
        %v1473 = vand.u32 %v288, 4294901760
        %v1474 = vsub.f32 %v288, %v1473
        %v1475 = vand.u32 %v1474, 4294901760
        %v1476 = vsub.f32 %v1474, %v1475
        %v1477 = vand.u32 %v1476, 4294901760
        %1478 = vmatpush1.msra.mxu0 %v1477
        %1479 = vmatprep.subr.mxu0 0.0
        %v1480 = vand.u32 %v287, 4294901760
        %v1481 = vsub.f32 %v287, %v1480
        %v1482 = vand.u32 %v1481, 4294901760
        %v1483 = vsub.f32 %v1481, %v1482
        %v1484 = vand.u32 %v1483, 4294901760
        %1485 = vmatpush1.msra.mxu0 %v1484
        %1486 = vmatprep.subr.mxu0 0.0
        %v1487 = vand.u32 %v286, 4294901760
        %v1488 = vsub.f32 %v286, %v1487
        %v1489 = vand.u32 %v1488, 4294901760
        %v1490 = vsub.f32 %v1488, %v1489
        %v1491 = vand.u32 %v1490, 4294901760
        %1492 = vmatpush1.msra.mxu0 %v1491
        %1493 = vmatprep.subr.mxu0 0.0
        %v1494 = vand.u32 %v285, 4294901760
        %v1495 = vsub.f32 %v285, %v1494
        %v1496 = vand.u32 %v1495, 4294901760
        %v1497 = vsub.f32 %v1495, %v1496
        %v1498 = vand.u32 %v1497, 4294901760
        %1499 = vmatpush1.msra.mxu0 %v1498
        %1500 = vmatprep.subr.mxu0 0.0
        %v1501 = vand.u32 %v284, 4294901760
        %v1502 = vsub.f32 %v284, %v1501
        %v1503 = vand.u32 %v1502, 4294901760
        %v1504 = vsub.f32 %v1502, %v1503
        %v1505 = vand.u32 %v1504, 4294901760
        %1506 = vmatpush1.msra.mxu0 %v1505
        %1507 = vmatprep.subr.mxu0 0.0
        %v1508 = vand.u32 %v283, 4294901760
        %v1509 = vsub.f32 %v283, %v1508
        %v1510 = vand.u32 %v1509, 4294901760
        %v1511 = vsub.f32 %v1509, %v1510
        %v1512 = vand.u32 %v1511, 4294901760
        %1513 = vmatpush1.msra.mxu0 %v1512
        %1514 = vmatprep.subr.mxu0 0.0
        %v1515 = vand.u32 %v282, 4294901760
        %v1516 = vsub.f32 %v282, %v1515
        %v1517 = vand.u32 %v1516, 4294901760
        %v1518 = vsub.f32 %v1516, %v1517
        %v1519 = vand.u32 %v1518, 4294901760
        %1520 = vmatpush1.msra.mxu0 %v1519
        %1521 = vmatprep.subr.mxu0 0.0
        %v1522 = vand.u32 %v281, 4294901760
        %v1523 = vsub.f32 %v281, %v1522
        %v1524 = vand.u32 %v1523, 4294901760
        %v1525 = vsub.f32 %v1523, %v1524
        %v1526 = vand.u32 %v1525, 4294901760
        %1527 = vmatpush1.msra.mxu0 %v1526
        %1528 = vmatprep.subr.mxu0 0.0
        %v1529 = vand.u32 %v280, 4294901760
        %v1530 = vsub.f32 %v280, %v1529
        %v1531 = vand.u32 %v1530, 4294901760
        %v1532 = vsub.f32 %v1530, %v1531
        %v1533 = vand.u32 %v1532, 4294901760
        %1534 = vmatpush1.msra.mxu0 %v1533
        %1535 = vmatprep.subr.mxu0 0.0
        %v1536 = vand.u32 %v279, 4294901760
        %v1537 = vsub.f32 %v279, %v1536
        %v1538 = vand.u32 %v1537, 4294901760
        %v1539 = vsub.f32 %v1537, %v1538
        %v1540 = vand.u32 %v1539, 4294901760
        %1541 = vmatpush1.msra.mxu0 %v1540
        %1542 = vmatprep.subr.mxu0 0.0
        %v1543 = vand.u32 %v278, 4294901760
        %v1544 = vsub.f32 %v278, %v1543
        %v1545 = vand.u32 %v1544, 4294901760
        %v1546 = vsub.f32 %v1544, %v1545
        %v1547 = vand.u32 %v1546, 4294901760
        %1548 = vmatpush1.msra.mxu0 %v1547
        %1549 = vmatprep.subr.mxu0 0.0
        %v1550 = vand.u32 %v277, 4294901760
        %v1551 = vsub.f32 %v277, %v1550
        %v1552 = vand.u32 %v1551, 4294901760
        %v1553 = vsub.f32 %v1551, %v1552
        %v1554 = vand.u32 %v1553, 4294901760
        %1555 = vmatpush1.msra.mxu0 %v1554
        %1556 = vmatprep.subr.mxu0 0.0
        %v1557 = vand.u32 %v276, 4294901760
        %v1558 = vsub.f32 %v276, %v1557
        %v1559 = vand.u32 %v1558, 4294901760
        %v1560 = vsub.f32 %v1558, %v1559
        %v1561 = vand.u32 %v1560, 4294901760
        %1562 = vmatpush1.msra.mxu0 %v1561
        %1563 = vmatprep.subr.mxu0 0.0
        %v1564 = vand.u32 %v307, 4294901760
        %v1565 = vsub.f32 %v307, %v1564
        %v1566 = vand.u32 %v1565, 4294901760
        %v1567 = vsub.f32 %v1565, %v1566
        %v1568 = vand.u32 %v1567, 4294901760
        %1569 = vmatpush2.msra.mxu0 %v1568
        %1570 = vmatprep.subr.mxu0 0.0
        %v1571 = vand.u32 %v306, 4294901760
        %v1572 = vsub.f32 %v306, %v1571
        %v1573 = vand.u32 %v1572, 4294901760
        %v1574 = vsub.f32 %v1572, %v1573
        %v1575 = vand.u32 %v1574, 4294901760
        %1576 = vmatpush2.msra.mxu0 %v1575
        %1577 = vmatprep.subr.mxu0 0.0
        %v1578 = vand.u32 %v305, 4294901760
        %v1579 = vsub.f32 %v305, %v1578
        %v1580 = vand.u32 %v1579, 4294901760
        %v1581 = vsub.f32 %v1579, %v1580
        %v1582 = vand.u32 %v1581, 4294901760
        %1583 = vmatpush2.msra.mxu0 %v1582
        %1584 = vmatprep.subr.mxu0 0.0
        %v1585 = vand.u32 %v304, 4294901760
        %v1586 = vsub.f32 %v304, %v1585
        %v1587 = vand.u32 %v1586, 4294901760
        %v1588 = vsub.f32 %v1586, %v1587
        %v1589 = vand.u32 %v1588, 4294901760
        %1590 = vmatpush2.msra.mxu0 %v1589
        %1591 = vmatprep.subr.mxu0 0.0
        %v1592 = vand.u32 %v303, 4294901760
        %v1593 = vsub.f32 %v303, %v1592
        %v1594 = vand.u32 %v1593, 4294901760
        %v1595 = vsub.f32 %v1593, %v1594
        %v1596 = vand.u32 %v1595, 4294901760
        %1597 = vmatpush2.msra.mxu0 %v1596
        %1598 = vmatprep.subr.mxu0 0.0
        %v1599 = vand.u32 %v302, 4294901760
        %v1600 = vsub.f32 %v302, %v1599
        %v1601 = vand.u32 %v1600, 4294901760
        %v1602 = vsub.f32 %v1600, %v1601
        %v1603 = vand.u32 %v1602, 4294901760
        %1604 = vmatpush2.msra.mxu0 %v1603
        %1605 = vmatprep.subr.mxu0 0.0
        %v1606 = vand.u32 %v301, 4294901760
        %v1607 = vsub.f32 %v301, %v1606
        %v1608 = vand.u32 %v1607, 4294901760
        %v1609 = vsub.f32 %v1607, %v1608
        %v1610 = vand.u32 %v1609, 4294901760
        %1611 = vmatpush2.msra.mxu0 %v1610
        %1612 = vmatprep.subr.mxu0 0.0
        %v1613 = vand.u32 %v300, 4294901760
        %v1614 = vsub.f32 %v300, %v1613
        %v1615 = vand.u32 %v1614, 4294901760
        %v1616 = vsub.f32 %v1614, %v1615
        %v1617 = vand.u32 %v1616, 4294901760
        %1618 = vmatpush2.msra.mxu0 %v1617
        %1619 = vmatprep.subr.mxu0 0.0
        %v1620 = vand.u32 %v299, 4294901760
        %v1621 = vsub.f32 %v299, %v1620
        %v1622 = vand.u32 %v1621, 4294901760
        %v1623 = vsub.f32 %v1621, %v1622
        %v1624 = vand.u32 %v1623, 4294901760
        %1625 = vmatpush2.msra.mxu0 %v1624
        %1626 = vmatprep.subr.mxu0 0.0
        %v1627 = vand.u32 %v298, 4294901760
        %v1628 = vsub.f32 %v298, %v1627
        %v1629 = vand.u32 %v1628, 4294901760
        %v1630 = vsub.f32 %v1628, %v1629
        %v1631 = vand.u32 %v1630, 4294901760
        %1632 = vmatpush2.msra.mxu0 %v1631
        %1633 = vmatprep.subr.mxu0 0.0
        %v1634 = vand.u32 %v297, 4294901760
        %v1635 = vsub.f32 %v297, %v1634
        %v1636 = vand.u32 %v1635, 4294901760
        %v1637 = vsub.f32 %v1635, %v1636
        %v1638 = vand.u32 %v1637, 4294901760
        %1639 = vmatpush2.msra.mxu0 %v1638
        %1640 = vmatprep.subr.mxu0 0.0
        %v1641 = vand.u32 %v296, 4294901760
        %v1642 = vsub.f32 %v296, %v1641
        %v1643 = vand.u32 %v1642, 4294901760
        %v1644 = vsub.f32 %v1642, %v1643
        %v1645 = vand.u32 %v1644, 4294901760
        %1646 = vmatpush2.msra.mxu0 %v1645
        %1647 = vmatprep.subr.mxu0 0.0
        %v1648 = vand.u32 %v295, 4294901760
        %v1649 = vsub.f32 %v295, %v1648
        %v1650 = vand.u32 %v1649, 4294901760
        %v1651 = vsub.f32 %v1649, %v1650
        %v1652 = vand.u32 %v1651, 4294901760
        %1653 = vmatpush2.msra.mxu0 %v1652
        %1654 = vmatprep.subr.mxu0 0.0
        %v1655 = vand.u32 %v294, 4294901760
        %v1656 = vsub.f32 %v294, %v1655
        %v1657 = vand.u32 %v1656, 4294901760
        %v1658 = vsub.f32 %v1656, %v1657
        %v1659 = vand.u32 %v1658, 4294901760
        %1660 = vmatpush2.msra.mxu0 %v1659
        %1661 = vmatprep.subr.mxu0 0.0
        %v1662 = vand.u32 %v293, 4294901760
        %v1663 = vsub.f32 %v293, %v1662
        %v1664 = vand.u32 %v1663, 4294901760
        %v1665 = vsub.f32 %v1663, %v1664
        %v1666 = vand.u32 %v1665, 4294901760
        %1667 = vmatpush2.msra.mxu0 %v1666
        %1668 = vmatprep.subr.mxu0 0.0
        %v1669 = vand.u32 %v292, 4294901760
        %v1670 = vsub.f32 %v292, %v1669
        %v1671 = vand.u32 %v1670, 4294901760
        %v1672 = vsub.f32 %v1670, %v1671
        %v1673 = vand.u32 %v1672, 4294901760
        %1674 = vmatpush2.msra.mxu0 %v1673
        %v1675 = vand.u32 %v227, 4294901760
        %1676 = vmatprep.mubr.f32.mxu0 %v1675
        %v1677 = vand.u32 %v226, 4294901760
        %1678 = vmatmul.mubr.f32.gmra.mxu0 %v1677
        %v1679 = vpop.f32.mrf.mxu0
        %v1680 = vadd.f32 %v1433, %v1679
        %v1681 = vpop.f32.mrf.mxu0
        %v1682 = vand.u32 %v237, 4294901760
        %1683 = vmatprep.mubr.f32.mxu0 %v1682
        %v1684 = vand.u32 %v236, 4294901760
        %1685 = vmatmul.mubr.f32.gmra.mxu0 %v1684
        %v1686 = vpop.f32.mrf.mxu0
        %v1687 = vadd.f32 %v1448, %v1686
        %v1688 = vpop.f32.mrf.mxu0
        %1689 = vdwg.mxu0
        %1690 = vmatprep.subr.mxu0 0.0
        %v1691 = vand.u32 %v291, 4294901760
        %v1692 = vsub.f32 %v291, %v1691
        %1693 = vmatpush1.msra.mxu0 %v1692
        %1694 = vmatprep.subr.mxu0 0.0
        %v1695 = vand.u32 %v290, 4294901760
        %v1696 = vsub.f32 %v290, %v1695
        %1697 = vmatpush1.msra.mxu0 %v1696
        %1698 = vmatprep.subr.mxu0 0.0
        %v1699 = vand.u32 %v289, 4294901760
        %v1700 = vsub.f32 %v289, %v1699
        %1701 = vmatpush1.msra.mxu0 %v1700
        %1702 = vmatprep.subr.mxu0 0.0
        %v1703 = vand.u32 %v288, 4294901760
        %v1704 = vsub.f32 %v288, %v1703
        %1705 = vmatpush1.msra.mxu0 %v1704
        %1706 = vmatprep.subr.mxu0 0.0
        %v1707 = vand.u32 %v287, 4294901760
        %v1708 = vsub.f32 %v287, %v1707
        %1709 = vmatpush1.msra.mxu0 %v1708
        %1710 = vmatprep.subr.mxu0 0.0
        %v1711 = vand.u32 %v286, 4294901760
        %v1712 = vsub.f32 %v286, %v1711
        %1713 = vmatpush1.msra.mxu0 %v1712
        %1714 = vmatprep.subr.mxu0 0.0
        %v1715 = vand.u32 %v285, 4294901760
        %v1716 = vsub.f32 %v285, %v1715
        %1717 = vmatpush1.msra.mxu0 %v1716
        %1718 = vmatprep.subr.mxu0 0.0
        %v1719 = vand.u32 %v284, 4294901760
        %v1720 = vsub.f32 %v284, %v1719
        %1721 = vmatpush1.msra.mxu0 %v1720
        %1722 = vmatprep.subr.mxu0 0.0
        %v1723 = vand.u32 %v283, 4294901760
        %v1724 = vsub.f32 %v283, %v1723
        %1725 = vmatpush1.msra.mxu0 %v1724
        %1726 = vmatprep.subr.mxu0 0.0
        %v1727 = vand.u32 %v282, 4294901760
        %v1728 = vsub.f32 %v282, %v1727
        %1729 = vmatpush1.msra.mxu0 %v1728
        %1730 = vmatprep.subr.mxu0 0.0
        %v1731 = vand.u32 %v281, 4294901760
        %v1732 = vsub.f32 %v281, %v1731
        %1733 = vmatpush1.msra.mxu0 %v1732
        %1734 = vmatprep.subr.mxu0 0.0
        %v1735 = vand.u32 %v280, 4294901760
        %v1736 = vsub.f32 %v280, %v1735
        %1737 = vmatpush1.msra.mxu0 %v1736
        %1738 = vmatprep.subr.mxu0 0.0
        %v1739 = vand.u32 %v279, 4294901760
        %v1740 = vsub.f32 %v279, %v1739
        %1741 = vmatpush1.msra.mxu0 %v1740
        %1742 = vmatprep.subr.mxu0 0.0
        %v1743 = vand.u32 %v278, 4294901760
        %v1744 = vsub.f32 %v278, %v1743
        %1745 = vmatpush1.msra.mxu0 %v1744
        %1746 = vmatprep.subr.mxu0 0.0
        %v1747 = vand.u32 %v277, 4294901760
        %v1748 = vsub.f32 %v277, %v1747
        %1749 = vmatpush1.msra.mxu0 %v1748
        %1750 = vmatprep.subr.mxu0 0.0
        %v1751 = vand.u32 %v276, 4294901760
        %v1752 = vsub.f32 %v276, %v1751
        %1753 = vmatpush1.msra.mxu0 %v1752
        %1754 = vmatprep.subr.mxu0 0.0
        %v1755 = vand.u32 %v307, 4294901760
        %v1756 = vsub.f32 %v307, %v1755
        %1757 = vmatpush2.msra.mxu0 %v1756
        %1758 = vmatprep.subr.mxu0 0.0
        %v1759 = vand.u32 %v306, 4294901760
        %v1760 = vsub.f32 %v306, %v1759
        %1761 = vmatpush2.msra.mxu0 %v1760
        %1762 = vmatprep.subr.mxu0 0.0
        %v1763 = vand.u32 %v305, 4294901760
        %v1764 = vsub.f32 %v305, %v1763
        %1765 = vmatpush2.msra.mxu0 %v1764
        %1766 = vmatprep.subr.mxu0 0.0
        %v1767 = vand.u32 %v304, 4294901760
        %v1768 = vsub.f32 %v304, %v1767
        %1769 = vmatpush2.msra.mxu0 %v1768
        %1770 = vmatprep.subr.mxu0 0.0
        %v1771 = vand.u32 %v303, 4294901760
        %v1772 = vsub.f32 %v303, %v1771
        %1773 = vmatpush2.msra.mxu0 %v1772
        %1774 = vmatprep.subr.mxu0 0.0
        %v1775 = vand.u32 %v302, 4294901760
        %v1776 = vsub.f32 %v302, %v1775
        %1777 = vmatpush2.msra.mxu0 %v1776
        %1778 = vmatprep.subr.mxu0 0.0
        %v1779 = vand.u32 %v301, 4294901760
        %v1780 = vsub.f32 %v301, %v1779
        %1781 = vmatpush2.msra.mxu0 %v1780
        %1782 = vmatprep.subr.mxu0 0.0
        %v1783 = vand.u32 %v300, 4294901760
        %v1784 = vsub.f32 %v300, %v1783
        %1785 = vmatpush2.msra.mxu0 %v1784
        %1786 = vmatprep.subr.mxu0 0.0
        %v1787 = vand.u32 %v299, 4294901760
        %v1788 = vsub.f32 %v299, %v1787
        %1789 = vmatpush2.msra.mxu0 %v1788
        %1790 = vmatprep.subr.mxu0 0.0
        %v1791 = vand.u32 %v298, 4294901760
        %v1792 = vsub.f32 %v298, %v1791
        %1793 = vmatpush2.msra.mxu0 %v1792
        %1794 = vmatprep.subr.mxu0 0.0
        %v1795 = vand.u32 %v297, 4294901760
        %v1796 = vsub.f32 %v297, %v1795
        %1797 = vmatpush2.msra.mxu0 %v1796
        %1798 = vmatprep.subr.mxu0 0.0
        %v1799 = vand.u32 %v296, 4294901760
        %v1800 = vsub.f32 %v296, %v1799
        %1801 = vmatpush2.msra.mxu0 %v1800
        %1802 = vmatprep.subr.mxu0 0.0
        %v1803 = vand.u32 %v295, 4294901760
        %v1804 = vsub.f32 %v295, %v1803
        %1805 = vmatpush2.msra.mxu0 %v1804
        %1806 = vmatprep.subr.mxu0 0.0
        %v1807 = vand.u32 %v294, 4294901760
        %v1808 = vsub.f32 %v294, %v1807
        %1809 = vmatpush2.msra.mxu0 %v1808
        %1810 = vmatprep.subr.mxu0 0.0
        %v1811 = vand.u32 %v293, 4294901760
        %v1812 = vsub.f32 %v293, %v1811
        %1813 = vmatpush2.msra.mxu0 %v1812
        %1814 = vmatprep.subr.mxu0 0.0
        %v1815 = vand.u32 %v292, 4294901760
        %v1816 = vsub.f32 %v292, %v1815
        %1817 = vmatpush2.msra.mxu0 %v1816
        %v1818 = vand.u32 %v227, 4294901760
        %v1819 = vsub.f32 %v227, %v1818
        %1820 = vmatprep.mubr.f32.mxu0 %v1819
        %v1821 = vand.u32 %v226, 4294901760
        %v1822 = vsub.f32 %v226, %v1821
        %1823 = vmatmul.mubr.f32.gmra.mxu0 %v1822
        %v1824 = vpop.f32.mrf.mxu0
        %v1825 = vadd.f32 %v1680, %v1824
        %v1826 = vpop.f32.mrf.mxu0
        %v1827 = vand.u32 %v237, 4294901760
        %v1828 = vsub.f32 %v237, %v1827
        %1829 = vmatprep.mubr.f32.mxu0 %v1828
        %v1830 = vand.u32 %v236, 4294901760
        %v1831 = vsub.f32 %v236, %v1830
        %1832 = vmatmul.mubr.f32.gmra.mxu0 %v1831
        %v1833 = vpop.f32.mrf.mxu0
        %v1834 = vadd.f32 %v1687, %v1833
        %v1835 = vpop.f32.mrf.mxu0
        %1836 = vdwg.mxu0
        %1837 = vmatprep.subr.mxu0 0.0
        %v1838 = vand.u32 %v291, 4294901760
        %1839 = vmatpush1.msra.mxu0 %v1838
        %1840 = vmatprep.subr.mxu0 0.0
        %v1841 = vand.u32 %v290, 4294901760
        %1842 = vmatpush1.msra.mxu0 %v1841
        %1843 = vmatprep.subr.mxu0 0.0
        %v1844 = vand.u32 %v289, 4294901760
        %1845 = vmatpush1.msra.mxu0 %v1844
        %1846 = vmatprep.subr.mxu0 0.0
        %v1847 = vand.u32 %v288, 4294901760
        %1848 = vmatpush1.msra.mxu0 %v1847
        %1849 = vmatprep.subr.mxu0 0.0
        %v1850 = vand.u32 %v287, 4294901760
        %1851 = vmatpush1.msra.mxu0 %v1850
        %1852 = vmatprep.subr.mxu0 0.0
        %v1853 = vand.u32 %v286, 4294901760
        %1854 = vmatpush1.msra.mxu0 %v1853
        %1855 = vmatprep.subr.mxu0 0.0
        %v1856 = vand.u32 %v285, 4294901760
        %1857 = vmatpush1.msra.mxu0 %v1856
        %1858 = vmatprep.subr.mxu0 0.0
        %v1859 = vand.u32 %v284, 4294901760
        %1860 = vmatpush1.msra.mxu0 %v1859
        %1861 = vmatprep.subr.mxu0 0.0
        %v1862 = vand.u32 %v283, 4294901760
        %1863 = vmatpush1.msra.mxu0 %v1862
        %1864 = vmatprep.subr.mxu0 0.0
        %v1865 = vand.u32 %v282, 4294901760
        %1866 = vmatpush1.msra.mxu0 %v1865
        %1867 = vmatprep.subr.mxu0 0.0
        %v1868 = vand.u32 %v281, 4294901760
        %1869 = vmatpush1.msra.mxu0 %v1868
        %1870 = vmatprep.subr.mxu0 0.0
        %v1871 = vand.u32 %v280, 4294901760
        %1872 = vmatpush1.msra.mxu0 %v1871
        %1873 = vmatprep.subr.mxu0 0.0
        %v1874 = vand.u32 %v279, 4294901760
        %1875 = vmatpush1.msra.mxu0 %v1874
        %1876 = vmatprep.subr.mxu0 0.0
        %v1877 = vand.u32 %v278, 4294901760
        %1878 = vmatpush1.msra.mxu0 %v1877
        %1879 = vmatprep.subr.mxu0 0.0
        %v1880 = vand.u32 %v277, 4294901760
        %1881 = vmatpush1.msra.mxu0 %v1880
        %1882 = vmatprep.subr.mxu0 0.0
        %v1883 = vand.u32 %v276, 4294901760
        %1884 = vmatpush1.msra.mxu0 %v1883
        %1885 = vmatprep.subr.mxu0 0.0
        %v1886 = vand.u32 %v307, 4294901760
        %1887 = vmatpush2.msra.mxu0 %v1886
        %1888 = vmatprep.subr.mxu0 0.0
        %v1889 = vand.u32 %v306, 4294901760
        %1890 = vmatpush2.msra.mxu0 %v1889
        %1891 = vmatprep.subr.mxu0 0.0
        %v1892 = vand.u32 %v305, 4294901760
        %1893 = vmatpush2.msra.mxu0 %v1892
        %1894 = vmatprep.subr.mxu0 0.0
        %v1895 = vand.u32 %v304, 4294901760
        %1896 = vmatpush2.msra.mxu0 %v1895
        %1897 = vmatprep.subr.mxu0 0.0
        %v1898 = vand.u32 %v303, 4294901760
        %1899 = vmatpush2.msra.mxu0 %v1898
        %1900 = vmatprep.subr.mxu0 0.0
        %v1901 = vand.u32 %v302, 4294901760
        %1902 = vmatpush2.msra.mxu0 %v1901
        %1903 = vmatprep.subr.mxu0 0.0
        %v1904 = vand.u32 %v301, 4294901760
        %1905 = vmatpush2.msra.mxu0 %v1904
        %1906 = vmatprep.subr.mxu0 0.0
        %v1907 = vand.u32 %v300, 4294901760
        %1908 = vmatpush2.msra.mxu0 %v1907
        %1909 = vmatprep.subr.mxu0 0.0
        %v1910 = vand.u32 %v299, 4294901760
        %1911 = vmatpush2.msra.mxu0 %v1910
        %1912 = vmatprep.subr.mxu0 0.0
        %v1913 = vand.u32 %v298, 4294901760
        %1914 = vmatpush2.msra.mxu0 %v1913
        %1915 = vmatprep.subr.mxu0 0.0
        %v1916 = vand.u32 %v297, 4294901760
        %1917 = vmatpush2.msra.mxu0 %v1916
        %1918 = vmatprep.subr.mxu0 0.0
        %v1919 = vand.u32 %v296, 4294901760
        %1920 = vmatpush2.msra.mxu0 %v1919
        %1921 = vmatprep.subr.mxu0 0.0
        %v1922 = vand.u32 %v295, 4294901760
        %1923 = vmatpush2.msra.mxu0 %v1922
        %1924 = vmatprep.subr.mxu0 0.0
        %v1925 = vand.u32 %v294, 4294901760
        %1926 = vmatpush2.msra.mxu0 %v1925
        %1927 = vmatprep.subr.mxu0 0.0
        %v1928 = vand.u32 %v293, 4294901760
        %1929 = vmatpush2.msra.mxu0 %v1928
        %1930 = vmatprep.subr.mxu0 0.0
        %v1931 = vand.u32 %v292, 4294901760
        %1932 = vmatpush2.msra.mxu0 %v1931
        %v1933 = vand.u32 %v227, 4294901760
        %v1934 = vsub.f32 %v227, %v1933
        %v1935 = vand.u32 %v1934, 4294901760
        %1936 = vmatprep.mubr.f32.mxu0 %v1935
        %v1937 = vand.u32 %v226, 4294901760
        %v1938 = vsub.f32 %v226, %v1937
        %v1939 = vand.u32 %v1938, 4294901760
        %1940 = vmatmul.mubr.f32.gmra.mxu0 %v1939
        %v1941 = vpop.f32.mrf.mxu0
        %v1942 = vadd.f32 %v1825, %v1941
        %v1943 = vpop.f32.mrf.mxu0
        %v1944 = vand.u32 %v237, 4294901760
        %v1945 = vsub.f32 %v237, %v1944
        %v1946 = vand.u32 %v1945, 4294901760
        %1947 = vmatprep.mubr.f32.mxu0 %v1946
        %v1948 = vand.u32 %v236, 4294901760
        %v1949 = vsub.f32 %v236, %v1948
        %v1950 = vand.u32 %v1949, 4294901760
        %1951 = vmatmul.mubr.f32.gmra.mxu0 %v1950
        %v1952 = vpop.f32.mrf.mxu0
        %v1953 = vadd.f32 %v1834, %v1952
        %v1954 = vpop.f32.mrf.mxu0
        %1955 = vdwg.mxu0
        %1956 = vmatprep.subr.mxu0 0.0
        %v1957 = vand.u32 %v291, 4294901760
        %v1958 = vsub.f32 %v291, %v1957
        %v1959 = vand.u32 %v1958, 4294901760
        %1960 = vmatpush1.msra.mxu0 %v1959
        %1961 = vmatprep.subr.mxu0 0.0
        %v1962 = vand.u32 %v290, 4294901760
        %v1963 = vsub.f32 %v290, %v1962
        %v1964 = vand.u32 %v1963, 4294901760
        %1965 = vmatpush1.msra.mxu0 %v1964
        %1966 = vmatprep.subr.mxu0 0.0
        %v1967 = vand.u32 %v289, 4294901760
        %v1968 = vsub.f32 %v289, %v1967
        %v1969 = vand.u32 %v1968, 4294901760
        %1970 = vmatpush1.msra.mxu0 %v1969
        %1971 = vmatprep.subr.mxu0 0.0
        %v1972 = vand.u32 %v288, 4294901760
        %v1973 = vsub.f32 %v288, %v1972
        %v1974 = vand.u32 %v1973, 4294901760
        %1975 = vmatpush1.msra.mxu0 %v1974
        %1976 = vmatprep.subr.mxu0 0.0
        %v1977 = vand.u32 %v287, 4294901760
        %v1978 = vsub.f32 %v287, %v1977
        %v1979 = vand.u32 %v1978, 4294901760
        %1980 = vmatpush1.msra.mxu0 %v1979
        %1981 = vmatprep.subr.mxu0 0.0
        %v1982 = vand.u32 %v286, 4294901760
        %v1983 = vsub.f32 %v286, %v1982
        %v1984 = vand.u32 %v1983, 4294901760
        %1985 = vmatpush1.msra.mxu0 %v1984
        %1986 = vmatprep.subr.mxu0 0.0
        %v1987 = vand.u32 %v285, 4294901760
        %v1988 = vsub.f32 %v285, %v1987
        %v1989 = vand.u32 %v1988, 4294901760
        %1990 = vmatpush1.msra.mxu0 %v1989
        %1991 = vmatprep.subr.mxu0 0.0
        %v1992 = vand.u32 %v284, 4294901760
        %v1993 = vsub.f32 %v284, %v1992
        %v1994 = vand.u32 %v1993, 4294901760
        %1995 = vmatpush1.msra.mxu0 %v1994
        %1996 = vmatprep.subr.mxu0 0.0
        %v1997 = vand.u32 %v283, 4294901760
        %v1998 = vsub.f32 %v283, %v1997
        %v1999 = vand.u32 %v1998, 4294901760
        %2000 = vmatpush1.msra.mxu0 %v1999
        %2001 = vmatprep.subr.mxu0 0.0
        %v2002 = vand.u32 %v282, 4294901760
        %v2003 = vsub.f32 %v282, %v2002
        %v2004 = vand.u32 %v2003, 4294901760
        %2005 = vmatpush1.msra.mxu0 %v2004
        %2006 = vmatprep.subr.mxu0 0.0
        %v2007 = vand.u32 %v281, 4294901760
        %v2008 = vsub.f32 %v281, %v2007
        %v2009 = vand.u32 %v2008, 4294901760
        %2010 = vmatpush1.msra.mxu0 %v2009
        %2011 = vmatprep.subr.mxu0 0.0
        %v2012 = vand.u32 %v280, 4294901760
        %v2013 = vsub.f32 %v280, %v2012
        %v2014 = vand.u32 %v2013, 4294901760
        %2015 = vmatpush1.msra.mxu0 %v2014
        %2016 = vmatprep.subr.mxu0 0.0
        %v2017 = vand.u32 %v279, 4294901760
        %v2018 = vsub.f32 %v279, %v2017
        %v2019 = vand.u32 %v2018, 4294901760
        %2020 = vmatpush1.msra.mxu0 %v2019
        %2021 = vmatprep.subr.mxu0 0.0
        %v2022 = vand.u32 %v278, 4294901760
        %v2023 = vsub.f32 %v278, %v2022
        %v2024 = vand.u32 %v2023, 4294901760
        %2025 = vmatpush1.msra.mxu0 %v2024
        %2026 = vmatprep.subr.mxu0 0.0
        %v2027 = vand.u32 %v277, 4294901760
        %v2028 = vsub.f32 %v277, %v2027
        %v2029 = vand.u32 %v2028, 4294901760
        %2030 = vmatpush1.msra.mxu0 %v2029
        %2031 = vmatprep.subr.mxu0 0.0
        %v2032 = vand.u32 %v276, 4294901760
        %v2033 = vsub.f32 %v276, %v2032
        %v2034 = vand.u32 %v2033, 4294901760
        %2035 = vmatpush1.msra.mxu0 %v2034
        %2036 = vmatprep.subr.mxu0 0.0
        %v2037 = vand.u32 %v307, 4294901760
        %v2038 = vsub.f32 %v307, %v2037
        %v2039 = vand.u32 %v2038, 4294901760
        %2040 = vmatpush2.msra.mxu0 %v2039
        %2041 = vmatprep.subr.mxu0 0.0
        %v2042 = vand.u32 %v306, 4294901760
        %v2043 = vsub.f32 %v306, %v2042
        %v2044 = vand.u32 %v2043, 4294901760
        %2045 = vmatpush2.msra.mxu0 %v2044
        %2046 = vmatprep.subr.mxu0 0.0
        %v2047 = vand.u32 %v305, 4294901760
        %v2048 = vsub.f32 %v305, %v2047
        %v2049 = vand.u32 %v2048, 4294901760
        %2050 = vmatpush2.msra.mxu0 %v2049
        %2051 = vmatprep.subr.mxu0 0.0
        %v2052 = vand.u32 %v304, 4294901760
        %v2053 = vsub.f32 %v304, %v2052
        %v2054 = vand.u32 %v2053, 4294901760
        %2055 = vmatpush2.msra.mxu0 %v2054
        %2056 = vmatprep.subr.mxu0 0.0
        %v2057 = vand.u32 %v303, 4294901760
        %v2058 = vsub.f32 %v303, %v2057
        %v2059 = vand.u32 %v2058, 4294901760
        %2060 = vmatpush2.msra.mxu0 %v2059
        %2061 = vmatprep.subr.mxu0 0.0
        %v2062 = vand.u32 %v302, 4294901760
        %v2063 = vsub.f32 %v302, %v2062
        %v2064 = vand.u32 %v2063, 4294901760
        %2065 = vmatpush2.msra.mxu0 %v2064
        %2066 = vmatprep.subr.mxu0 0.0
        %v2067 = vand.u32 %v301, 4294901760
        %v2068 = vsub.f32 %v301, %v2067
        %v2069 = vand.u32 %v2068, 4294901760
        %2070 = vmatpush2.msra.mxu0 %v2069
        %2071 = vmatprep.subr.mxu0 0.0
        %v2072 = vand.u32 %v300, 4294901760
        %v2073 = vsub.f32 %v300, %v2072
        %v2074 = vand.u32 %v2073, 4294901760
        %2075 = vmatpush2.msra.mxu0 %v2074
        %2076 = vmatprep.subr.mxu0 0.0
        %v2077 = vand.u32 %v299, 4294901760
        %v2078 = vsub.f32 %v299, %v2077
        %v2079 = vand.u32 %v2078, 4294901760
        %2080 = vmatpush2.msra.mxu0 %v2079
        %2081 = vmatprep.subr.mxu0 0.0
        %v2082 = vand.u32 %v298, 4294901760
        %v2083 = vsub.f32 %v298, %v2082
        %v2084 = vand.u32 %v2083, 4294901760
        %2085 = vmatpush2.msra.mxu0 %v2084
        %2086 = vmatprep.subr.mxu0 0.0
        %v2087 = vand.u32 %v297, 4294901760
        %v2088 = vsub.f32 %v297, %v2087
        %v2089 = vand.u32 %v2088, 4294901760
        %2090 = vmatpush2.msra.mxu0 %v2089
        %2091 = vmatprep.subr.mxu0 0.0
        %v2092 = vand.u32 %v296, 4294901760
        %v2093 = vsub.f32 %v296, %v2092
        %v2094 = vand.u32 %v2093, 4294901760
        %2095 = vmatpush2.msra.mxu0 %v2094
        %2096 = vmatprep.subr.mxu0 0.0
        %v2097 = vand.u32 %v295, 4294901760
        %v2098 = vsub.f32 %v295, %v2097
        %v2099 = vand.u32 %v2098, 4294901760
        %2100 = vmatpush2.msra.mxu0 %v2099
        %2101 = vmatprep.subr.mxu0 0.0
        %v2102 = vand.u32 %v294, 4294901760
        %v2103 = vsub.f32 %v294, %v2102
        %v2104 = vand.u32 %v2103, 4294901760
        %2105 = vmatpush2.msra.mxu0 %v2104
        %2106 = vmatprep.subr.mxu0 0.0
        %v2107 = vand.u32 %v293, 4294901760
        %v2108 = vsub.f32 %v293, %v2107
        %v2109 = vand.u32 %v2108, 4294901760
        %2110 = vmatpush2.msra.mxu0 %v2109
        %2111 = vmatprep.subr.mxu0 0.0
        %v2112 = vand.u32 %v292, 4294901760
        %v2113 = vsub.f32 %v292, %v2112
        %v2114 = vand.u32 %v2113, 4294901760
        %2115 = vmatpush2.msra.mxu0 %v2114
        %v2116 = vand.u32 %v227, 4294901760
        %2117 = vmatprep.mubr.f32.mxu0 %v2116
        %v2118 = vand.u32 %v226, 4294901760
        %2119 = vmatmul.mubr.f32.gmra.mxu0 %v2118
        %v2120 = vpop.f32.mrf.mxu0
        %v2121 = vadd.f32 %v1942, %v2120
        %v2122 = vpop.f32.mrf.mxu0
        %v2123 = vand.u32 %v237, 4294901760
        %2124 = vmatprep.mubr.f32.mxu0 %v2123
        %v2125 = vand.u32 %v236, 4294901760
        %2126 = vmatmul.mubr.f32.gmra.mxu0 %v2125
        %v2127 = vpop.f32.mrf.mxu0
        %v2128 = vadd.f32 %v1953, %v2127
        %v2129 = vpop.f32.mrf.mxu0
        %2130 = vdwg.mxu0
        %2131 = vmatprep.subr.mxu0 0.0
        %v2132 = vand.u32 %v291, 4294901760
        %2133 = vmatpush1.msra.mxu0 %v2132
        %2134 = vmatprep.subr.mxu0 0.0
        %v2135 = vand.u32 %v290, 4294901760
        %2136 = vmatpush1.msra.mxu0 %v2135
        %2137 = vmatprep.subr.mxu0 0.0
        %v2138 = vand.u32 %v289, 4294901760
        %2139 = vmatpush1.msra.mxu0 %v2138
        %2140 = vmatprep.subr.mxu0 0.0
        %v2141 = vand.u32 %v288, 4294901760
        %2142 = vmatpush1.msra.mxu0 %v2141
        %2143 = vmatprep.subr.mxu0 0.0
        %v2144 = vand.u32 %v287, 4294901760
        %2145 = vmatpush1.msra.mxu0 %v2144
        %2146 = vmatprep.subr.mxu0 0.0
        %v2147 = vand.u32 %v286, 4294901760
        %2148 = vmatpush1.msra.mxu0 %v2147
        %2149 = vmatprep.subr.mxu0 0.0
        %v2150 = vand.u32 %v285, 4294901760
        %2151 = vmatpush1.msra.mxu0 %v2150
        %2152 = vmatprep.subr.mxu0 0.0
        %v2153 = vand.u32 %v284, 4294901760
        %2154 = vmatpush1.msra.mxu0 %v2153
        %2155 = vmatprep.subr.mxu0 0.0
        %v2156 = vand.u32 %v283, 4294901760
        %2157 = vmatpush1.msra.mxu0 %v2156
        %2158 = vmatprep.subr.mxu0 0.0
        %v2159 = vand.u32 %v282, 4294901760
        %2160 = vmatpush1.msra.mxu0 %v2159
        %2161 = vmatprep.subr.mxu0 0.0
        %v2162 = vand.u32 %v281, 4294901760
        %2163 = vmatpush1.msra.mxu0 %v2162
        %2164 = vmatprep.subr.mxu0 0.0
        %v2165 = vand.u32 %v280, 4294901760
        %2166 = vmatpush1.msra.mxu0 %v2165
        %2167 = vmatprep.subr.mxu0 0.0
        %v2168 = vand.u32 %v279, 4294901760
        %2169 = vmatpush1.msra.mxu0 %v2168
        %2170 = vmatprep.subr.mxu0 0.0
        %v2171 = vand.u32 %v278, 4294901760
        %2172 = vmatpush1.msra.mxu0 %v2171
        %2173 = vmatprep.subr.mxu0 0.0
        %v2174 = vand.u32 %v277, 4294901760
        %2175 = vmatpush1.msra.mxu0 %v2174
        %2176 = vmatprep.subr.mxu0 0.0
        %v2177 = vand.u32 %v276, 4294901760
        %2178 = vmatpush1.msra.mxu0 %v2177
        %2179 = vmatprep.subr.mxu0 0.0
        %v2180 = vand.u32 %v307, 4294901760
        %2181 = vmatpush2.msra.mxu0 %v2180
        %2182 = vmatprep.subr.mxu0 0.0
        %v2183 = vand.u32 %v306, 4294901760
        %2184 = vmatpush2.msra.mxu0 %v2183
        %2185 = vmatprep.subr.mxu0 0.0
        %v2186 = vand.u32 %v305, 4294901760
        %2187 = vmatpush2.msra.mxu0 %v2186
        %2188 = vmatprep.subr.mxu0 0.0
        %v2189 = vand.u32 %v304, 4294901760
        %2190 = vmatpush2.msra.mxu0 %v2189
        %2191 = vmatprep.subr.mxu0 0.0
        %v2192 = vand.u32 %v303, 4294901760
        %2193 = vmatpush2.msra.mxu0 %v2192
        %2194 = vmatprep.subr.mxu0 0.0
        %v2195 = vand.u32 %v302, 4294901760
        %2196 = vmatpush2.msra.mxu0 %v2195
        %2197 = vmatprep.subr.mxu0 0.0
        %v2198 = vand.u32 %v301, 4294901760
        %2199 = vmatpush2.msra.mxu0 %v2198
        %2200 = vmatprep.subr.mxu0 0.0
        %v2201 = vand.u32 %v300, 4294901760
        %2202 = vmatpush2.msra.mxu0 %v2201
        %2203 = vmatprep.subr.mxu0 0.0
        %v2204 = vand.u32 %v299, 4294901760
        %2205 = vmatpush2.msra.mxu0 %v2204
        %2206 = vmatprep.subr.mxu0 0.0
        %v2207 = vand.u32 %v298, 4294901760
        %2208 = vmatpush2.msra.mxu0 %v2207
        %2209 = vmatprep.subr.mxu0 0.0
        %v2210 = vand.u32 %v297, 4294901760
        %2211 = vmatpush2.msra.mxu0 %v2210
        %2212 = vmatprep.subr.mxu0 0.0
        %v2213 = vand.u32 %v296, 4294901760
        %2214 = vmatpush2.msra.mxu0 %v2213
        %2215 = vmatprep.subr.mxu0 0.0
        %v2216 = vand.u32 %v295, 4294901760
        %2217 = vmatpush2.msra.mxu0 %v2216
        %2218 = vmatprep.subr.mxu0 0.0
        %v2219 = vand.u32 %v294, 4294901760
        %2220 = vmatpush2.msra.mxu0 %v2219
        %2221 = vmatprep.subr.mxu0 0.0
        %v2222 = vand.u32 %v293, 4294901760
        %2223 = vmatpush2.msra.mxu0 %v2222
        %2224 = vmatprep.subr.mxu0 0.0
        %v2225 = vand.u32 %v292, 4294901760
        %2226 = vmatpush2.msra.mxu0 %v2225
        %v2227 = vand.u32 %v227, 4294901760
        %2228 = vmatprep.mubr.f32.mxu0 %v2227
        %v2229 = vand.u32 %v226, 4294901760
        %2230 = vmatmul.mubr.f32.gmra.mxu0 %v2229
        %v2231 = vpop.f32.mrf.mxu0
        %v2232 = vadd.f32 %v2121, %v2231
        %v2233 = vpop.f32.mrf.mxu0
        %v2234 = vand.u32 %v237, 4294901760
        %2235 = vmatprep.mubr.f32.mxu0 %v2234
        %v2236 = vand.u32 %v236, 4294901760
        %2237 = vmatmul.mubr.f32.gmra.mxu0 %v2236
        %v2238 = vpop.f32.mrf.mxu0
        %v2239 = vadd.f32 %v2128, %v2238
        %v2240 = vpop.f32.mrf.mxu0
        %2241 = vdwg.mxu0
        %2242 = vmatprep.subr.mxu0 0.0
        %v2243 = vand.u32 %v323, 4294901760
        %2244 = vmatpush1.msra.mxu0 %v2243
        %2245 = vmatprep.subr.mxu0 0.0
        %v2246 = vand.u32 %v322, 4294901760
        %2247 = vmatpush1.msra.mxu0 %v2246
        %2248 = vmatprep.subr.mxu0 0.0
        %v2249 = vand.u32 %v321, 4294901760
        %2250 = vmatpush1.msra.mxu0 %v2249
        %2251 = vmatprep.subr.mxu0 0.0
        %v2252 = vand.u32 %v320, 4294901760
        %2253 = vmatpush1.msra.mxu0 %v2252
        %2254 = vmatprep.subr.mxu0 0.0
        %v2255 = vand.u32 %v319, 4294901760
        %2256 = vmatpush1.msra.mxu0 %v2255
        %2257 = vmatprep.subr.mxu0 0.0
        %v2258 = vand.u32 %v318, 4294901760
        %2259 = vmatpush1.msra.mxu0 %v2258
        %2260 = vmatprep.subr.mxu0 0.0
        %v2261 = vand.u32 %v317, 4294901760
        %2262 = vmatpush1.msra.mxu0 %v2261
        %2263 = vmatprep.subr.mxu0 0.0
        %v2264 = vand.u32 %v316, 4294901760
        %2265 = vmatpush1.msra.mxu0 %v2264
        %2266 = vmatprep.subr.mxu0 0.0
        %v2267 = vand.u32 %v315, 4294901760
        %2268 = vmatpush1.msra.mxu0 %v2267
        %2269 = vmatprep.subr.mxu0 0.0
        %v2270 = vand.u32 %v314, 4294901760
        %2271 = vmatpush1.msra.mxu0 %v2270
        %2272 = vmatprep.subr.mxu0 0.0
        %v2273 = vand.u32 %v313, 4294901760
        %2274 = vmatpush1.msra.mxu0 %v2273
        %2275 = vmatprep.subr.mxu0 0.0
        %v2276 = vand.u32 %v312, 4294901760
        %2277 = vmatpush1.msra.mxu0 %v2276
        %2278 = vmatprep.subr.mxu0 0.0
        %v2279 = vand.u32 %v311, 4294901760
        %2280 = vmatpush1.msra.mxu0 %v2279
        %2281 = vmatprep.subr.mxu0 0.0
        %v2282 = vand.u32 %v310, 4294901760
        %2283 = vmatpush1.msra.mxu0 %v2282
        %2284 = vmatprep.subr.mxu0 0.0
        %v2285 = vand.u32 %v309, 4294901760
        %2286 = vmatpush1.msra.mxu0 %v2285
        %2287 = vmatprep.subr.mxu0 0.0
        %v2288 = vand.u32 %v308, 4294901760
        %2289 = vmatpush1.msra.mxu0 %v2288
        %2290 = vmatprep.subr.mxu0 0.0
        %v2291 = vand.u32 %v339, 4294901760
        %2292 = vmatpush2.msra.mxu0 %v2291
        %2293 = vmatprep.subr.mxu0 0.0
        %v2294 = vand.u32 %v338, 4294901760
        %2295 = vmatpush2.msra.mxu0 %v2294
        %2296 = vmatprep.subr.mxu0 0.0
        %v2297 = vand.u32 %v337, 4294901760
        %2298 = vmatpush2.msra.mxu0 %v2297
        %2299 = vmatprep.subr.mxu0 0.0
        %v2300 = vand.u32 %v336, 4294901760
        %2301 = vmatpush2.msra.mxu0 %v2300
        %2302 = vmatprep.subr.mxu0 0.0
        %v2303 = vand.u32 %v335, 4294901760
        %2304 = vmatpush2.msra.mxu0 %v2303
        %2305 = vmatprep.subr.mxu0 0.0
        %v2306 = vand.u32 %v334, 4294901760
        %2307 = vmatpush2.msra.mxu0 %v2306
        %2308 = vmatprep.subr.mxu0 0.0
        %v2309 = vand.u32 %v333, 4294901760
        %2310 = vmatpush2.msra.mxu0 %v2309
        %2311 = vmatprep.subr.mxu0 0.0
        %v2312 = vand.u32 %v332, 4294901760
        %2313 = vmatpush2.msra.mxu0 %v2312
        %2314 = vmatprep.subr.mxu0 0.0
        %v2315 = vand.u32 %v331, 4294901760
        %2316 = vmatpush2.msra.mxu0 %v2315
        %2317 = vmatprep.subr.mxu0 0.0
        %v2318 = vand.u32 %v330, 4294901760
        %2319 = vmatpush2.msra.mxu0 %v2318
        %2320 = vmatprep.subr.mxu0 0.0
        %v2321 = vand.u32 %v329, 4294901760
        %2322 = vmatpush2.msra.mxu0 %v2321
        %2323 = vmatprep.subr.mxu0 0.0
        %v2324 = vand.u32 %v328, 4294901760
        %2325 = vmatpush2.msra.mxu0 %v2324
        %2326 = vmatprep.subr.mxu0 0.0
        %v2327 = vand.u32 %v327, 4294901760
        %2328 = vmatpush2.msra.mxu0 %v2327
        %2329 = vmatprep.subr.mxu0 0.0
        %v2330 = vand.u32 %v326, 4294901760
        %2331 = vmatpush2.msra.mxu0 %v2330
        %2332 = vmatprep.subr.mxu0 0.0
        %v2333 = vand.u32 %v325, 4294901760
        %2334 = vmatpush2.msra.mxu0 %v2333
        %2335 = vmatprep.subr.mxu0 0.0
        %v2336 = vand.u32 %v324, 4294901760
        %2337 = vmatpush2.msra.mxu0 %v2336
        %v2338 = vand.u32 %v229, 4294901760
        %v2339 = vsub.f32 %v229, %v2338
        %v2340 = vand.u32 %v2339, 4294901760
        %v2341 = vsub.f32 %v2339, %v2340
        %v2342 = vand.u32 %v2341, 4294901760
        %2343 = vmatprep.mubr.f32.mxu0 %v2342
        %v2344 = vand.u32 %v228, 4294901760
        %v2345 = vsub.f32 %v228, %v2344
        %v2346 = vand.u32 %v2345, 4294901760
        %v2347 = vsub.f32 %v2345, %v2346
        %v2348 = vand.u32 %v2347, 4294901760
        %2349 = vmatmul.mubr.f32.gmra.mxu0 %v2348
        %v2350 = vpop.f32.mrf.mxu0
        %v2351 = vadd.f32 %v2232, %v2350
        %v2352 = vpop.f32.mrf.mxu0
        %v2353 = vand.u32 %v239, 4294901760
        %v2354 = vsub.f32 %v239, %v2353
        %v2355 = vand.u32 %v2354, 4294901760
        %v2356 = vsub.f32 %v2354, %v2355
        %v2357 = vand.u32 %v2356, 4294901760
        %2358 = vmatprep.mubr.f32.mxu0 %v2357
        %v2359 = vand.u32 %v238, 4294901760
        %v2360 = vsub.f32 %v238, %v2359
        %v2361 = vand.u32 %v2360, 4294901760
        %v2362 = vsub.f32 %v2360, %v2361
        %v2363 = vand.u32 %v2362, 4294901760
        %2364 = vmatmul.mubr.f32.gmra.mxu0 %v2363
        %v2365 = vpop.f32.mrf.mxu0
        %v2366 = vadd.f32 %v2239, %v2365
        %v2367 = vpop.f32.mrf.mxu0
        %2368 = vdwg.mxu0
        %2369 = vmatprep.subr.mxu0 0.0
        %v2370 = vand.u32 %v323, 4294901760
        %v2371 = vsub.f32 %v323, %v2370
        %v2372 = vand.u32 %v2371, 4294901760
        %v2373 = vsub.f32 %v2371, %v2372
        %v2374 = vand.u32 %v2373, 4294901760
        %2375 = vmatpush1.msra.mxu0 %v2374
        %2376 = vmatprep.subr.mxu0 0.0
        %v2377 = vand.u32 %v322, 4294901760
        %v2378 = vsub.f32 %v322, %v2377
        %v2379 = vand.u32 %v2378, 4294901760
        %v2380 = vsub.f32 %v2378, %v2379
        %v2381 = vand.u32 %v2380, 4294901760
        %2382 = vmatpush1.msra.mxu0 %v2381
        %2383 = vmatprep.subr.mxu0 0.0
        %v2384 = vand.u32 %v321, 4294901760
        %v2385 = vsub.f32 %v321, %v2384
        %v2386 = vand.u32 %v2385, 4294901760
        %v2387 = vsub.f32 %v2385, %v2386
        %v2388 = vand.u32 %v2387, 4294901760
        %2389 = vmatpush1.msra.mxu0 %v2388
        %2390 = vmatprep.subr.mxu0 0.0
        %v2391 = vand.u32 %v320, 4294901760
        %v2392 = vsub.f32 %v320, %v2391
        %v2393 = vand.u32 %v2392, 4294901760
        %v2394 = vsub.f32 %v2392, %v2393
        %v2395 = vand.u32 %v2394, 4294901760
        %2396 = vmatpush1.msra.mxu0 %v2395
        %2397 = vmatprep.subr.mxu0 0.0
        %v2398 = vand.u32 %v319, 4294901760
        %v2399 = vsub.f32 %v319, %v2398
        %v2400 = vand.u32 %v2399, 4294901760
        %v2401 = vsub.f32 %v2399, %v2400
        %v2402 = vand.u32 %v2401, 4294901760
        %2403 = vmatpush1.msra.mxu0 %v2402
        %2404 = vmatprep.subr.mxu0 0.0
        %v2405 = vand.u32 %v318, 4294901760
        %v2406 = vsub.f32 %v318, %v2405
        %v2407 = vand.u32 %v2406, 4294901760
        %v2408 = vsub.f32 %v2406, %v2407
        %v2409 = vand.u32 %v2408, 4294901760
        %2410 = vmatpush1.msra.mxu0 %v2409
        %2411 = vmatprep.subr.mxu0 0.0
        %v2412 = vand.u32 %v317, 4294901760
        %v2413 = vsub.f32 %v317, %v2412
        %v2414 = vand.u32 %v2413, 4294901760
        %v2415 = vsub.f32 %v2413, %v2414
        %v2416 = vand.u32 %v2415, 4294901760
        %2417 = vmatpush1.msra.mxu0 %v2416
        %2418 = vmatprep.subr.mxu0 0.0
        %v2419 = vand.u32 %v316, 4294901760
        %v2420 = vsub.f32 %v316, %v2419
        %v2421 = vand.u32 %v2420, 4294901760
        %v2422 = vsub.f32 %v2420, %v2421
        %v2423 = vand.u32 %v2422, 4294901760
        %2424 = vmatpush1.msra.mxu0 %v2423
        %2425 = vmatprep.subr.mxu0 0.0
        %v2426 = vand.u32 %v315, 4294901760
        %v2427 = vsub.f32 %v315, %v2426
        %v2428 = vand.u32 %v2427, 4294901760
        %v2429 = vsub.f32 %v2427, %v2428
        %v2430 = vand.u32 %v2429, 4294901760
        %2431 = vmatpush1.msra.mxu0 %v2430
        %2432 = vmatprep.subr.mxu0 0.0
        %v2433 = vand.u32 %v314, 4294901760
        %v2434 = vsub.f32 %v314, %v2433
        %v2435 = vand.u32 %v2434, 4294901760
        %v2436 = vsub.f32 %v2434, %v2435
        %v2437 = vand.u32 %v2436, 4294901760
        %2438 = vmatpush1.msra.mxu0 %v2437
        %2439 = vmatprep.subr.mxu0 0.0
        %v2440 = vand.u32 %v313, 4294901760
        %v2441 = vsub.f32 %v313, %v2440
        %v2442 = vand.u32 %v2441, 4294901760
        %v2443 = vsub.f32 %v2441, %v2442
        %v2444 = vand.u32 %v2443, 4294901760
        %2445 = vmatpush1.msra.mxu0 %v2444
        %2446 = vmatprep.subr.mxu0 0.0
        %v2447 = vand.u32 %v312, 4294901760
        %v2448 = vsub.f32 %v312, %v2447
        %v2449 = vand.u32 %v2448, 4294901760
        %v2450 = vsub.f32 %v2448, %v2449
        %v2451 = vand.u32 %v2450, 4294901760
        %2452 = vmatpush1.msra.mxu0 %v2451
        %2453 = vmatprep.subr.mxu0 0.0
        %v2454 = vand.u32 %v311, 4294901760
        %v2455 = vsub.f32 %v311, %v2454
        %v2456 = vand.u32 %v2455, 4294901760
        %v2457 = vsub.f32 %v2455, %v2456
        %v2458 = vand.u32 %v2457, 4294901760
        %2459 = vmatpush1.msra.mxu0 %v2458
        %2460 = vmatprep.subr.mxu0 0.0
        %v2461 = vand.u32 %v310, 4294901760
        %v2462 = vsub.f32 %v310, %v2461
        %v2463 = vand.u32 %v2462, 4294901760
        %v2464 = vsub.f32 %v2462, %v2463
        %v2465 = vand.u32 %v2464, 4294901760
        %2466 = vmatpush1.msra.mxu0 %v2465
        %2467 = vmatprep.subr.mxu0 0.0
        %v2468 = vand.u32 %v309, 4294901760
        %v2469 = vsub.f32 %v309, %v2468
        %v2470 = vand.u32 %v2469, 4294901760
        %v2471 = vsub.f32 %v2469, %v2470
        %v2472 = vand.u32 %v2471, 4294901760
        %2473 = vmatpush1.msra.mxu0 %v2472
        %2474 = vmatprep.subr.mxu0 0.0
        %v2475 = vand.u32 %v308, 4294901760
        %v2476 = vsub.f32 %v308, %v2475
        %v2477 = vand.u32 %v2476, 4294901760
        %v2478 = vsub.f32 %v2476, %v2477
        %v2479 = vand.u32 %v2478, 4294901760
        %2480 = vmatpush1.msra.mxu0 %v2479
        %2481 = vmatprep.subr.mxu0 0.0
        %v2482 = vand.u32 %v339, 4294901760
        %v2483 = vsub.f32 %v339, %v2482
        %v2484 = vand.u32 %v2483, 4294901760
        %v2485 = vsub.f32 %v2483, %v2484
        %v2486 = vand.u32 %v2485, 4294901760
        %2487 = vmatpush2.msra.mxu0 %v2486
        %2488 = vmatprep.subr.mxu0 0.0
        %v2489 = vand.u32 %v338, 4294901760
        %v2490 = vsub.f32 %v338, %v2489
        %v2491 = vand.u32 %v2490, 4294901760
        %v2492 = vsub.f32 %v2490, %v2491
        %v2493 = vand.u32 %v2492, 4294901760
        %2494 = vmatpush2.msra.mxu0 %v2493
        %2495 = vmatprep.subr.mxu0 0.0
        %v2496 = vand.u32 %v337, 4294901760
        %v2497 = vsub.f32 %v337, %v2496
        %v2498 = vand.u32 %v2497, 4294901760
        %v2499 = vsub.f32 %v2497, %v2498
        %v2500 = vand.u32 %v2499, 4294901760
        %2501 = vmatpush2.msra.mxu0 %v2500
        %2502 = vmatprep.subr.mxu0 0.0
        %v2503 = vand.u32 %v336, 4294901760
        %v2504 = vsub.f32 %v336, %v2503
        %v2505 = vand.u32 %v2504, 4294901760
        %v2506 = vsub.f32 %v2504, %v2505
        %v2507 = vand.u32 %v2506, 4294901760
        %2508 = vmatpush2.msra.mxu0 %v2507
        %2509 = vmatprep.subr.mxu0 0.0
        %v2510 = vand.u32 %v335, 4294901760
        %v2511 = vsub.f32 %v335, %v2510
        %v2512 = vand.u32 %v2511, 4294901760
        %v2513 = vsub.f32 %v2511, %v2512
        %v2514 = vand.u32 %v2513, 4294901760
        %2515 = vmatpush2.msra.mxu0 %v2514
        %2516 = vmatprep.subr.mxu0 0.0
        %v2517 = vand.u32 %v334, 4294901760
        %v2518 = vsub.f32 %v334, %v2517
        %v2519 = vand.u32 %v2518, 4294901760
        %v2520 = vsub.f32 %v2518, %v2519
        %v2521 = vand.u32 %v2520, 4294901760
        %2522 = vmatpush2.msra.mxu0 %v2521
        %2523 = vmatprep.subr.mxu0 0.0
        %v2524 = vand.u32 %v333, 4294901760
        %v2525 = vsub.f32 %v333, %v2524
        %v2526 = vand.u32 %v2525, 4294901760
        %v2527 = vsub.f32 %v2525, %v2526
        %v2528 = vand.u32 %v2527, 4294901760
        %2529 = vmatpush2.msra.mxu0 %v2528
        %2530 = vmatprep.subr.mxu0 0.0
        %v2531 = vand.u32 %v332, 4294901760
        %v2532 = vsub.f32 %v332, %v2531
        %v2533 = vand.u32 %v2532, 4294901760
        %v2534 = vsub.f32 %v2532, %v2533
        %v2535 = vand.u32 %v2534, 4294901760
        %2536 = vmatpush2.msra.mxu0 %v2535
        %2537 = vmatprep.subr.mxu0 0.0
        %v2538 = vand.u32 %v331, 4294901760
        %v2539 = vsub.f32 %v331, %v2538
        %v2540 = vand.u32 %v2539, 4294901760
        %v2541 = vsub.f32 %v2539, %v2540
        %v2542 = vand.u32 %v2541, 4294901760
        %2543 = vmatpush2.msra.mxu0 %v2542
        %2544 = vmatprep.subr.mxu0 0.0
        %v2545 = vand.u32 %v330, 4294901760
        %v2546 = vsub.f32 %v330, %v2545
        %v2547 = vand.u32 %v2546, 4294901760
        %v2548 = vsub.f32 %v2546, %v2547
        %v2549 = vand.u32 %v2548, 4294901760
        %2550 = vmatpush2.msra.mxu0 %v2549
        %2551 = vmatprep.subr.mxu0 0.0
        %v2552 = vand.u32 %v329, 4294901760
        %v2553 = vsub.f32 %v329, %v2552
        %v2554 = vand.u32 %v2553, 4294901760
        %v2555 = vsub.f32 %v2553, %v2554
        %v2556 = vand.u32 %v2555, 4294901760
        %2557 = vmatpush2.msra.mxu0 %v2556
        %2558 = vmatprep.subr.mxu0 0.0
        %v2559 = vand.u32 %v328, 4294901760
        %v2560 = vsub.f32 %v328, %v2559
        %v2561 = vand.u32 %v2560, 4294901760
        %v2562 = vsub.f32 %v2560, %v2561
        %v2563 = vand.u32 %v2562, 4294901760
        %2564 = vmatpush2.msra.mxu0 %v2563
        %2565 = vmatprep.subr.mxu0 0.0
        %v2566 = vand.u32 %v327, 4294901760
        %v2567 = vsub.f32 %v327, %v2566
        %v2568 = vand.u32 %v2567, 4294901760
        %v2569 = vsub.f32 %v2567, %v2568
        %v2570 = vand.u32 %v2569, 4294901760
        %2571 = vmatpush2.msra.mxu0 %v2570
        %2572 = vmatprep.subr.mxu0 0.0
        %v2573 = vand.u32 %v326, 4294901760
        %v2574 = vsub.f32 %v326, %v2573
        %v2575 = vand.u32 %v2574, 4294901760
        %v2576 = vsub.f32 %v2574, %v2575
        %v2577 = vand.u32 %v2576, 4294901760
        %2578 = vmatpush2.msra.mxu0 %v2577
        %2579 = vmatprep.subr.mxu0 0.0
        %v2580 = vand.u32 %v325, 4294901760
        %v2581 = vsub.f32 %v325, %v2580
        %v2582 = vand.u32 %v2581, 4294901760
        %v2583 = vsub.f32 %v2581, %v2582
        %v2584 = vand.u32 %v2583, 4294901760
        %2585 = vmatpush2.msra.mxu0 %v2584
        %2586 = vmatprep.subr.mxu0 0.0
        %v2587 = vand.u32 %v324, 4294901760
        %v2588 = vsub.f32 %v324, %v2587
        %v2589 = vand.u32 %v2588, 4294901760
        %v2590 = vsub.f32 %v2588, %v2589
        %v2591 = vand.u32 %v2590, 4294901760
        %2592 = vmatpush2.msra.mxu0 %v2591
        %v2593 = vand.u32 %v229, 4294901760
        %2594 = vmatprep.mubr.f32.mxu0 %v2593
        %v2595 = vand.u32 %v228, 4294901760
        %2596 = vmatmul.mubr.f32.gmra.mxu0 %v2595
        %v2597 = vpop.f32.mrf.mxu0
        %v2598 = vadd.f32 %v2351, %v2597
        %v2599 = vpop.f32.mrf.mxu0
        %v2600 = vand.u32 %v239, 4294901760
        %2601 = vmatprep.mubr.f32.mxu0 %v2600
        %v2602 = vand.u32 %v238, 4294901760
        %2603 = vmatmul.mubr.f32.gmra.mxu0 %v2602
        %v2604 = vpop.f32.mrf.mxu0
        %v2605 = vadd.f32 %v2366, %v2604
        %v2606 = vpop.f32.mrf.mxu0
        %2607 = vdwg.mxu0
        %2608 = vmatprep.subr.mxu0 0.0
        %v2609 = vand.u32 %v323, 4294901760
        %v2610 = vsub.f32 %v323, %v2609
        %2611 = vmatpush1.msra.mxu0 %v2610
        %2612 = vmatprep.subr.mxu0 0.0
        %v2613 = vand.u32 %v322, 4294901760
        %v2614 = vsub.f32 %v322, %v2613
        %2615 = vmatpush1.msra.mxu0 %v2614
        %2616 = vmatprep.subr.mxu0 0.0
        %v2617 = vand.u32 %v321, 4294901760
        %v2618 = vsub.f32 %v321, %v2617
        %2619 = vmatpush1.msra.mxu0 %v2618
        %2620 = vmatprep.subr.mxu0 0.0
        %v2621 = vand.u32 %v320, 4294901760
        %v2622 = vsub.f32 %v320, %v2621
        %2623 = vmatpush1.msra.mxu0 %v2622
        %2624 = vmatprep.subr.mxu0 0.0
        %v2625 = vand.u32 %v319, 4294901760
        %v2626 = vsub.f32 %v319, %v2625
        %2627 = vmatpush1.msra.mxu0 %v2626
        %2628 = vmatprep.subr.mxu0 0.0
        %v2629 = vand.u32 %v318, 4294901760
        %v2630 = vsub.f32 %v318, %v2629
        %2631 = vmatpush1.msra.mxu0 %v2630
        %2632 = vmatprep.subr.mxu0 0.0
        %v2633 = vand.u32 %v317, 4294901760
        %v2634 = vsub.f32 %v317, %v2633
        %2635 = vmatpush1.msra.mxu0 %v2634
        %2636 = vmatprep.subr.mxu0 0.0
        %v2637 = vand.u32 %v316, 4294901760
        %v2638 = vsub.f32 %v316, %v2637
        %2639 = vmatpush1.msra.mxu0 %v2638
        %2640 = vmatprep.subr.mxu0 0.0
        %v2641 = vand.u32 %v315, 4294901760
        %v2642 = vsub.f32 %v315, %v2641
        %2643 = vmatpush1.msra.mxu0 %v2642
        %2644 = vmatprep.subr.mxu0 0.0
        %v2645 = vand.u32 %v314, 4294901760
        %v2646 = vsub.f32 %v314, %v2645
        %2647 = vmatpush1.msra.mxu0 %v2646
        %2648 = vmatprep.subr.mxu0 0.0
        %v2649 = vand.u32 %v313, 4294901760
        %v2650 = vsub.f32 %v313, %v2649
        %2651 = vmatpush1.msra.mxu0 %v2650
        %2652 = vmatprep.subr.mxu0 0.0
        %v2653 = vand.u32 %v312, 4294901760
        %v2654 = vsub.f32 %v312, %v2653
        %2655 = vmatpush1.msra.mxu0 %v2654
        %2656 = vmatprep.subr.mxu0 0.0
        %v2657 = vand.u32 %v311, 4294901760
        %v2658 = vsub.f32 %v311, %v2657
        %2659 = vmatpush1.msra.mxu0 %v2658
        %2660 = vmatprep.subr.mxu0 0.0
        %v2661 = vand.u32 %v310, 4294901760
        %v2662 = vsub.f32 %v310, %v2661
        %2663 = vmatpush1.msra.mxu0 %v2662
        %2664 = vmatprep.subr.mxu0 0.0
        %v2665 = vand.u32 %v309, 4294901760
        %v2666 = vsub.f32 %v309, %v2665
        %2667 = vmatpush1.msra.mxu0 %v2666
        %2668 = vmatprep.subr.mxu0 0.0
        %v2669 = vand.u32 %v308, 4294901760
        %v2670 = vsub.f32 %v308, %v2669
        %2671 = vmatpush1.msra.mxu0 %v2670
        %2672 = vmatprep.subr.mxu0 0.0
        %v2673 = vand.u32 %v339, 4294901760
        %v2674 = vsub.f32 %v339, %v2673
        %2675 = vmatpush2.msra.mxu0 %v2674
        %2676 = vmatprep.subr.mxu0 0.0
        %v2677 = vand.u32 %v338, 4294901760
        %v2678 = vsub.f32 %v338, %v2677
        %2679 = vmatpush2.msra.mxu0 %v2678
        %2680 = vmatprep.subr.mxu0 0.0
        %v2681 = vand.u32 %v337, 4294901760
        %v2682 = vsub.f32 %v337, %v2681
        %2683 = vmatpush2.msra.mxu0 %v2682
        %2684 = vmatprep.subr.mxu0 0.0
        %v2685 = vand.u32 %v336, 4294901760
        %v2686 = vsub.f32 %v336, %v2685
        %2687 = vmatpush2.msra.mxu0 %v2686
        %2688 = vmatprep.subr.mxu0 0.0
        %v2689 = vand.u32 %v335, 4294901760
        %v2690 = vsub.f32 %v335, %v2689
        %2691 = vmatpush2.msra.mxu0 %v2690
        %2692 = vmatprep.subr.mxu0 0.0
        %v2693 = vand.u32 %v334, 4294901760
        %v2694 = vsub.f32 %v334, %v2693
        %2695 = vmatpush2.msra.mxu0 %v2694
        %2696 = vmatprep.subr.mxu0 0.0
        %v2697 = vand.u32 %v333, 4294901760
        %v2698 = vsub.f32 %v333, %v2697
        %2699 = vmatpush2.msra.mxu0 %v2698
        %2700 = vmatprep.subr.mxu0 0.0
        %v2701 = vand.u32 %v332, 4294901760
        %v2702 = vsub.f32 %v332, %v2701
        %2703 = vmatpush2.msra.mxu0 %v2702
        %2704 = vmatprep.subr.mxu0 0.0
        %v2705 = vand.u32 %v331, 4294901760
        %v2706 = vsub.f32 %v331, %v2705
        %2707 = vmatpush2.msra.mxu0 %v2706
        %2708 = vmatprep.subr.mxu0 0.0
        %v2709 = vand.u32 %v330, 4294901760
        %v2710 = vsub.f32 %v330, %v2709
        %2711 = vmatpush2.msra.mxu0 %v2710
        %2712 = vmatprep.subr.mxu0 0.0
        %v2713 = vand.u32 %v329, 4294901760
        %v2714 = vsub.f32 %v329, %v2713
        %2715 = vmatpush2.msra.mxu0 %v2714
        %2716 = vmatprep.subr.mxu0 0.0
        %v2717 = vand.u32 %v328, 4294901760
        %v2718 = vsub.f32 %v328, %v2717
        %2719 = vmatpush2.msra.mxu0 %v2718
        %2720 = vmatprep.subr.mxu0 0.0
        %v2721 = vand.u32 %v327, 4294901760
        %v2722 = vsub.f32 %v327, %v2721
        %2723 = vmatpush2.msra.mxu0 %v2722
        %2724 = vmatprep.subr.mxu0 0.0
        %v2725 = vand.u32 %v326, 4294901760
        %v2726 = vsub.f32 %v326, %v2725
        %2727 = vmatpush2.msra.mxu0 %v2726
        %2728 = vmatprep.subr.mxu0 0.0
        %v2729 = vand.u32 %v325, 4294901760
        %v2730 = vsub.f32 %v325, %v2729
        %2731 = vmatpush2.msra.mxu0 %v2730
        %2732 = vmatprep.subr.mxu0 0.0
        %v2733 = vand.u32 %v324, 4294901760
        %v2734 = vsub.f32 %v324, %v2733
        %2735 = vmatpush2.msra.mxu0 %v2734
        %v2736 = vand.u32 %v229, 4294901760
        %v2737 = vsub.f32 %v229, %v2736
        %2738 = vmatprep.mubr.f32.mxu0 %v2737
        %v2739 = vand.u32 %v228, 4294901760
        %v2740 = vsub.f32 %v228, %v2739
        %2741 = vmatmul.mubr.f32.gmra.mxu0 %v2740
        %v2742 = vpop.f32.mrf.mxu0
        %v2743 = vadd.f32 %v2598, %v2742
        %v2744 = vpop.f32.mrf.mxu0
        %v2745 = vand.u32 %v239, 4294901760
        %v2746 = vsub.f32 %v239, %v2745
        %2747 = vmatprep.mubr.f32.mxu0 %v2746
        %v2748 = vand.u32 %v238, 4294901760
        %v2749 = vsub.f32 %v238, %v2748
        %2750 = vmatmul.mubr.f32.gmra.mxu0 %v2749
        %v2751 = vpop.f32.mrf.mxu0
        %v2752 = vadd.f32 %v2605, %v2751
        %v2753 = vpop.f32.mrf.mxu0
        %2754 = vdwg.mxu0
        %2755 = vmatprep.subr.mxu0 0.0
        %v2756 = vand.u32 %v323, 4294901760
        %2757 = vmatpush1.msra.mxu0 %v2756
        %2758 = vmatprep.subr.mxu0 0.0
        %v2759 = vand.u32 %v322, 4294901760
        %2760 = vmatpush1.msra.mxu0 %v2759
        %2761 = vmatprep.subr.mxu0 0.0
        %v2762 = vand.u32 %v321, 4294901760
        %2763 = vmatpush1.msra.mxu0 %v2762
        %2764 = vmatprep.subr.mxu0 0.0
        %v2765 = vand.u32 %v320, 4294901760
        %2766 = vmatpush1.msra.mxu0 %v2765
        %2767 = vmatprep.subr.mxu0 0.0
        %v2768 = vand.u32 %v319, 4294901760
        %2769 = vmatpush1.msra.mxu0 %v2768
        %2770 = vmatprep.subr.mxu0 0.0
        %v2771 = vand.u32 %v318, 4294901760
        %2772 = vmatpush1.msra.mxu0 %v2771
        %2773 = vmatprep.subr.mxu0 0.0
        %v2774 = vand.u32 %v317, 4294901760
        %2775 = vmatpush1.msra.mxu0 %v2774
        %2776 = vmatprep.subr.mxu0 0.0
        %v2777 = vand.u32 %v316, 4294901760
        %2778 = vmatpush1.msra.mxu0 %v2777
        %2779 = vmatprep.subr.mxu0 0.0
        %v2780 = vand.u32 %v315, 4294901760
        %2781 = vmatpush1.msra.mxu0 %v2780
        %2782 = vmatprep.subr.mxu0 0.0
        %v2783 = vand.u32 %v314, 4294901760
        %2784 = vmatpush1.msra.mxu0 %v2783
        %2785 = vmatprep.subr.mxu0 0.0
        %v2786 = vand.u32 %v313, 4294901760
        %2787 = vmatpush1.msra.mxu0 %v2786
        %2788 = vmatprep.subr.mxu0 0.0
        %v2789 = vand.u32 %v312, 4294901760
        %2790 = vmatpush1.msra.mxu0 %v2789
        %2791 = vmatprep.subr.mxu0 0.0
        %v2792 = vand.u32 %v311, 4294901760
        %2793 = vmatpush1.msra.mxu0 %v2792
        %2794 = vmatprep.subr.mxu0 0.0
        %v2795 = vand.u32 %v310, 4294901760
        %2796 = vmatpush1.msra.mxu0 %v2795
        %2797 = vmatprep.subr.mxu0 0.0
        %v2798 = vand.u32 %v309, 4294901760
        %2799 = vmatpush1.msra.mxu0 %v2798
        %2800 = vmatprep.subr.mxu0 0.0
        %v2801 = vand.u32 %v308, 4294901760
        %2802 = vmatpush1.msra.mxu0 %v2801
        %2803 = vmatprep.subr.mxu0 0.0
        %v2804 = vand.u32 %v339, 4294901760
        %2805 = vmatpush2.msra.mxu0 %v2804
        %2806 = vmatprep.subr.mxu0 0.0
        %v2807 = vand.u32 %v338, 4294901760
        %2808 = vmatpush2.msra.mxu0 %v2807
        %2809 = vmatprep.subr.mxu0 0.0
        %v2810 = vand.u32 %v337, 4294901760
        %2811 = vmatpush2.msra.mxu0 %v2810
        %2812 = vmatprep.subr.mxu0 0.0
        %v2813 = vand.u32 %v336, 4294901760
        %2814 = vmatpush2.msra.mxu0 %v2813
        %2815 = vmatprep.subr.mxu0 0.0
        %v2816 = vand.u32 %v335, 4294901760
        %2817 = vmatpush2.msra.mxu0 %v2816
        %2818 = vmatprep.subr.mxu0 0.0
        %v2819 = vand.u32 %v334, 4294901760
        %2820 = vmatpush2.msra.mxu0 %v2819
        %2821 = vmatprep.subr.mxu0 0.0
        %v2822 = vand.u32 %v333, 4294901760
        %2823 = vmatpush2.msra.mxu0 %v2822
        %2824 = vmatprep.subr.mxu0 0.0
        %v2825 = vand.u32 %v332, 4294901760
        %2826 = vmatpush2.msra.mxu0 %v2825
        %2827 = vmatprep.subr.mxu0 0.0
        %v2828 = vand.u32 %v331, 4294901760
        %2829 = vmatpush2.msra.mxu0 %v2828
        %2830 = vmatprep.subr.mxu0 0.0
        %v2831 = vand.u32 %v330, 4294901760
        %2832 = vmatpush2.msra.mxu0 %v2831
        %2833 = vmatprep.subr.mxu0 0.0
        %v2834 = vand.u32 %v329, 4294901760
        %2835 = vmatpush2.msra.mxu0 %v2834
        %2836 = vmatprep.subr.mxu0 0.0
        %v2837 = vand.u32 %v328, 4294901760
        %2838 = vmatpush2.msra.mxu0 %v2837
        %2839 = vmatprep.subr.mxu0 0.0
        %v2840 = vand.u32 %v327, 4294901760
        %2841 = vmatpush2.msra.mxu0 %v2840
        %2842 = vmatprep.subr.mxu0 0.0
        %v2843 = vand.u32 %v326, 4294901760
        %2844 = vmatpush2.msra.mxu0 %v2843
        %2845 = vmatprep.subr.mxu0 0.0
        %v2846 = vand.u32 %v325, 4294901760
        %2847 = vmatpush2.msra.mxu0 %v2846
        %2848 = vmatprep.subr.mxu0 0.0
        %v2849 = vand.u32 %v324, 4294901760
        %2850 = vmatpush2.msra.mxu0 %v2849
        %v2851 = vand.u32 %v229, 4294901760
        %v2852 = vsub.f32 %v229, %v2851
        %v2853 = vand.u32 %v2852, 4294901760
        %2854 = vmatprep.mubr.f32.mxu0 %v2853
        %v2855 = vand.u32 %v228, 4294901760
        %v2856 = vsub.f32 %v228, %v2855
        %v2857 = vand.u32 %v2856, 4294901760
        %2858 = vmatmul.mubr.f32.gmra.mxu0 %v2857
        %v2859 = vpop.f32.mrf.mxu0
        %v2860 = vadd.f32 %v2743, %v2859
        %v2861 = vpop.f32.mrf.mxu0
        %v2862 = vand.u32 %v239, 4294901760
        %v2863 = vsub.f32 %v239, %v2862
        %v2864 = vand.u32 %v2863, 4294901760
        %2865 = vmatprep.mubr.f32.mxu0 %v2864
        %v2866 = vand.u32 %v238, 4294901760
        %v2867 = vsub.f32 %v238, %v2866
        %v2868 = vand.u32 %v2867, 4294901760
        %2869 = vmatmul.mubr.f32.gmra.mxu0 %v2868
        %v2870 = vpop.f32.mrf.mxu0
        %v2871 = vadd.f32 %v2752, %v2870
        %v2872 = vpop.f32.mrf.mxu0
        %2873 = vdwg.mxu0
        %2874 = vmatprep.subr.mxu0 0.0
        %v2875 = vand.u32 %v323, 4294901760
        %v2876 = vsub.f32 %v323, %v2875
        %v2877 = vand.u32 %v2876, 4294901760
        %2878 = vmatpush1.msra.mxu0 %v2877
        %2879 = vmatprep.subr.mxu0 0.0
        %v2880 = vand.u32 %v322, 4294901760
        %v2881 = vsub.f32 %v322, %v2880
        %v2882 = vand.u32 %v2881, 4294901760
        %2883 = vmatpush1.msra.mxu0 %v2882
        %2884 = vmatprep.subr.mxu0 0.0
        %v2885 = vand.u32 %v321, 4294901760
        %v2886 = vsub.f32 %v321, %v2885
        %v2887 = vand.u32 %v2886, 4294901760
        %2888 = vmatpush1.msra.mxu0 %v2887
        %2889 = vmatprep.subr.mxu0 0.0
        %v2890 = vand.u32 %v320, 4294901760
        %v2891 = vsub.f32 %v320, %v2890
        %v2892 = vand.u32 %v2891, 4294901760
        %2893 = vmatpush1.msra.mxu0 %v2892
        %2894 = vmatprep.subr.mxu0 0.0
        %v2895 = vand.u32 %v319, 4294901760
        %v2896 = vsub.f32 %v319, %v2895
        %v2897 = vand.u32 %v2896, 4294901760
        %2898 = vmatpush1.msra.mxu0 %v2897
        %2899 = vmatprep.subr.mxu0 0.0
        %v2900 = vand.u32 %v318, 4294901760
        %v2901 = vsub.f32 %v318, %v2900
        %v2902 = vand.u32 %v2901, 4294901760
        %2903 = vmatpush1.msra.mxu0 %v2902
        %2904 = vmatprep.subr.mxu0 0.0
        %v2905 = vand.u32 %v317, 4294901760
        %v2906 = vsub.f32 %v317, %v2905
        %v2907 = vand.u32 %v2906, 4294901760
        %2908 = vmatpush1.msra.mxu0 %v2907
        %2909 = vmatprep.subr.mxu0 0.0
        %v2910 = vand.u32 %v316, 4294901760
        %v2911 = vsub.f32 %v316, %v2910
        %v2912 = vand.u32 %v2911, 4294901760
        %2913 = vmatpush1.msra.mxu0 %v2912
        %2914 = vmatprep.subr.mxu0 0.0
        %v2915 = vand.u32 %v315, 4294901760
        %v2916 = vsub.f32 %v315, %v2915
        %v2917 = vand.u32 %v2916, 4294901760
        %2918 = vmatpush1.msra.mxu0 %v2917
        %2919 = vmatprep.subr.mxu0 0.0
        %v2920 = vand.u32 %v314, 4294901760
        %v2921 = vsub.f32 %v314, %v2920
        %v2922 = vand.u32 %v2921, 4294901760
        %2923 = vmatpush1.msra.mxu0 %v2922
        %2924 = vmatprep.subr.mxu0 0.0
        %v2925 = vand.u32 %v313, 4294901760
        %v2926 = vsub.f32 %v313, %v2925
        %v2927 = vand.u32 %v2926, 4294901760
        %2928 = vmatpush1.msra.mxu0 %v2927
        %2929 = vmatprep.subr.mxu0 0.0
        %v2930 = vand.u32 %v312, 4294901760
        %v2931 = vsub.f32 %v312, %v2930
        %v2932 = vand.u32 %v2931, 4294901760
        %2933 = vmatpush1.msra.mxu0 %v2932
        %2934 = vmatprep.subr.mxu0 0.0
        %v2935 = vand.u32 %v311, 4294901760
        %v2936 = vsub.f32 %v311, %v2935
        %v2937 = vand.u32 %v2936, 4294901760
        %2938 = vmatpush1.msra.mxu0 %v2937
        %2939 = vmatprep.subr.mxu0 0.0
        %v2940 = vand.u32 %v310, 4294901760
        %v2941 = vsub.f32 %v310, %v2940
        %v2942 = vand.u32 %v2941, 4294901760
        %2943 = vmatpush1.msra.mxu0 %v2942
        %2944 = vmatprep.subr.mxu0 0.0
        %v2945 = vand.u32 %v309, 4294901760
        %v2946 = vsub.f32 %v309, %v2945
        %v2947 = vand.u32 %v2946, 4294901760
        %2948 = vmatpush1.msra.mxu0 %v2947
        %2949 = vmatprep.subr.mxu0 0.0
        %v2950 = vand.u32 %v308, 4294901760
        %v2951 = vsub.f32 %v308, %v2950
        %v2952 = vand.u32 %v2951, 4294901760
        %2953 = vmatpush1.msra.mxu0 %v2952
        %2954 = vmatprep.subr.mxu0 0.0
        %v2955 = vand.u32 %v339, 4294901760
        %v2956 = vsub.f32 %v339, %v2955
        %v2957 = vand.u32 %v2956, 4294901760
        %2958 = vmatpush2.msra.mxu0 %v2957
        %2959 = vmatprep.subr.mxu0 0.0
        %v2960 = vand.u32 %v338, 4294901760
        %v2961 = vsub.f32 %v338, %v2960
        %v2962 = vand.u32 %v2961, 4294901760
        %2963 = vmatpush2.msra.mxu0 %v2962
        %2964 = vmatprep.subr.mxu0 0.0
        %v2965 = vand.u32 %v337, 4294901760
        %v2966 = vsub.f32 %v337, %v2965
        %v2967 = vand.u32 %v2966, 4294901760
        %2968 = vmatpush2.msra.mxu0 %v2967
        %2969 = vmatprep.subr.mxu0 0.0
        %v2970 = vand.u32 %v336, 4294901760
        %v2971 = vsub.f32 %v336, %v2970
        %v2972 = vand.u32 %v2971, 4294901760
        %2973 = vmatpush2.msra.mxu0 %v2972
        %2974 = vmatprep.subr.mxu0 0.0
        %v2975 = vand.u32 %v335, 4294901760
        %v2976 = vsub.f32 %v335, %v2975
        %v2977 = vand.u32 %v2976, 4294901760
        %2978 = vmatpush2.msra.mxu0 %v2977
        %2979 = vmatprep.subr.mxu0 0.0
        %v2980 = vand.u32 %v334, 4294901760
        %v2981 = vsub.f32 %v334, %v2980
        %v2982 = vand.u32 %v2981, 4294901760
        %2983 = vmatpush2.msra.mxu0 %v2982
        %2984 = vmatprep.subr.mxu0 0.0
        %v2985 = vand.u32 %v333, 4294901760
        %v2986 = vsub.f32 %v333, %v2985
        %v2987 = vand.u32 %v2986, 4294901760
        %2988 = vmatpush2.msra.mxu0 %v2987
        %2989 = vmatprep.subr.mxu0 0.0
        %v2990 = vand.u32 %v332, 4294901760
        %v2991 = vsub.f32 %v332, %v2990
        %v2992 = vand.u32 %v2991, 4294901760
        %2993 = vmatpush2.msra.mxu0 %v2992
        %2994 = vmatprep.subr.mxu0 0.0
        %v2995 = vand.u32 %v331, 4294901760
        %v2996 = vsub.f32 %v331, %v2995
        %v2997 = vand.u32 %v2996, 4294901760
        %2998 = vmatpush2.msra.mxu0 %v2997
        %2999 = vmatprep.subr.mxu0 0.0
        %v3000 = vand.u32 %v330, 4294901760
        %v3001 = vsub.f32 %v330, %v3000
        %v3002 = vand.u32 %v3001, 4294901760
        %3003 = vmatpush2.msra.mxu0 %v3002
        %3004 = vmatprep.subr.mxu0 0.0
        %v3005 = vand.u32 %v329, 4294901760
        %v3006 = vsub.f32 %v329, %v3005
        %v3007 = vand.u32 %v3006, 4294901760
        %3008 = vmatpush2.msra.mxu0 %v3007
        %3009 = vmatprep.subr.mxu0 0.0
        %v3010 = vand.u32 %v328, 4294901760
        %v3011 = vsub.f32 %v328, %v3010
        %v3012 = vand.u32 %v3011, 4294901760
        %3013 = vmatpush2.msra.mxu0 %v3012
        %3014 = vmatprep.subr.mxu0 0.0
        %v3015 = vand.u32 %v327, 4294901760
        %v3016 = vsub.f32 %v327, %v3015
        %v3017 = vand.u32 %v3016, 4294901760
        %3018 = vmatpush2.msra.mxu0 %v3017
        %3019 = vmatprep.subr.mxu0 0.0
        %v3020 = vand.u32 %v326, 4294901760
        %v3021 = vsub.f32 %v326, %v3020
        %v3022 = vand.u32 %v3021, 4294901760
        %3023 = vmatpush2.msra.mxu0 %v3022
        %3024 = vmatprep.subr.mxu0 0.0
        %v3025 = vand.u32 %v325, 4294901760
        %v3026 = vsub.f32 %v325, %v3025
        %v3027 = vand.u32 %v3026, 4294901760
        %3028 = vmatpush2.msra.mxu0 %v3027
        %3029 = vmatprep.subr.mxu0 0.0
        %v3030 = vand.u32 %v324, 4294901760
        %v3031 = vsub.f32 %v324, %v3030
        %v3032 = vand.u32 %v3031, 4294901760
        %3033 = vmatpush2.msra.mxu0 %v3032
        %v3034 = vand.u32 %v229, 4294901760
        %3035 = vmatprep.mubr.f32.mxu0 %v3034
        %v3036 = vand.u32 %v228, 4294901760
        %3037 = vmatmul.mubr.f32.gmra.mxu0 %v3036
        %v3038 = vpop.f32.mrf.mxu0
        %v3039 = vadd.f32 %v2860, %v3038
        %v3040 = vpop.f32.mrf.mxu0
        %v3041 = vand.u32 %v239, 4294901760
        %3042 = vmatprep.mubr.f32.mxu0 %v3041
        %v3043 = vand.u32 %v238, 4294901760
        %3044 = vmatmul.mubr.f32.gmra.mxu0 %v3043
        %v3045 = vpop.f32.mrf.mxu0
        %v3046 = vadd.f32 %v2871, %v3045
        %v3047 = vpop.f32.mrf.mxu0
        %3048 = vdwg.mxu0
        %3049 = vmatprep.subr.mxu0 0.0
        %v3050 = vand.u32 %v323, 4294901760
        %3051 = vmatpush1.msra.mxu0 %v3050
        %3052 = vmatprep.subr.mxu0 0.0
        %v3053 = vand.u32 %v322, 4294901760
        %3054 = vmatpush1.msra.mxu0 %v3053
        %3055 = vmatprep.subr.mxu0 0.0
        %v3056 = vand.u32 %v321, 4294901760
        %3057 = vmatpush1.msra.mxu0 %v3056
        %3058 = vmatprep.subr.mxu0 0.0
        %v3059 = vand.u32 %v320, 4294901760
        %3060 = vmatpush1.msra.mxu0 %v3059
        %3061 = vmatprep.subr.mxu0 0.0
        %v3062 = vand.u32 %v319, 4294901760
        %3063 = vmatpush1.msra.mxu0 %v3062
        %3064 = vmatprep.subr.mxu0 0.0
        %v3065 = vand.u32 %v318, 4294901760
        %3066 = vmatpush1.msra.mxu0 %v3065
        %3067 = vmatprep.subr.mxu0 0.0
        %v3068 = vand.u32 %v317, 4294901760
        %3069 = vmatpush1.msra.mxu0 %v3068
        %3070 = vmatprep.subr.mxu0 0.0
        %v3071 = vand.u32 %v316, 4294901760
        %3072 = vmatpush1.msra.mxu0 %v3071
        %3073 = vmatprep.subr.mxu0 0.0
        %v3074 = vand.u32 %v315, 4294901760
        %3075 = vmatpush1.msra.mxu0 %v3074
        %3076 = vmatprep.subr.mxu0 0.0
        %v3077 = vand.u32 %v314, 4294901760
        %3078 = vmatpush1.msra.mxu0 %v3077
        %3079 = vmatprep.subr.mxu0 0.0
        %v3080 = vand.u32 %v313, 4294901760
        %3081 = vmatpush1.msra.mxu0 %v3080
        %3082 = vmatprep.subr.mxu0 0.0
        %v3083 = vand.u32 %v312, 4294901760
        %3084 = vmatpush1.msra.mxu0 %v3083
        %3085 = vmatprep.subr.mxu0 0.0
        %v3086 = vand.u32 %v311, 4294901760
        %3087 = vmatpush1.msra.mxu0 %v3086
        %3088 = vmatprep.subr.mxu0 0.0
        %v3089 = vand.u32 %v310, 4294901760
        %3090 = vmatpush1.msra.mxu0 %v3089
        %3091 = vmatprep.subr.mxu0 0.0
        %v3092 = vand.u32 %v309, 4294901760
        %3093 = vmatpush1.msra.mxu0 %v3092
        %3094 = vmatprep.subr.mxu0 0.0
        %v3095 = vand.u32 %v308, 4294901760
        %3096 = vmatpush1.msra.mxu0 %v3095
        %3097 = vmatprep.subr.mxu0 0.0
        %v3098 = vand.u32 %v339, 4294901760
        %3099 = vmatpush2.msra.mxu0 %v3098
        %3100 = vmatprep.subr.mxu0 0.0
        %v3101 = vand.u32 %v338, 4294901760
        %3102 = vmatpush2.msra.mxu0 %v3101
        %3103 = vmatprep.subr.mxu0 0.0
        %v3104 = vand.u32 %v337, 4294901760
        %3105 = vmatpush2.msra.mxu0 %v3104
        %3106 = vmatprep.subr.mxu0 0.0
        %v3107 = vand.u32 %v336, 4294901760
        %3108 = vmatpush2.msra.mxu0 %v3107
        %3109 = vmatprep.subr.mxu0 0.0
        %v3110 = vand.u32 %v335, 4294901760
        %3111 = vmatpush2.msra.mxu0 %v3110
        %3112 = vmatprep.subr.mxu0 0.0
        %v3113 = vand.u32 %v334, 4294901760
        %3114 = vmatpush2.msra.mxu0 %v3113
        %3115 = vmatprep.subr.mxu0 0.0
        %v3116 = vand.u32 %v333, 4294901760
        %3117 = vmatpush2.msra.mxu0 %v3116
        %3118 = vmatprep.subr.mxu0 0.0
        %v3119 = vand.u32 %v332, 4294901760
        %3120 = vmatpush2.msra.mxu0 %v3119
        %3121 = vmatprep.subr.mxu0 0.0
        %v3122 = vand.u32 %v331, 4294901760
        %3123 = vmatpush2.msra.mxu0 %v3122
        %3124 = vmatprep.subr.mxu0 0.0
        %v3125 = vand.u32 %v330, 4294901760
        %3126 = vmatpush2.msra.mxu0 %v3125
        %3127 = vmatprep.subr.mxu0 0.0
        %v3128 = vand.u32 %v329, 4294901760
        %3129 = vmatpush2.msra.mxu0 %v3128
        %3130 = vmatprep.subr.mxu0 0.0
        %v3131 = vand.u32 %v328, 4294901760
        %3132 = vmatpush2.msra.mxu0 %v3131
        %3133 = vmatprep.subr.mxu0 0.0
        %v3134 = vand.u32 %v327, 4294901760
        %3135 = vmatpush2.msra.mxu0 %v3134
        %3136 = vmatprep.subr.mxu0 0.0
        %v3137 = vand.u32 %v326, 4294901760
        %3138 = vmatpush2.msra.mxu0 %v3137
        %3139 = vmatprep.subr.mxu0 0.0
        %v3140 = vand.u32 %v325, 4294901760
        %3141 = vmatpush2.msra.mxu0 %v3140
        %3142 = vmatprep.subr.mxu0 0.0
        %v3143 = vand.u32 %v324, 4294901760
        %3144 = vmatpush2.msra.mxu0 %v3143
        %v3145 = vand.u32 %v229, 4294901760
        %3146 = vmatprep.mubr.f32.mxu0 %v3145
        %v3147 = vand.u32 %v228, 4294901760
        %3148 = vmatmul.mubr.f32.gmra.mxu0 %v3147
        %v3149 = vpop.f32.mrf.mxu0
        %v3150 = vadd.f32 %v3039, %v3149
        %v3151 = vpop.f32.mrf.mxu0
        %v3152 = vand.u32 %v239, 4294901760
        %3153 = vmatprep.mubr.f32.mxu0 %v3152
        %v3154 = vand.u32 %v238, 4294901760
        %3155 = vmatmul.mubr.f32.gmra.mxu0 %v3154
        %v3156 = vpop.f32.mrf.mxu0
        %v3157 = vadd.f32 %v3046, %v3156
        %v3158 = vpop.f32.mrf.mxu0
        %3159 = vdwg.mxu0
        %3160 = vmatprep.subr.mxu0 0.0
        %v3161 = vand.u32 %v355, 4294901760
        %3162 = vmatpush1.msra.mxu0 %v3161
        %3163 = vmatprep.subr.mxu0 0.0
        %v3164 = vand.u32 %v354, 4294901760
        %3165 = vmatpush1.msra.mxu0 %v3164
        %3166 = vmatprep.subr.mxu0 0.0
        %v3167 = vand.u32 %v353, 4294901760
        %3168 = vmatpush1.msra.mxu0 %v3167
        %3169 = vmatprep.subr.mxu0 0.0
        %v3170 = vand.u32 %v352, 4294901760
        %3171 = vmatpush1.msra.mxu0 %v3170
        %3172 = vmatprep.subr.mxu0 0.0
        %v3173 = vand.u32 %v351, 4294901760
        %3174 = vmatpush1.msra.mxu0 %v3173
        %3175 = vmatprep.subr.mxu0 0.0
        %v3176 = vand.u32 %v350, 4294901760
        %3177 = vmatpush1.msra.mxu0 %v3176
        %3178 = vmatprep.subr.mxu0 0.0
        %v3179 = vand.u32 %v349, 4294901760
        %3180 = vmatpush1.msra.mxu0 %v3179
        %3181 = vmatprep.subr.mxu0 0.0
        %v3182 = vand.u32 %v348, 4294901760
        %3183 = vmatpush1.msra.mxu0 %v3182
        %3184 = vmatprep.subr.mxu0 0.0
        %v3185 = vand.u32 %v347, 4294901760
        %3186 = vmatpush1.msra.mxu0 %v3185
        %3187 = vmatprep.subr.mxu0 0.0
        %v3188 = vand.u32 %v346, 4294901760
        %3189 = vmatpush1.msra.mxu0 %v3188
        %3190 = vmatprep.subr.mxu0 0.0
        %v3191 = vand.u32 %v345, 4294901760
        %3192 = vmatpush1.msra.mxu0 %v3191
        %3193 = vmatprep.subr.mxu0 0.0
        %v3194 = vand.u32 %v344, 4294901760
        %3195 = vmatpush1.msra.mxu0 %v3194
        %3196 = vmatprep.subr.mxu0 0.0
        %v3197 = vand.u32 %v343, 4294901760
        %3198 = vmatpush1.msra.mxu0 %v3197
        %3199 = vmatprep.subr.mxu0 0.0
        %v3200 = vand.u32 %v342, 4294901760
        %3201 = vmatpush1.msra.mxu0 %v3200
        %3202 = vmatprep.subr.mxu0 0.0
        %v3203 = vand.u32 %v341, 4294901760
        %3204 = vmatpush1.msra.mxu0 %v3203
        %3205 = vmatprep.subr.mxu0 0.0
        %v3206 = vand.u32 %v340, 4294901760
        %3207 = vmatpush1.msra.mxu0 %v3206
        %3208 = vmatprep.subr.mxu0 0.0
        %v3209 = vand.u32 %v371, 4294901760
        %3210 = vmatpush2.msra.mxu0 %v3209
        %3211 = vmatprep.subr.mxu0 0.0
        %v3212 = vand.u32 %v370, 4294901760
        %3213 = vmatpush2.msra.mxu0 %v3212
        %3214 = vmatprep.subr.mxu0 0.0
        %v3215 = vand.u32 %v369, 4294901760
        %3216 = vmatpush2.msra.mxu0 %v3215
        %3217 = vmatprep.subr.mxu0 0.0
        %v3218 = vand.u32 %v368, 4294901760
        %3219 = vmatpush2.msra.mxu0 %v3218
        %3220 = vmatprep.subr.mxu0 0.0
        %v3221 = vand.u32 %v367, 4294901760
        %3222 = vmatpush2.msra.mxu0 %v3221
        %3223 = vmatprep.subr.mxu0 0.0
        %v3224 = vand.u32 %v366, 4294901760
        %3225 = vmatpush2.msra.mxu0 %v3224
        %3226 = vmatprep.subr.mxu0 0.0
        %v3227 = vand.u32 %v365, 4294901760
        %3228 = vmatpush2.msra.mxu0 %v3227
        %3229 = vmatprep.subr.mxu0 0.0
        %v3230 = vand.u32 %v364, 4294901760
        %3231 = vmatpush2.msra.mxu0 %v3230
        %3232 = vmatprep.subr.mxu0 0.0
        %v3233 = vand.u32 %v363, 4294901760
        %3234 = vmatpush2.msra.mxu0 %v3233
        %3235 = vmatprep.subr.mxu0 0.0
        %v3236 = vand.u32 %v362, 4294901760
        %3237 = vmatpush2.msra.mxu0 %v3236
        %3238 = vmatprep.subr.mxu0 0.0
        %v3239 = vand.u32 %v361, 4294901760
        %3240 = vmatpush2.msra.mxu0 %v3239
        %3241 = vmatprep.subr.mxu0 0.0
        %v3242 = vand.u32 %v360, 4294901760
        %3243 = vmatpush2.msra.mxu0 %v3242
        %3244 = vmatprep.subr.mxu0 0.0
        %v3245 = vand.u32 %v359, 4294901760
        %3246 = vmatpush2.msra.mxu0 %v3245
        %3247 = vmatprep.subr.mxu0 0.0
        %v3248 = vand.u32 %v358, 4294901760
        %3249 = vmatpush2.msra.mxu0 %v3248
        %3250 = vmatprep.subr.mxu0 0.0
        %v3251 = vand.u32 %v357, 4294901760
        %3252 = vmatpush2.msra.mxu0 %v3251
        %3253 = vmatprep.subr.mxu0 0.0
        %v3254 = vand.u32 %v356, 4294901760
        %3255 = vmatpush2.msra.mxu0 %v3254
        %v3256 = vand.u32 %v231, 4294901760
        %v3257 = vsub.f32 %v231, %v3256
        %v3258 = vand.u32 %v3257, 4294901760
        %v3259 = vsub.f32 %v3257, %v3258
        %v3260 = vand.u32 %v3259, 4294901760
        %3261 = vmatprep.mubr.f32.mxu0 %v3260
        %v3262 = vand.u32 %v230, 4294901760
        %v3263 = vsub.f32 %v230, %v3262
        %v3264 = vand.u32 %v3263, 4294901760
        %v3265 = vsub.f32 %v3263, %v3264
        %v3266 = vand.u32 %v3265, 4294901760
        %3267 = vmatmul.mubr.f32.gmra.mxu0 %v3266
        %v3268 = vpop.f32.mrf.mxu0
        %v3269 = vadd.f32 %v3150, %v3268
        %v3270 = vpop.f32.mrf.mxu0
        %v3271 = vand.u32 %v241, 4294901760
        %v3272 = vsub.f32 %v241, %v3271
        %v3273 = vand.u32 %v3272, 4294901760
        %v3274 = vsub.f32 %v3272, %v3273
        %v3275 = vand.u32 %v3274, 4294901760
        %3276 = vmatprep.mubr.f32.mxu0 %v3275
        %v3277 = vand.u32 %v240, 4294901760
        %v3278 = vsub.f32 %v240, %v3277
        %v3279 = vand.u32 %v3278, 4294901760
        %v3280 = vsub.f32 %v3278, %v3279
        %v3281 = vand.u32 %v3280, 4294901760
        %3282 = vmatmul.mubr.f32.gmra.mxu0 %v3281
        %v3283 = vpop.f32.mrf.mxu0
        %v3284 = vadd.f32 %v3157, %v3283
        %v3285 = vpop.f32.mrf.mxu0
        %3286 = vdwg.mxu0
        %3287 = vmatprep.subr.mxu0 0.0
        %v3288 = vand.u32 %v355, 4294901760
        %v3289 = vsub.f32 %v355, %v3288
        %v3290 = vand.u32 %v3289, 4294901760
        %v3291 = vsub.f32 %v3289, %v3290
        %v3292 = vand.u32 %v3291, 4294901760
        %3293 = vmatpush1.msra.mxu0 %v3292
        %3294 = vmatprep.subr.mxu0 0.0
        %v3295 = vand.u32 %v354, 4294901760
        %v3296 = vsub.f32 %v354, %v3295
        %v3297 = vand.u32 %v3296, 4294901760
        %v3298 = vsub.f32 %v3296, %v3297
        %v3299 = vand.u32 %v3298, 4294901760
        %3300 = vmatpush1.msra.mxu0 %v3299
        %3301 = vmatprep.subr.mxu0 0.0
        %v3302 = vand.u32 %v353, 4294901760
        %v3303 = vsub.f32 %v353, %v3302
        %v3304 = vand.u32 %v3303, 4294901760
        %v3305 = vsub.f32 %v3303, %v3304
        %v3306 = vand.u32 %v3305, 4294901760
        %3307 = vmatpush1.msra.mxu0 %v3306
        %3308 = vmatprep.subr.mxu0 0.0
        %v3309 = vand.u32 %v352, 4294901760
        %v3310 = vsub.f32 %v352, %v3309
        %v3311 = vand.u32 %v3310, 4294901760
        %v3312 = vsub.f32 %v3310, %v3311
        %v3313 = vand.u32 %v3312, 4294901760
        %3314 = vmatpush1.msra.mxu0 %v3313
        %3315 = vmatprep.subr.mxu0 0.0
        %v3316 = vand.u32 %v351, 4294901760
        %v3317 = vsub.f32 %v351, %v3316
        %v3318 = vand.u32 %v3317, 4294901760
        %v3319 = vsub.f32 %v3317, %v3318
        %v3320 = vand.u32 %v3319, 4294901760
        %3321 = vmatpush1.msra.mxu0 %v3320
        %3322 = vmatprep.subr.mxu0 0.0
        %v3323 = vand.u32 %v350, 4294901760
        %v3324 = vsub.f32 %v350, %v3323
        %v3325 = vand.u32 %v3324, 4294901760
        %v3326 = vsub.f32 %v3324, %v3325
        %v3327 = vand.u32 %v3326, 4294901760
        %3328 = vmatpush1.msra.mxu0 %v3327
        %3329 = vmatprep.subr.mxu0 0.0
        %v3330 = vand.u32 %v349, 4294901760
        %v3331 = vsub.f32 %v349, %v3330
        %v3332 = vand.u32 %v3331, 4294901760
        %v3333 = vsub.f32 %v3331, %v3332
        %v3334 = vand.u32 %v3333, 4294901760
        %3335 = vmatpush1.msra.mxu0 %v3334
        %3336 = vmatprep.subr.mxu0 0.0
        %v3337 = vand.u32 %v348, 4294901760
        %v3338 = vsub.f32 %v348, %v3337
        %v3339 = vand.u32 %v3338, 4294901760
        %v3340 = vsub.f32 %v3338, %v3339
        %v3341 = vand.u32 %v3340, 4294901760
        %3342 = vmatpush1.msra.mxu0 %v3341
        %3343 = vmatprep.subr.mxu0 0.0
        %v3344 = vand.u32 %v347, 4294901760
        %v3345 = vsub.f32 %v347, %v3344
        %v3346 = vand.u32 %v3345, 4294901760
        %v3347 = vsub.f32 %v3345, %v3346
        %v3348 = vand.u32 %v3347, 4294901760
        %3349 = vmatpush1.msra.mxu0 %v3348
        %3350 = vmatprep.subr.mxu0 0.0
        %v3351 = vand.u32 %v346, 4294901760
        %v3352 = vsub.f32 %v346, %v3351
        %v3353 = vand.u32 %v3352, 4294901760
        %v3354 = vsub.f32 %v3352, %v3353
        %v3355 = vand.u32 %v3354, 4294901760
        %3356 = vmatpush1.msra.mxu0 %v3355
        %3357 = vmatprep.subr.mxu0 0.0
        %v3358 = vand.u32 %v345, 4294901760
        %v3359 = vsub.f32 %v345, %v3358
        %v3360 = vand.u32 %v3359, 4294901760
        %v3361 = vsub.f32 %v3359, %v3360
        %v3362 = vand.u32 %v3361, 4294901760
        %3363 = vmatpush1.msra.mxu0 %v3362
        %3364 = vmatprep.subr.mxu0 0.0
        %v3365 = vand.u32 %v344, 4294901760
        %v3366 = vsub.f32 %v344, %v3365
        %v3367 = vand.u32 %v3366, 4294901760
        %v3368 = vsub.f32 %v3366, %v3367
        %v3369 = vand.u32 %v3368, 4294901760
        %3370 = vmatpush1.msra.mxu0 %v3369
        %3371 = vmatprep.subr.mxu0 0.0
        %v3372 = vand.u32 %v343, 4294901760
        %v3373 = vsub.f32 %v343, %v3372
        %v3374 = vand.u32 %v3373, 4294901760
        %v3375 = vsub.f32 %v3373, %v3374
        %v3376 = vand.u32 %v3375, 4294901760
        %3377 = vmatpush1.msra.mxu0 %v3376
        %3378 = vmatprep.subr.mxu0 0.0
        %v3379 = vand.u32 %v342, 4294901760
        %v3380 = vsub.f32 %v342, %v3379
        %v3381 = vand.u32 %v3380, 4294901760
        %v3382 = vsub.f32 %v3380, %v3381
        %v3383 = vand.u32 %v3382, 4294901760
        %3384 = vmatpush1.msra.mxu0 %v3383
        %3385 = vmatprep.subr.mxu0 0.0
        %v3386 = vand.u32 %v341, 4294901760
        %v3387 = vsub.f32 %v341, %v3386
        %v3388 = vand.u32 %v3387, 4294901760
        %v3389 = vsub.f32 %v3387, %v3388
        %v3390 = vand.u32 %v3389, 4294901760
        %3391 = vmatpush1.msra.mxu0 %v3390
        %3392 = vmatprep.subr.mxu0 0.0
        %v3393 = vand.u32 %v340, 4294901760
        %v3394 = vsub.f32 %v340, %v3393
        %v3395 = vand.u32 %v3394, 4294901760
        %v3396 = vsub.f32 %v3394, %v3395
        %v3397 = vand.u32 %v3396, 4294901760
        %3398 = vmatpush1.msra.mxu0 %v3397
        %3399 = vmatprep.subr.mxu0 0.0
        %v3400 = vand.u32 %v371, 4294901760
        %v3401 = vsub.f32 %v371, %v3400
        %v3402 = vand.u32 %v3401, 4294901760
        %v3403 = vsub.f32 %v3401, %v3402
        %v3404 = vand.u32 %v3403, 4294901760
        %3405 = vmatpush2.msra.mxu0 %v3404
        %3406 = vmatprep.subr.mxu0 0.0
        %v3407 = vand.u32 %v370, 4294901760
        %v3408 = vsub.f32 %v370, %v3407
        %v3409 = vand.u32 %v3408, 4294901760
        %v3410 = vsub.f32 %v3408, %v3409
        %v3411 = vand.u32 %v3410, 4294901760
        %3412 = vmatpush2.msra.mxu0 %v3411
        %3413 = vmatprep.subr.mxu0 0.0
        %v3414 = vand.u32 %v369, 4294901760
        %v3415 = vsub.f32 %v369, %v3414
        %v3416 = vand.u32 %v3415, 4294901760
        %v3417 = vsub.f32 %v3415, %v3416
        %v3418 = vand.u32 %v3417, 4294901760
        %3419 = vmatpush2.msra.mxu0 %v3418
        %3420 = vmatprep.subr.mxu0 0.0
        %v3421 = vand.u32 %v368, 4294901760
        %v3422 = vsub.f32 %v368, %v3421
        %v3423 = vand.u32 %v3422, 4294901760
        %v3424 = vsub.f32 %v3422, %v3423
        %v3425 = vand.u32 %v3424, 4294901760
        %3426 = vmatpush2.msra.mxu0 %v3425
        %3427 = vmatprep.subr.mxu0 0.0
        %v3428 = vand.u32 %v367, 4294901760
        %v3429 = vsub.f32 %v367, %v3428
        %v3430 = vand.u32 %v3429, 4294901760
        %v3431 = vsub.f32 %v3429, %v3430
        %v3432 = vand.u32 %v3431, 4294901760
        %3433 = vmatpush2.msra.mxu0 %v3432
        %3434 = vmatprep.subr.mxu0 0.0
        %v3435 = vand.u32 %v366, 4294901760
        %v3436 = vsub.f32 %v366, %v3435
        %v3437 = vand.u32 %v3436, 4294901760
        %v3438 = vsub.f32 %v3436, %v3437
        %v3439 = vand.u32 %v3438, 4294901760
        %3440 = vmatpush2.msra.mxu0 %v3439
        %3441 = vmatprep.subr.mxu0 0.0
        %v3442 = vand.u32 %v365, 4294901760
        %v3443 = vsub.f32 %v365, %v3442
        %v3444 = vand.u32 %v3443, 4294901760
        %v3445 = vsub.f32 %v3443, %v3444
        %v3446 = vand.u32 %v3445, 4294901760
        %3447 = vmatpush2.msra.mxu0 %v3446
        %3448 = vmatprep.subr.mxu0 0.0
        %v3449 = vand.u32 %v364, 4294901760
        %v3450 = vsub.f32 %v364, %v3449
        %v3451 = vand.u32 %v3450, 4294901760
        %v3452 = vsub.f32 %v3450, %v3451
        %v3453 = vand.u32 %v3452, 4294901760
        %3454 = vmatpush2.msra.mxu0 %v3453
        %3455 = vmatprep.subr.mxu0 0.0
        %v3456 = vand.u32 %v363, 4294901760
        %v3457 = vsub.f32 %v363, %v3456
        %v3458 = vand.u32 %v3457, 4294901760
        %v3459 = vsub.f32 %v3457, %v3458
        %v3460 = vand.u32 %v3459, 4294901760
        %3461 = vmatpush2.msra.mxu0 %v3460
        %3462 = vmatprep.subr.mxu0 0.0
        %v3463 = vand.u32 %v362, 4294901760
        %v3464 = vsub.f32 %v362, %v3463
        %v3465 = vand.u32 %v3464, 4294901760
        %v3466 = vsub.f32 %v3464, %v3465
        %v3467 = vand.u32 %v3466, 4294901760
        %3468 = vmatpush2.msra.mxu0 %v3467
        %3469 = vmatprep.subr.mxu0 0.0
        %v3470 = vand.u32 %v361, 4294901760
        %v3471 = vsub.f32 %v361, %v3470
        %v3472 = vand.u32 %v3471, 4294901760
        %v3473 = vsub.f32 %v3471, %v3472
        %v3474 = vand.u32 %v3473, 4294901760
        %3475 = vmatpush2.msra.mxu0 %v3474
        %3476 = vmatprep.subr.mxu0 0.0
        %v3477 = vand.u32 %v360, 4294901760
        %v3478 = vsub.f32 %v360, %v3477
        %v3479 = vand.u32 %v3478, 4294901760
        %v3480 = vsub.f32 %v3478, %v3479
        %v3481 = vand.u32 %v3480, 4294901760
        %3482 = vmatpush2.msra.mxu0 %v3481
        %3483 = vmatprep.subr.mxu0 0.0
        %v3484 = vand.u32 %v359, 4294901760
        %v3485 = vsub.f32 %v359, %v3484
        %v3486 = vand.u32 %v3485, 4294901760
        %v3487 = vsub.f32 %v3485, %v3486
        %v3488 = vand.u32 %v3487, 4294901760
        %3489 = vmatpush2.msra.mxu0 %v3488
        %3490 = vmatprep.subr.mxu0 0.0
        %v3491 = vand.u32 %v358, 4294901760
        %v3492 = vsub.f32 %v358, %v3491
        %v3493 = vand.u32 %v3492, 4294901760
        %v3494 = vsub.f32 %v3492, %v3493
        %v3495 = vand.u32 %v3494, 4294901760
        %3496 = vmatpush2.msra.mxu0 %v3495
        %3497 = vmatprep.subr.mxu0 0.0
        %v3498 = vand.u32 %v357, 4294901760
        %v3499 = vsub.f32 %v357, %v3498
        %v3500 = vand.u32 %v3499, 4294901760
        %v3501 = vsub.f32 %v3499, %v3500
        %v3502 = vand.u32 %v3501, 4294901760
        %3503 = vmatpush2.msra.mxu0 %v3502
        %3504 = vmatprep.subr.mxu0 0.0
        %v3505 = vand.u32 %v356, 4294901760
        %v3506 = vsub.f32 %v356, %v3505
        %v3507 = vand.u32 %v3506, 4294901760
        %v3508 = vsub.f32 %v3506, %v3507
        %v3509 = vand.u32 %v3508, 4294901760
        %3510 = vmatpush2.msra.mxu0 %v3509
        %v3511 = vand.u32 %v231, 4294901760
        %3512 = vmatprep.mubr.f32.mxu0 %v3511
        %v3513 = vand.u32 %v230, 4294901760
        %3514 = vmatmul.mubr.f32.gmra.mxu0 %v3513
        %v3515 = vpop.f32.mrf.mxu0
        %v3516 = vadd.f32 %v3269, %v3515
        %v3517 = vpop.f32.mrf.mxu0
        %v3518 = vand.u32 %v241, 4294901760
        %3519 = vmatprep.mubr.f32.mxu0 %v3518
        %v3520 = vand.u32 %v240, 4294901760
        %3521 = vmatmul.mubr.f32.gmra.mxu0 %v3520
        %v3522 = vpop.f32.mrf.mxu0
        %v3523 = vadd.f32 %v3284, %v3522
        %v3524 = vpop.f32.mrf.mxu0
        %3525 = vdwg.mxu0
        %3526 = vmatprep.subr.mxu0 0.0
        %v3527 = vand.u32 %v355, 4294901760
        %v3528 = vsub.f32 %v355, %v3527
        %3529 = vmatpush1.msra.mxu0 %v3528
        %3530 = vmatprep.subr.mxu0 0.0
        %v3531 = vand.u32 %v354, 4294901760
        %v3532 = vsub.f32 %v354, %v3531
        %3533 = vmatpush1.msra.mxu0 %v3532
        %3534 = vmatprep.subr.mxu0 0.0
        %v3535 = vand.u32 %v353, 4294901760
        %v3536 = vsub.f32 %v353, %v3535
        %3537 = vmatpush1.msra.mxu0 %v3536
        %3538 = vmatprep.subr.mxu0 0.0
        %v3539 = vand.u32 %v352, 4294901760
        %v3540 = vsub.f32 %v352, %v3539
        %3541 = vmatpush1.msra.mxu0 %v3540
        %3542 = vmatprep.subr.mxu0 0.0
        %v3543 = vand.u32 %v351, 4294901760
        %v3544 = vsub.f32 %v351, %v3543
        %3545 = vmatpush1.msra.mxu0 %v3544
        %3546 = vmatprep.subr.mxu0 0.0
        %v3547 = vand.u32 %v350, 4294901760
        %v3548 = vsub.f32 %v350, %v3547
        %3549 = vmatpush1.msra.mxu0 %v3548
        %3550 = vmatprep.subr.mxu0 0.0
        %v3551 = vand.u32 %v349, 4294901760
        %v3552 = vsub.f32 %v349, %v3551
        %3553 = vmatpush1.msra.mxu0 %v3552
        %3554 = vmatprep.subr.mxu0 0.0
        %v3555 = vand.u32 %v348, 4294901760
        %v3556 = vsub.f32 %v348, %v3555
        %3557 = vmatpush1.msra.mxu0 %v3556
        %3558 = vmatprep.subr.mxu0 0.0
        %v3559 = vand.u32 %v347, 4294901760
        %v3560 = vsub.f32 %v347, %v3559
        %3561 = vmatpush1.msra.mxu0 %v3560
        %3562 = vmatprep.subr.mxu0 0.0
        %v3563 = vand.u32 %v346, 4294901760
        %v3564 = vsub.f32 %v346, %v3563
        %3565 = vmatpush1.msra.mxu0 %v3564
        %3566 = vmatprep.subr.mxu0 0.0
        %v3567 = vand.u32 %v345, 4294901760
        %v3568 = vsub.f32 %v345, %v3567
        %3569 = vmatpush1.msra.mxu0 %v3568
        %3570 = vmatprep.subr.mxu0 0.0
        %v3571 = vand.u32 %v344, 4294901760
        %v3572 = vsub.f32 %v344, %v3571
        %3573 = vmatpush1.msra.mxu0 %v3572
        %3574 = vmatprep.subr.mxu0 0.0
        %v3575 = vand.u32 %v343, 4294901760
        %v3576 = vsub.f32 %v343, %v3575
        %3577 = vmatpush1.msra.mxu0 %v3576
        %3578 = vmatprep.subr.mxu0 0.0
        %v3579 = vand.u32 %v342, 4294901760
        %v3580 = vsub.f32 %v342, %v3579
        %3581 = vmatpush1.msra.mxu0 %v3580
        %3582 = vmatprep.subr.mxu0 0.0
        %v3583 = vand.u32 %v341, 4294901760
        %v3584 = vsub.f32 %v341, %v3583
        %3585 = vmatpush1.msra.mxu0 %v3584
        %3586 = vmatprep.subr.mxu0 0.0
        %v3587 = vand.u32 %v340, 4294901760
        %v3588 = vsub.f32 %v340, %v3587
        %3589 = vmatpush1.msra.mxu0 %v3588
        %3590 = vmatprep.subr.mxu0 0.0
        %v3591 = vand.u32 %v371, 4294901760
        %v3592 = vsub.f32 %v371, %v3591
        %3593 = vmatpush2.msra.mxu0 %v3592
        %3594 = vmatprep.subr.mxu0 0.0
        %v3595 = vand.u32 %v370, 4294901760
        %v3596 = vsub.f32 %v370, %v3595
        %3597 = vmatpush2.msra.mxu0 %v3596
        %3598 = vmatprep.subr.mxu0 0.0
        %v3599 = vand.u32 %v369, 4294901760
        %v3600 = vsub.f32 %v369, %v3599
        %3601 = vmatpush2.msra.mxu0 %v3600
        %3602 = vmatprep.subr.mxu0 0.0
        %v3603 = vand.u32 %v368, 4294901760
        %v3604 = vsub.f32 %v368, %v3603
        %3605 = vmatpush2.msra.mxu0 %v3604
        %3606 = vmatprep.subr.mxu0 0.0
        %v3607 = vand.u32 %v367, 4294901760
        %v3608 = vsub.f32 %v367, %v3607
        %3609 = vmatpush2.msra.mxu0 %v3608
        %3610 = vmatprep.subr.mxu0 0.0
        %v3611 = vand.u32 %v366, 4294901760
        %v3612 = vsub.f32 %v366, %v3611
        %3613 = vmatpush2.msra.mxu0 %v3612
        %3614 = vmatprep.subr.mxu0 0.0
        %v3615 = vand.u32 %v365, 4294901760
        %v3616 = vsub.f32 %v365, %v3615
        %3617 = vmatpush2.msra.mxu0 %v3616
        %3618 = vmatprep.subr.mxu0 0.0
        %v3619 = vand.u32 %v364, 4294901760
        %v3620 = vsub.f32 %v364, %v3619
        %3621 = vmatpush2.msra.mxu0 %v3620
        %3622 = vmatprep.subr.mxu0 0.0
        %v3623 = vand.u32 %v363, 4294901760
        %v3624 = vsub.f32 %v363, %v3623
        %3625 = vmatpush2.msra.mxu0 %v3624
        %3626 = vmatprep.subr.mxu0 0.0
        %v3627 = vand.u32 %v362, 4294901760
        %v3628 = vsub.f32 %v362, %v3627
        %3629 = vmatpush2.msra.mxu0 %v3628
        %3630 = vmatprep.subr.mxu0 0.0
        %v3631 = vand.u32 %v361, 4294901760
        %v3632 = vsub.f32 %v361, %v3631
        %3633 = vmatpush2.msra.mxu0 %v3632
        %3634 = vmatprep.subr.mxu0 0.0
        %v3635 = vand.u32 %v360, 4294901760
        %v3636 = vsub.f32 %v360, %v3635
        %3637 = vmatpush2.msra.mxu0 %v3636
        %3638 = vmatprep.subr.mxu0 0.0
        %v3639 = vand.u32 %v359, 4294901760
        %v3640 = vsub.f32 %v359, %v3639
        %3641 = vmatpush2.msra.mxu0 %v3640
        %3642 = vmatprep.subr.mxu0 0.0
        %v3643 = vand.u32 %v358, 4294901760
        %v3644 = vsub.f32 %v358, %v3643
        %3645 = vmatpush2.msra.mxu0 %v3644
        %3646 = vmatprep.subr.mxu0 0.0
        %v3647 = vand.u32 %v357, 4294901760
        %v3648 = vsub.f32 %v357, %v3647
        %3649 = vmatpush2.msra.mxu0 %v3648
        %3650 = vmatprep.subr.mxu0 0.0
        %v3651 = vand.u32 %v356, 4294901760
        %v3652 = vsub.f32 %v356, %v3651
        %3653 = vmatpush2.msra.mxu0 %v3652
        %v3654 = vand.u32 %v231, 4294901760
        %v3655 = vsub.f32 %v231, %v3654
        %3656 = vmatprep.mubr.f32.mxu0 %v3655
        %v3657 = vand.u32 %v230, 4294901760
        %v3658 = vsub.f32 %v230, %v3657
        %3659 = vmatmul.mubr.f32.gmra.mxu0 %v3658
        %v3660 = vpop.f32.mrf.mxu0
        %v3661 = vadd.f32 %v3516, %v3660
        %v3662 = vpop.f32.mrf.mxu0
        %v3663 = vand.u32 %v241, 4294901760
        %v3664 = vsub.f32 %v241, %v3663
        %3665 = vmatprep.mubr.f32.mxu0 %v3664
        %v3666 = vand.u32 %v240, 4294901760
        %v3667 = vsub.f32 %v240, %v3666
        %3668 = vmatmul.mubr.f32.gmra.mxu0 %v3667
        %v3669 = vpop.f32.mrf.mxu0
        %v3670 = vadd.f32 %v3523, %v3669
        %v3671 = vpop.f32.mrf.mxu0
        %3672 = vdwg.mxu0
        %3673 = vmatprep.subr.mxu0 0.0
        %v3674 = vand.u32 %v355, 4294901760
        %3675 = vmatpush1.msra.mxu0 %v3674
        %3676 = vmatprep.subr.mxu0 0.0
        %v3677 = vand.u32 %v354, 4294901760
        %3678 = vmatpush1.msra.mxu0 %v3677
        %3679 = vmatprep.subr.mxu0 0.0
        %v3680 = vand.u32 %v353, 4294901760
        %3681 = vmatpush1.msra.mxu0 %v3680
        %3682 = vmatprep.subr.mxu0 0.0
        %v3683 = vand.u32 %v352, 4294901760
        %3684 = vmatpush1.msra.mxu0 %v3683
        %3685 = vmatprep.subr.mxu0 0.0
        %v3686 = vand.u32 %v351, 4294901760
        %3687 = vmatpush1.msra.mxu0 %v3686
        %3688 = vmatprep.subr.mxu0 0.0
        %v3689 = vand.u32 %v350, 4294901760
        %3690 = vmatpush1.msra.mxu0 %v3689
        %3691 = vmatprep.subr.mxu0 0.0
        %v3692 = vand.u32 %v349, 4294901760
        %3693 = vmatpush1.msra.mxu0 %v3692
        %3694 = vmatprep.subr.mxu0 0.0
        %v3695 = vand.u32 %v348, 4294901760
        %3696 = vmatpush1.msra.mxu0 %v3695
        %3697 = vmatprep.subr.mxu0 0.0
        %v3698 = vand.u32 %v347, 4294901760
        %3699 = vmatpush1.msra.mxu0 %v3698
        %3700 = vmatprep.subr.mxu0 0.0
        %v3701 = vand.u32 %v346, 4294901760
        %3702 = vmatpush1.msra.mxu0 %v3701
        %3703 = vmatprep.subr.mxu0 0.0
        %v3704 = vand.u32 %v345, 4294901760
        %3705 = vmatpush1.msra.mxu0 %v3704
        %3706 = vmatprep.subr.mxu0 0.0
        %v3707 = vand.u32 %v344, 4294901760
        %3708 = vmatpush1.msra.mxu0 %v3707
        %3709 = vmatprep.subr.mxu0 0.0
        %v3710 = vand.u32 %v343, 4294901760
        %3711 = vmatpush1.msra.mxu0 %v3710
        %3712 = vmatprep.subr.mxu0 0.0
        %v3713 = vand.u32 %v342, 4294901760
        %3714 = vmatpush1.msra.mxu0 %v3713
        %3715 = vmatprep.subr.mxu0 0.0
        %v3716 = vand.u32 %v341, 4294901760
        %3717 = vmatpush1.msra.mxu0 %v3716
        %3718 = vmatprep.subr.mxu0 0.0
        %v3719 = vand.u32 %v340, 4294901760
        %3720 = vmatpush1.msra.mxu0 %v3719
        %3721 = vmatprep.subr.mxu0 0.0
        %v3722 = vand.u32 %v371, 4294901760
        %3723 = vmatpush2.msra.mxu0 %v3722
        %3724 = vmatprep.subr.mxu0 0.0
        %v3725 = vand.u32 %v370, 4294901760
        %3726 = vmatpush2.msra.mxu0 %v3725
        %3727 = vmatprep.subr.mxu0 0.0
        %v3728 = vand.u32 %v369, 4294901760
        %3729 = vmatpush2.msra.mxu0 %v3728
        %3730 = vmatprep.subr.mxu0 0.0
        %v3731 = vand.u32 %v368, 4294901760
        %3732 = vmatpush2.msra.mxu0 %v3731
        %3733 = vmatprep.subr.mxu0 0.0
        %v3734 = vand.u32 %v367, 4294901760
        %3735 = vmatpush2.msra.mxu0 %v3734
        %3736 = vmatprep.subr.mxu0 0.0
        %v3737 = vand.u32 %v366, 4294901760
        %3738 = vmatpush2.msra.mxu0 %v3737
        %3739 = vmatprep.subr.mxu0 0.0
        %v3740 = vand.u32 %v365, 4294901760
        %3741 = vmatpush2.msra.mxu0 %v3740
        %3742 = vmatprep.subr.mxu0 0.0
        %v3743 = vand.u32 %v364, 4294901760
        %3744 = vmatpush2.msra.mxu0 %v3743
        %3745 = vmatprep.subr.mxu0 0.0
        %v3746 = vand.u32 %v363, 4294901760
        %3747 = vmatpush2.msra.mxu0 %v3746
        %3748 = vmatprep.subr.mxu0 0.0
        %v3749 = vand.u32 %v362, 4294901760
        %3750 = vmatpush2.msra.mxu0 %v3749
        %3751 = vmatprep.subr.mxu0 0.0
        %v3752 = vand.u32 %v361, 4294901760
        %3753 = vmatpush2.msra.mxu0 %v3752
        %3754 = vmatprep.subr.mxu0 0.0
        %v3755 = vand.u32 %v360, 4294901760
        %3756 = vmatpush2.msra.mxu0 %v3755
        %3757 = vmatprep.subr.mxu0 0.0
        %v3758 = vand.u32 %v359, 4294901760
        %3759 = vmatpush2.msra.mxu0 %v3758
        %3760 = vmatprep.subr.mxu0 0.0
        %v3761 = vand.u32 %v358, 4294901760
        %3762 = vmatpush2.msra.mxu0 %v3761
        %3763 = vmatprep.subr.mxu0 0.0
        %v3764 = vand.u32 %v357, 4294901760
        %3765 = vmatpush2.msra.mxu0 %v3764
        %3766 = vmatprep.subr.mxu0 0.0
        %v3767 = vand.u32 %v356, 4294901760
        %3768 = vmatpush2.msra.mxu0 %v3767
        %v3769 = vand.u32 %v231, 4294901760
        %v3770 = vsub.f32 %v231, %v3769
        %v3771 = vand.u32 %v3770, 4294901760
        %3772 = vmatprep.mubr.f32.mxu0 %v3771
        %v3773 = vand.u32 %v230, 4294901760
        %v3774 = vsub.f32 %v230, %v3773
        %v3775 = vand.u32 %v3774, 4294901760
        %3776 = vmatmul.mubr.f32.gmra.mxu0 %v3775
        %v3777 = vpop.f32.mrf.mxu0
        %v3778 = vadd.f32 %v3661, %v3777
        %v3779 = vpop.f32.mrf.mxu0
        %v3780 = vand.u32 %v241, 4294901760
        %v3781 = vsub.f32 %v241, %v3780
        %v3782 = vand.u32 %v3781, 4294901760
        %3783 = vmatprep.mubr.f32.mxu0 %v3782
        %v3784 = vand.u32 %v240, 4294901760
        %v3785 = vsub.f32 %v240, %v3784
        %v3786 = vand.u32 %v3785, 4294901760
        %3787 = vmatmul.mubr.f32.gmra.mxu0 %v3786
        %v3788 = vpop.f32.mrf.mxu0
        %v3789 = vadd.f32 %v3670, %v3788
        %v3790 = vpop.f32.mrf.mxu0
        %3791 = vdwg.mxu0
        %3792 = vmatprep.subr.mxu0 0.0
        %v3793 = vand.u32 %v355, 4294901760
        %v3794 = vsub.f32 %v355, %v3793
        %v3795 = vand.u32 %v3794, 4294901760
        %3796 = vmatpush1.msra.mxu0 %v3795
        %3797 = vmatprep.subr.mxu0 0.0
        %v3798 = vand.u32 %v354, 4294901760
        %v3799 = vsub.f32 %v354, %v3798
        %v3800 = vand.u32 %v3799, 4294901760
        %3801 = vmatpush1.msra.mxu0 %v3800
        %3802 = vmatprep.subr.mxu0 0.0
        %v3803 = vand.u32 %v353, 4294901760
        %v3804 = vsub.f32 %v353, %v3803
        %v3805 = vand.u32 %v3804, 4294901760
        %3806 = vmatpush1.msra.mxu0 %v3805
        %3807 = vmatprep.subr.mxu0 0.0
        %v3808 = vand.u32 %v352, 4294901760
        %v3809 = vsub.f32 %v352, %v3808
        %v3810 = vand.u32 %v3809, 4294901760
        %3811 = vmatpush1.msra.mxu0 %v3810
        %3812 = vmatprep.subr.mxu0 0.0
        %v3813 = vand.u32 %v351, 4294901760
        %v3814 = vsub.f32 %v351, %v3813
        %v3815 = vand.u32 %v3814, 4294901760
        %3816 = vmatpush1.msra.mxu0 %v3815
        %3817 = vmatprep.subr.mxu0 0.0
        %v3818 = vand.u32 %v350, 4294901760
        %v3819 = vsub.f32 %v350, %v3818
        %v3820 = vand.u32 %v3819, 4294901760
        %3821 = vmatpush1.msra.mxu0 %v3820
        %3822 = vmatprep.subr.mxu0 0.0
        %v3823 = vand.u32 %v349, 4294901760
        %v3824 = vsub.f32 %v349, %v3823
        %v3825 = vand.u32 %v3824, 4294901760
        %3826 = vmatpush1.msra.mxu0 %v3825
        %3827 = vmatprep.subr.mxu0 0.0
        %v3828 = vand.u32 %v348, 4294901760
        %v3829 = vsub.f32 %v348, %v3828
        %v3830 = vand.u32 %v3829, 4294901760
        %3831 = vmatpush1.msra.mxu0 %v3830
        %3832 = vmatprep.subr.mxu0 0.0
        %v3833 = vand.u32 %v347, 4294901760
        %v3834 = vsub.f32 %v347, %v3833
        %v3835 = vand.u32 %v3834, 4294901760
        %3836 = vmatpush1.msra.mxu0 %v3835
        %3837 = vmatprep.subr.mxu0 0.0
        %v3838 = vand.u32 %v346, 4294901760
        %v3839 = vsub.f32 %v346, %v3838
        %v3840 = vand.u32 %v3839, 4294901760
        %3841 = vmatpush1.msra.mxu0 %v3840
        %3842 = vmatprep.subr.mxu0 0.0
        %v3843 = vand.u32 %v345, 4294901760
        %v3844 = vsub.f32 %v345, %v3843
        %v3845 = vand.u32 %v3844, 4294901760
        %3846 = vmatpush1.msra.mxu0 %v3845
        %3847 = vmatprep.subr.mxu0 0.0
        %v3848 = vand.u32 %v344, 4294901760
        %v3849 = vsub.f32 %v344, %v3848
        %v3850 = vand.u32 %v3849, 4294901760
        %3851 = vmatpush1.msra.mxu0 %v3850
        %3852 = vmatprep.subr.mxu0 0.0
        %v3853 = vand.u32 %v343, 4294901760
        %v3854 = vsub.f32 %v343, %v3853
        %v3855 = vand.u32 %v3854, 4294901760
        %3856 = vmatpush1.msra.mxu0 %v3855
        %3857 = vmatprep.subr.mxu0 0.0
        %v3858 = vand.u32 %v342, 4294901760
        %v3859 = vsub.f32 %v342, %v3858
        %v3860 = vand.u32 %v3859, 4294901760
        %3861 = vmatpush1.msra.mxu0 %v3860
        %3862 = vmatprep.subr.mxu0 0.0
        %v3863 = vand.u32 %v341, 4294901760
        %v3864 = vsub.f32 %v341, %v3863
        %v3865 = vand.u32 %v3864, 4294901760
        %3866 = vmatpush1.msra.mxu0 %v3865
        %3867 = vmatprep.subr.mxu0 0.0
        %v3868 = vand.u32 %v340, 4294901760
        %v3869 = vsub.f32 %v340, %v3868
        %v3870 = vand.u32 %v3869, 4294901760
        %3871 = vmatpush1.msra.mxu0 %v3870
        %3872 = vmatprep.subr.mxu0 0.0
        %v3873 = vand.u32 %v371, 4294901760
        %v3874 = vsub.f32 %v371, %v3873
        %v3875 = vand.u32 %v3874, 4294901760
        %3876 = vmatpush2.msra.mxu0 %v3875
        %3877 = vmatprep.subr.mxu0 0.0
        %v3878 = vand.u32 %v370, 4294901760
        %v3879 = vsub.f32 %v370, %v3878
        %v3880 = vand.u32 %v3879, 4294901760
        %3881 = vmatpush2.msra.mxu0 %v3880
        %3882 = vmatprep.subr.mxu0 0.0
        %v3883 = vand.u32 %v369, 4294901760
        %v3884 = vsub.f32 %v369, %v3883
        %v3885 = vand.u32 %v3884, 4294901760
        %3886 = vmatpush2.msra.mxu0 %v3885
        %3887 = vmatprep.subr.mxu0 0.0
        %v3888 = vand.u32 %v368, 4294901760
        %v3889 = vsub.f32 %v368, %v3888
        %v3890 = vand.u32 %v3889, 4294901760
        %3891 = vmatpush2.msra.mxu0 %v3890
        %3892 = vmatprep.subr.mxu0 0.0
        %v3893 = vand.u32 %v367, 4294901760
        %v3894 = vsub.f32 %v367, %v3893
        %v3895 = vand.u32 %v3894, 4294901760
        %3896 = vmatpush2.msra.mxu0 %v3895
        %3897 = vmatprep.subr.mxu0 0.0
        %v3898 = vand.u32 %v366, 4294901760
        %v3899 = vsub.f32 %v366, %v3898
        %v3900 = vand.u32 %v3899, 4294901760
        %3901 = vmatpush2.msra.mxu0 %v3900
        %3902 = vmatprep.subr.mxu0 0.0
        %v3903 = vand.u32 %v365, 4294901760
        %v3904 = vsub.f32 %v365, %v3903
        %v3905 = vand.u32 %v3904, 4294901760
        %3906 = vmatpush2.msra.mxu0 %v3905
        %3907 = vmatprep.subr.mxu0 0.0
        %v3908 = vand.u32 %v364, 4294901760
        %v3909 = vsub.f32 %v364, %v3908
        %v3910 = vand.u32 %v3909, 4294901760
        %3911 = vmatpush2.msra.mxu0 %v3910
        %3912 = vmatprep.subr.mxu0 0.0
        %v3913 = vand.u32 %v363, 4294901760
        %v3914 = vsub.f32 %v363, %v3913
        %v3915 = vand.u32 %v3914, 4294901760
        %3916 = vmatpush2.msra.mxu0 %v3915
        %3917 = vmatprep.subr.mxu0 0.0
        %v3918 = vand.u32 %v362, 4294901760
        %v3919 = vsub.f32 %v362, %v3918
        %v3920 = vand.u32 %v3919, 4294901760
        %3921 = vmatpush2.msra.mxu0 %v3920
        %3922 = vmatprep.subr.mxu0 0.0
        %v3923 = vand.u32 %v361, 4294901760
        %v3924 = vsub.f32 %v361, %v3923
        %v3925 = vand.u32 %v3924, 4294901760
        %3926 = vmatpush2.msra.mxu0 %v3925
        %3927 = vmatprep.subr.mxu0 0.0
        %v3928 = vand.u32 %v360, 4294901760
        %v3929 = vsub.f32 %v360, %v3928
        %v3930 = vand.u32 %v3929, 4294901760
        %3931 = vmatpush2.msra.mxu0 %v3930
        %3932 = vmatprep.subr.mxu0 0.0
        %v3933 = vand.u32 %v359, 4294901760
        %v3934 = vsub.f32 %v359, %v3933
        %v3935 = vand.u32 %v3934, 4294901760
        %3936 = vmatpush2.msra.mxu0 %v3935
        %3937 = vmatprep.subr.mxu0 0.0
        %v3938 = vand.u32 %v358, 4294901760
        %v3939 = vsub.f32 %v358, %v3938
        %v3940 = vand.u32 %v3939, 4294901760
        %3941 = vmatpush2.msra.mxu0 %v3940
        %3942 = vmatprep.subr.mxu0 0.0
        %v3943 = vand.u32 %v357, 4294901760
        %v3944 = vsub.f32 %v357, %v3943
        %v3945 = vand.u32 %v3944, 4294901760
        %3946 = vmatpush2.msra.mxu0 %v3945
        %3947 = vmatprep.subr.mxu0 0.0
        %v3948 = vand.u32 %v356, 4294901760
        %v3949 = vsub.f32 %v356, %v3948
        %v3950 = vand.u32 %v3949, 4294901760
        %3951 = vmatpush2.msra.mxu0 %v3950
        %v3952 = vand.u32 %v231, 4294901760
        %3953 = vmatprep.mubr.f32.mxu0 %v3952
        %v3954 = vand.u32 %v230, 4294901760
        %3955 = vmatmul.mubr.f32.gmra.mxu0 %v3954
        %v3956 = vpop.f32.mrf.mxu0
        %v3957 = vadd.f32 %v3778, %v3956
        %v3958 = vpop.f32.mrf.mxu0
        %v3959 = vand.u32 %v241, 4294901760
        %3960 = vmatprep.mubr.f32.mxu0 %v3959
        %v3961 = vand.u32 %v240, 4294901760
        %3962 = vmatmul.mubr.f32.gmra.mxu0 %v3961
        %v3963 = vpop.f32.mrf.mxu0
        %v3964 = vadd.f32 %v3789, %v3963
        %v3965 = vpop.f32.mrf.mxu0
        %3966 = vdwg.mxu0
        %3967 = vmatprep.subr.mxu0 0.0
        %v3968 = vand.u32 %v355, 4294901760
        %3969 = vmatpush1.msra.mxu0 %v3968
        %3970 = vmatprep.subr.mxu0 0.0
        %v3971 = vand.u32 %v354, 4294901760
        %3972 = vmatpush1.msra.mxu0 %v3971
        %3973 = vmatprep.subr.mxu0 0.0
        %v3974 = vand.u32 %v353, 4294901760
        %3975 = vmatpush1.msra.mxu0 %v3974
        %3976 = vmatprep.subr.mxu0 0.0
        %v3977 = vand.u32 %v352, 4294901760
        %3978 = vmatpush1.msra.mxu0 %v3977
        %3979 = vmatprep.subr.mxu0 0.0
        %v3980 = vand.u32 %v351, 4294901760
        %3981 = vmatpush1.msra.mxu0 %v3980
        %3982 = vmatprep.subr.mxu0 0.0
        %v3983 = vand.u32 %v350, 4294901760
        %3984 = vmatpush1.msra.mxu0 %v3983
        %3985 = vmatprep.subr.mxu0 0.0
        %v3986 = vand.u32 %v349, 4294901760
        %3987 = vmatpush1.msra.mxu0 %v3986
        %3988 = vmatprep.subr.mxu0 0.0
        %v3989 = vand.u32 %v348, 4294901760
        %3990 = vmatpush1.msra.mxu0 %v3989
        %3991 = vmatprep.subr.mxu0 0.0
        %v3992 = vand.u32 %v347, 4294901760
        %3993 = vmatpush1.msra.mxu0 %v3992
        %3994 = vmatprep.subr.mxu0 0.0
        %v3995 = vand.u32 %v346, 4294901760
        %3996 = vmatpush1.msra.mxu0 %v3995
        %3997 = vmatprep.subr.mxu0 0.0
        %v3998 = vand.u32 %v345, 4294901760
        %3999 = vmatpush1.msra.mxu0 %v3998
        %4000 = vmatprep.subr.mxu0 0.0
        %v4001 = vand.u32 %v344, 4294901760
        %4002 = vmatpush1.msra.mxu0 %v4001
        %4003 = vmatprep.subr.mxu0 0.0
        %v4004 = vand.u32 %v343, 4294901760
        %4005 = vmatpush1.msra.mxu0 %v4004
        %4006 = vmatprep.subr.mxu0 0.0
        %v4007 = vand.u32 %v342, 4294901760
        %4008 = vmatpush1.msra.mxu0 %v4007
        %4009 = vmatprep.subr.mxu0 0.0
        %v4010 = vand.u32 %v341, 4294901760
        %4011 = vmatpush1.msra.mxu0 %v4010
        %4012 = vmatprep.subr.mxu0 0.0
        %v4013 = vand.u32 %v340, 4294901760
        %4014 = vmatpush1.msra.mxu0 %v4013
        %4015 = vmatprep.subr.mxu0 0.0
        %v4016 = vand.u32 %v371, 4294901760
        %4017 = vmatpush2.msra.mxu0 %v4016
        %4018 = vmatprep.subr.mxu0 0.0
        %v4019 = vand.u32 %v370, 4294901760
        %4020 = vmatpush2.msra.mxu0 %v4019
        %4021 = vmatprep.subr.mxu0 0.0
        %v4022 = vand.u32 %v369, 4294901760
        %4023 = vmatpush2.msra.mxu0 %v4022
        %4024 = vmatprep.subr.mxu0 0.0
        %v4025 = vand.u32 %v368, 4294901760
        %4026 = vmatpush2.msra.mxu0 %v4025
        %4027 = vmatprep.subr.mxu0 0.0
        %v4028 = vand.u32 %v367, 4294901760
        %4029 = vmatpush2.msra.mxu0 %v4028
        %4030 = vmatprep.subr.mxu0 0.0
        %v4031 = vand.u32 %v366, 4294901760
        %4032 = vmatpush2.msra.mxu0 %v4031
        %4033 = vmatprep.subr.mxu0 0.0
        %v4034 = vand.u32 %v365, 4294901760
        %4035 = vmatpush2.msra.mxu0 %v4034
        %4036 = vmatprep.subr.mxu0 0.0
        %v4037 = vand.u32 %v364, 4294901760
        %4038 = vmatpush2.msra.mxu0 %v4037
        %4039 = vmatprep.subr.mxu0 0.0
        %v4040 = vand.u32 %v363, 4294901760
        %4041 = vmatpush2.msra.mxu0 %v4040
        %4042 = vmatprep.subr.mxu0 0.0
        %v4043 = vand.u32 %v362, 4294901760
        %4044 = vmatpush2.msra.mxu0 %v4043
        %4045 = vmatprep.subr.mxu0 0.0
        %v4046 = vand.u32 %v361, 4294901760
        %4047 = vmatpush2.msra.mxu0 %v4046
        %4048 = vmatprep.subr.mxu0 0.0
        %v4049 = vand.u32 %v360, 4294901760
        %4050 = vmatpush2.msra.mxu0 %v4049
        %4051 = vmatprep.subr.mxu0 0.0
        %v4052 = vand.u32 %v359, 4294901760
        %4053 = vmatpush2.msra.mxu0 %v4052
        %4054 = vmatprep.subr.mxu0 0.0
        %v4055 = vand.u32 %v358, 4294901760
        %4056 = vmatpush2.msra.mxu0 %v4055
        %4057 = vmatprep.subr.mxu0 0.0
        %v4058 = vand.u32 %v357, 4294901760
        %4059 = vmatpush2.msra.mxu0 %v4058
        %4060 = vmatprep.subr.mxu0 0.0
        %v4061 = vand.u32 %v356, 4294901760
        %4062 = vmatpush2.msra.mxu0 %v4061
        %v4063 = vand.u32 %v231, 4294901760
        %4064 = vmatprep.mubr.f32.mxu0 %v4063
        %v4065 = vand.u32 %v230, 4294901760
        %4066 = vmatmul.mubr.f32.gmra.mxu0 %v4065
        %v4067 = vpop.f32.mrf.mxu0
        %v4068 = vadd.f32 %v3957, %v4067
        %v4069 = vpop.f32.mrf.mxu0
        %v4070 = vand.u32 %v241, 4294901760
        %4071 = vmatprep.mubr.f32.mxu0 %v4070
        %v4072 = vand.u32 %v240, 4294901760
        %4073 = vmatmul.mubr.f32.gmra.mxu0 %v4072
        %v4074 = vpop.f32.mrf.mxu0
        %v4075 = vadd.f32 %v3964, %v4074
        %v4076 = vpop.f32.mrf.mxu0
        %4077 = vdwg.mxu0
        %4078 = vmatprep.subr.mxu0 0.0
        %v4079 = vand.u32 %v387, 4294901760
        %4080 = vmatpush1.msra.mxu0 %v4079
        %4081 = vmatprep.subr.mxu0 0.0
        %v4082 = vand.u32 %v386, 4294901760
        %4083 = vmatpush1.msra.mxu0 %v4082
        %4084 = vmatprep.subr.mxu0 0.0
        %v4085 = vand.u32 %v385, 4294901760
        %4086 = vmatpush1.msra.mxu0 %v4085
        %4087 = vmatprep.subr.mxu0 0.0
        %v4088 = vand.u32 %v384, 4294901760
        %4089 = vmatpush1.msra.mxu0 %v4088
        %4090 = vmatprep.subr.mxu0 0.0
        %v4091 = vand.u32 %v383, 4294901760
        %4092 = vmatpush1.msra.mxu0 %v4091
        %4093 = vmatprep.subr.mxu0 0.0
        %v4094 = vand.u32 %v382, 4294901760
        %4095 = vmatpush1.msra.mxu0 %v4094
        %4096 = vmatprep.subr.mxu0 0.0
        %v4097 = vand.u32 %v381, 4294901760
        %4098 = vmatpush1.msra.mxu0 %v4097
        %4099 = vmatprep.subr.mxu0 0.0
        %v4100 = vand.u32 %v380, 4294901760
        %4101 = vmatpush1.msra.mxu0 %v4100
        %4102 = vmatprep.subr.mxu0 0.0
        %v4103 = vand.u32 %v379, 4294901760
        %4104 = vmatpush1.msra.mxu0 %v4103
        %4105 = vmatprep.subr.mxu0 0.0
        %v4106 = vand.u32 %v378, 4294901760
        %4107 = vmatpush1.msra.mxu0 %v4106
        %4108 = vmatprep.subr.mxu0 0.0
        %v4109 = vand.u32 %v377, 4294901760
        %4110 = vmatpush1.msra.mxu0 %v4109
        %4111 = vmatprep.subr.mxu0 0.0
        %v4112 = vand.u32 %v376, 4294901760
        %4113 = vmatpush1.msra.mxu0 %v4112
        %4114 = vmatprep.subr.mxu0 0.0
        %v4115 = vand.u32 %v375, 4294901760
        %4116 = vmatpush1.msra.mxu0 %v4115
        %4117 = vmatprep.subr.mxu0 0.0
        %v4118 = vand.u32 %v374, 4294901760
        %4119 = vmatpush1.msra.mxu0 %v4118
        %4120 = vmatprep.subr.mxu0 0.0
        %v4121 = vand.u32 %v373, 4294901760
        %4122 = vmatpush1.msra.mxu0 %v4121
        %4123 = vmatprep.subr.mxu0 0.0
        %v4124 = vand.u32 %v372, 4294901760
        %4125 = vmatpush1.msra.mxu0 %v4124
        %4126 = vmatprep.subr.mxu0 0.0
        %v4127 = vand.u32 %v403, 4294901760
        %4128 = vmatpush2.msra.mxu0 %v4127
        %4129 = vmatprep.subr.mxu0 0.0
        %v4130 = vand.u32 %v402, 4294901760
        %4131 = vmatpush2.msra.mxu0 %v4130
        %4132 = vmatprep.subr.mxu0 0.0
        %v4133 = vand.u32 %v401, 4294901760
        %4134 = vmatpush2.msra.mxu0 %v4133
        %4135 = vmatprep.subr.mxu0 0.0
        %v4136 = vand.u32 %v400, 4294901760
        %4137 = vmatpush2.msra.mxu0 %v4136
        %4138 = vmatprep.subr.mxu0 0.0
        %v4139 = vand.u32 %v399, 4294901760
        %4140 = vmatpush2.msra.mxu0 %v4139
        %4141 = vmatprep.subr.mxu0 0.0
        %v4142 = vand.u32 %v398, 4294901760
        %4143 = vmatpush2.msra.mxu0 %v4142
        %4144 = vmatprep.subr.mxu0 0.0
        %v4145 = vand.u32 %v397, 4294901760
        %4146 = vmatpush2.msra.mxu0 %v4145
        %4147 = vmatprep.subr.mxu0 0.0
        %v4148 = vand.u32 %v396, 4294901760
        %4149 = vmatpush2.msra.mxu0 %v4148
        %4150 = vmatprep.subr.mxu0 0.0
        %v4151 = vand.u32 %v395, 4294901760
        %4152 = vmatpush2.msra.mxu0 %v4151
        %4153 = vmatprep.subr.mxu0 0.0
        %v4154 = vand.u32 %v394, 4294901760
        %4155 = vmatpush2.msra.mxu0 %v4154
        %4156 = vmatprep.subr.mxu0 0.0
        %v4157 = vand.u32 %v393, 4294901760
        %4158 = vmatpush2.msra.mxu0 %v4157
        %4159 = vmatprep.subr.mxu0 0.0
        %v4160 = vand.u32 %v392, 4294901760
        %4161 = vmatpush2.msra.mxu0 %v4160
        %4162 = vmatprep.subr.mxu0 0.0
        %v4163 = vand.u32 %v391, 4294901760
        %4164 = vmatpush2.msra.mxu0 %v4163
        %4165 = vmatprep.subr.mxu0 0.0
        %v4166 = vand.u32 %v390, 4294901760
        %4167 = vmatpush2.msra.mxu0 %v4166
        %4168 = vmatprep.subr.mxu0 0.0
        %v4169 = vand.u32 %v389, 4294901760
        %4170 = vmatpush2.msra.mxu0 %v4169
        %4171 = vmatprep.subr.mxu0 0.0
        %v4172 = vand.u32 %v388, 4294901760
        %4173 = vmatpush2.msra.mxu0 %v4172
        %v4174 = vand.u32 %v233, 4294901760
        %v4175 = vsub.f32 %v233, %v4174
        %v4176 = vand.u32 %v4175, 4294901760
        %v4177 = vsub.f32 %v4175, %v4176
        %v4178 = vand.u32 %v4177, 4294901760
        %4179 = vmatprep.mubr.f32.mxu0 %v4178
        %v4180 = vand.u32 %v232, 4294901760
        %v4181 = vsub.f32 %v232, %v4180
        %v4182 = vand.u32 %v4181, 4294901760
        %v4183 = vsub.f32 %v4181, %v4182
        %v4184 = vand.u32 %v4183, 4294901760
        %4185 = vmatmul.mubr.f32.gmra.mxu0 %v4184
        %v4186 = vpop.f32.mrf.mxu0
        %v4187 = vadd.f32 %v4068, %v4186
        %v4188 = vpop.f32.mrf.mxu0
        %v4189 = vand.u32 %v243, 4294901760
        %v4190 = vsub.f32 %v243, %v4189
        %v4191 = vand.u32 %v4190, 4294901760
        %v4192 = vsub.f32 %v4190, %v4191
        %v4193 = vand.u32 %v4192, 4294901760
        %4194 = vmatprep.mubr.f32.mxu0 %v4193
        %v4195 = vand.u32 %v242, 4294901760
        %v4196 = vsub.f32 %v242, %v4195
        %v4197 = vand.u32 %v4196, 4294901760
        %v4198 = vsub.f32 %v4196, %v4197
        %v4199 = vand.u32 %v4198, 4294901760
        %4200 = vmatmul.mubr.f32.gmra.mxu0 %v4199
        %v4201 = vpop.f32.mrf.mxu0
        %v4202 = vadd.f32 %v4075, %v4201
        %v4203 = vpop.f32.mrf.mxu0
        %4204 = vdwg.mxu0
        %4205 = vmatprep.subr.mxu0 0.0
        %v4206 = vand.u32 %v387, 4294901760
        %v4207 = vsub.f32 %v387, %v4206
        %v4208 = vand.u32 %v4207, 4294901760
        %v4209 = vsub.f32 %v4207, %v4208
        %v4210 = vand.u32 %v4209, 4294901760
        %4211 = vmatpush1.msra.mxu0 %v4210
        %4212 = vmatprep.subr.mxu0 0.0
        %v4213 = vand.u32 %v386, 4294901760
        %v4214 = vsub.f32 %v386, %v4213
        %v4215 = vand.u32 %v4214, 4294901760
        %v4216 = vsub.f32 %v4214, %v4215
        %v4217 = vand.u32 %v4216, 4294901760
        %4218 = vmatpush1.msra.mxu0 %v4217
        %4219 = vmatprep.subr.mxu0 0.0
        %v4220 = vand.u32 %v385, 4294901760
        %v4221 = vsub.f32 %v385, %v4220
        %v4222 = vand.u32 %v4221, 4294901760
        %v4223 = vsub.f32 %v4221, %v4222
        %v4224 = vand.u32 %v4223, 4294901760
        %4225 = vmatpush1.msra.mxu0 %v4224
        %4226 = vmatprep.subr.mxu0 0.0
        %v4227 = vand.u32 %v384, 4294901760
        %v4228 = vsub.f32 %v384, %v4227
        %v4229 = vand.u32 %v4228, 4294901760
        %v4230 = vsub.f32 %v4228, %v4229
        %v4231 = vand.u32 %v4230, 4294901760
        %4232 = vmatpush1.msra.mxu0 %v4231
        %4233 = vmatprep.subr.mxu0 0.0
        %v4234 = vand.u32 %v383, 4294901760
        %v4235 = vsub.f32 %v383, %v4234
        %v4236 = vand.u32 %v4235, 4294901760
        %v4237 = vsub.f32 %v4235, %v4236
        %v4238 = vand.u32 %v4237, 4294901760
        %4239 = vmatpush1.msra.mxu0 %v4238
        %4240 = vmatprep.subr.mxu0 0.0
        %v4241 = vand.u32 %v382, 4294901760
        %v4242 = vsub.f32 %v382, %v4241
        %v4243 = vand.u32 %v4242, 4294901760
        %v4244 = vsub.f32 %v4242, %v4243
        %v4245 = vand.u32 %v4244, 4294901760
        %4246 = vmatpush1.msra.mxu0 %v4245
        %4247 = vmatprep.subr.mxu0 0.0
        %v4248 = vand.u32 %v381, 4294901760
        %v4249 = vsub.f32 %v381, %v4248
        %v4250 = vand.u32 %v4249, 4294901760
        %v4251 = vsub.f32 %v4249, %v4250
        %v4252 = vand.u32 %v4251, 4294901760
        %4253 = vmatpush1.msra.mxu0 %v4252
        %4254 = vmatprep.subr.mxu0 0.0
        %v4255 = vand.u32 %v380, 4294901760
        %v4256 = vsub.f32 %v380, %v4255
        %v4257 = vand.u32 %v4256, 4294901760
        %v4258 = vsub.f32 %v4256, %v4257
        %v4259 = vand.u32 %v4258, 4294901760
        %4260 = vmatpush1.msra.mxu0 %v4259
        %4261 = vmatprep.subr.mxu0 0.0
        %v4262 = vand.u32 %v379, 4294901760
        %v4263 = vsub.f32 %v379, %v4262
        %v4264 = vand.u32 %v4263, 4294901760
        %v4265 = vsub.f32 %v4263, %v4264
        %v4266 = vand.u32 %v4265, 4294901760
        %4267 = vmatpush1.msra.mxu0 %v4266
        %4268 = vmatprep.subr.mxu0 0.0
        %v4269 = vand.u32 %v378, 4294901760
        %v4270 = vsub.f32 %v378, %v4269
        %v4271 = vand.u32 %v4270, 4294901760
        %v4272 = vsub.f32 %v4270, %v4271
        %v4273 = vand.u32 %v4272, 4294901760
        %4274 = vmatpush1.msra.mxu0 %v4273
        %4275 = vmatprep.subr.mxu0 0.0
        %v4276 = vand.u32 %v377, 4294901760
        %v4277 = vsub.f32 %v377, %v4276
        %v4278 = vand.u32 %v4277, 4294901760
        %v4279 = vsub.f32 %v4277, %v4278
        %v4280 = vand.u32 %v4279, 4294901760
        %4281 = vmatpush1.msra.mxu0 %v4280
        %4282 = vmatprep.subr.mxu0 0.0
        %v4283 = vand.u32 %v376, 4294901760
        %v4284 = vsub.f32 %v376, %v4283
        %v4285 = vand.u32 %v4284, 4294901760
        %v4286 = vsub.f32 %v4284, %v4285
        %v4287 = vand.u32 %v4286, 4294901760
        %4288 = vmatpush1.msra.mxu0 %v4287
        %4289 = vmatprep.subr.mxu0 0.0
        %v4290 = vand.u32 %v375, 4294901760
        %v4291 = vsub.f32 %v375, %v4290
        %v4292 = vand.u32 %v4291, 4294901760
        %v4293 = vsub.f32 %v4291, %v4292
        %v4294 = vand.u32 %v4293, 4294901760
        %4295 = vmatpush1.msra.mxu0 %v4294
        %4296 = vmatprep.subr.mxu0 0.0
        %v4297 = vand.u32 %v374, 4294901760
        %v4298 = vsub.f32 %v374, %v4297
        %v4299 = vand.u32 %v4298, 4294901760
        %v4300 = vsub.f32 %v4298, %v4299
        %v4301 = vand.u32 %v4300, 4294901760
        %4302 = vmatpush1.msra.mxu0 %v4301
        %4303 = vmatprep.subr.mxu0 0.0
        %v4304 = vand.u32 %v373, 4294901760
        %v4305 = vsub.f32 %v373, %v4304
        %v4306 = vand.u32 %v4305, 4294901760
        %v4307 = vsub.f32 %v4305, %v4306
        %v4308 = vand.u32 %v4307, 4294901760
        %4309 = vmatpush1.msra.mxu0 %v4308
        %4310 = vmatprep.subr.mxu0 0.0
        %v4311 = vand.u32 %v372, 4294901760
        %v4312 = vsub.f32 %v372, %v4311
        %v4313 = vand.u32 %v4312, 4294901760
        %v4314 = vsub.f32 %v4312, %v4313
        %v4315 = vand.u32 %v4314, 4294901760
        %4316 = vmatpush1.msra.mxu0 %v4315
        %4317 = vmatprep.subr.mxu0 0.0
        %v4318 = vand.u32 %v403, 4294901760
        %v4319 = vsub.f32 %v403, %v4318
        %v4320 = vand.u32 %v4319, 4294901760
        %v4321 = vsub.f32 %v4319, %v4320
        %v4322 = vand.u32 %v4321, 4294901760
        %4323 = vmatpush2.msra.mxu0 %v4322
        %4324 = vmatprep.subr.mxu0 0.0
        %v4325 = vand.u32 %v402, 4294901760
        %v4326 = vsub.f32 %v402, %v4325
        %v4327 = vand.u32 %v4326, 4294901760
        %v4328 = vsub.f32 %v4326, %v4327
        %v4329 = vand.u32 %v4328, 4294901760
        %4330 = vmatpush2.msra.mxu0 %v4329
        %4331 = vmatprep.subr.mxu0 0.0
        %v4332 = vand.u32 %v401, 4294901760
        %v4333 = vsub.f32 %v401, %v4332
        %v4334 = vand.u32 %v4333, 4294901760
        %v4335 = vsub.f32 %v4333, %v4334
        %v4336 = vand.u32 %v4335, 4294901760
        %4337 = vmatpush2.msra.mxu0 %v4336
        %4338 = vmatprep.subr.mxu0 0.0
        %v4339 = vand.u32 %v400, 4294901760
        %v4340 = vsub.f32 %v400, %v4339
        %v4341 = vand.u32 %v4340, 4294901760
        %v4342 = vsub.f32 %v4340, %v4341
        %v4343 = vand.u32 %v4342, 4294901760
        %4344 = vmatpush2.msra.mxu0 %v4343
        %4345 = vmatprep.subr.mxu0 0.0
        %v4346 = vand.u32 %v399, 4294901760
        %v4347 = vsub.f32 %v399, %v4346
        %v4348 = vand.u32 %v4347, 4294901760
        %v4349 = vsub.f32 %v4347, %v4348
        %v4350 = vand.u32 %v4349, 4294901760
        %4351 = vmatpush2.msra.mxu0 %v4350
        %4352 = vmatprep.subr.mxu0 0.0
        %v4353 = vand.u32 %v398, 4294901760
        %v4354 = vsub.f32 %v398, %v4353
        %v4355 = vand.u32 %v4354, 4294901760
        %v4356 = vsub.f32 %v4354, %v4355
        %v4357 = vand.u32 %v4356, 4294901760
        %4358 = vmatpush2.msra.mxu0 %v4357
        %4359 = vmatprep.subr.mxu0 0.0
        %v4360 = vand.u32 %v397, 4294901760
        %v4361 = vsub.f32 %v397, %v4360
        %v4362 = vand.u32 %v4361, 4294901760
        %v4363 = vsub.f32 %v4361, %v4362
        %v4364 = vand.u32 %v4363, 4294901760
        %4365 = vmatpush2.msra.mxu0 %v4364
        %4366 = vmatprep.subr.mxu0 0.0
        %v4367 = vand.u32 %v396, 4294901760
        %v4368 = vsub.f32 %v396, %v4367
        %v4369 = vand.u32 %v4368, 4294901760
        %v4370 = vsub.f32 %v4368, %v4369
        %v4371 = vand.u32 %v4370, 4294901760
        %4372 = vmatpush2.msra.mxu0 %v4371
        %4373 = vmatprep.subr.mxu0 0.0
        %v4374 = vand.u32 %v395, 4294901760
        %v4375 = vsub.f32 %v395, %v4374
        %v4376 = vand.u32 %v4375, 4294901760
        %v4377 = vsub.f32 %v4375, %v4376
        %v4378 = vand.u32 %v4377, 4294901760
        %4379 = vmatpush2.msra.mxu0 %v4378
        %4380 = vmatprep.subr.mxu0 0.0
        %v4381 = vand.u32 %v394, 4294901760
        %v4382 = vsub.f32 %v394, %v4381
        %v4383 = vand.u32 %v4382, 4294901760
        %v4384 = vsub.f32 %v4382, %v4383
        %v4385 = vand.u32 %v4384, 4294901760
        %4386 = vmatpush2.msra.mxu0 %v4385
        %4387 = vmatprep.subr.mxu0 0.0
        %v4388 = vand.u32 %v393, 4294901760
        %v4389 = vsub.f32 %v393, %v4388
        %v4390 = vand.u32 %v4389, 4294901760
        %v4391 = vsub.f32 %v4389, %v4390
        %v4392 = vand.u32 %v4391, 4294901760
        %4393 = vmatpush2.msra.mxu0 %v4392
        %4394 = vmatprep.subr.mxu0 0.0
        %v4395 = vand.u32 %v392, 4294901760
        %v4396 = vsub.f32 %v392, %v4395
        %v4397 = vand.u32 %v4396, 4294901760
        %v4398 = vsub.f32 %v4396, %v4397
        %v4399 = vand.u32 %v4398, 4294901760
        %4400 = vmatpush2.msra.mxu0 %v4399
        %4401 = vmatprep.subr.mxu0 0.0
        %v4402 = vand.u32 %v391, 4294901760
        %v4403 = vsub.f32 %v391, %v4402
        %v4404 = vand.u32 %v4403, 4294901760
        %v4405 = vsub.f32 %v4403, %v4404
        %v4406 = vand.u32 %v4405, 4294901760
        %4407 = vmatpush2.msra.mxu0 %v4406
        %4408 = vmatprep.subr.mxu0 0.0
        %v4409 = vand.u32 %v390, 4294901760
        %v4410 = vsub.f32 %v390, %v4409
        %v4411 = vand.u32 %v4410, 4294901760
        %v4412 = vsub.f32 %v4410, %v4411
        %v4413 = vand.u32 %v4412, 4294901760
        %4414 = vmatpush2.msra.mxu0 %v4413
        %4415 = vmatprep.subr.mxu0 0.0
        %v4416 = vand.u32 %v389, 4294901760
        %v4417 = vsub.f32 %v389, %v4416
        %v4418 = vand.u32 %v4417, 4294901760
        %v4419 = vsub.f32 %v4417, %v4418
        %v4420 = vand.u32 %v4419, 4294901760
        %4421 = vmatpush2.msra.mxu0 %v4420
        %4422 = vmatprep.subr.mxu0 0.0
        %v4423 = vand.u32 %v388, 4294901760
        %v4424 = vsub.f32 %v388, %v4423
        %v4425 = vand.u32 %v4424, 4294901760
        %v4426 = vsub.f32 %v4424, %v4425
        %v4427 = vand.u32 %v4426, 4294901760
        %4428 = vmatpush2.msra.mxu0 %v4427
        %v4429 = vand.u32 %v233, 4294901760
        %4430 = vmatprep.mubr.f32.mxu0 %v4429
        %v4431 = vand.u32 %v232, 4294901760
        %4432 = vmatmul.mubr.f32.gmra.mxu0 %v4431
        %v4433 = vpop.f32.mrf.mxu0
        %v4434 = vadd.f32 %v4187, %v4433
        %v4435 = vpop.f32.mrf.mxu0
        %v4436 = vand.u32 %v243, 4294901760
        %4437 = vmatprep.mubr.f32.mxu0 %v4436
        %v4438 = vand.u32 %v242, 4294901760
        %4439 = vmatmul.mubr.f32.gmra.mxu0 %v4438
        %v4440 = vpop.f32.mrf.mxu0
        %v4441 = vadd.f32 %v4202, %v4440
        %v4442 = vpop.f32.mrf.mxu0
        %4443 = vdwg.mxu0
        %4444 = vmatprep.subr.mxu0 0.0
        %v4445 = vand.u32 %v387, 4294901760
        %v4446 = vsub.f32 %v387, %v4445
        %4447 = vmatpush1.msra.mxu0 %v4446
        %4448 = vmatprep.subr.mxu0 0.0
        %v4449 = vand.u32 %v386, 4294901760
        %v4450 = vsub.f32 %v386, %v4449
        %4451 = vmatpush1.msra.mxu0 %v4450
        %4452 = vmatprep.subr.mxu0 0.0
        %v4453 = vand.u32 %v385, 4294901760
        %v4454 = vsub.f32 %v385, %v4453
        %4455 = vmatpush1.msra.mxu0 %v4454
        %4456 = vmatprep.subr.mxu0 0.0
        %v4457 = vand.u32 %v384, 4294901760
        %v4458 = vsub.f32 %v384, %v4457
        %4459 = vmatpush1.msra.mxu0 %v4458
        %4460 = vmatprep.subr.mxu0 0.0
        %v4461 = vand.u32 %v383, 4294901760
        %v4462 = vsub.f32 %v383, %v4461
        %4463 = vmatpush1.msra.mxu0 %v4462
        %4464 = vmatprep.subr.mxu0 0.0
        %v4465 = vand.u32 %v382, 4294901760
        %v4466 = vsub.f32 %v382, %v4465
        %4467 = vmatpush1.msra.mxu0 %v4466
        %4468 = vmatprep.subr.mxu0 0.0
        %v4469 = vand.u32 %v381, 4294901760
        %v4470 = vsub.f32 %v381, %v4469
        %4471 = vmatpush1.msra.mxu0 %v4470
        %4472 = vmatprep.subr.mxu0 0.0
        %v4473 = vand.u32 %v380, 4294901760
        %v4474 = vsub.f32 %v380, %v4473
        %4475 = vmatpush1.msra.mxu0 %v4474
        %4476 = vmatprep.subr.mxu0 0.0
        %v4477 = vand.u32 %v379, 4294901760
        %v4478 = vsub.f32 %v379, %v4477
        %4479 = vmatpush1.msra.mxu0 %v4478
        %4480 = vmatprep.subr.mxu0 0.0
        %v4481 = vand.u32 %v378, 4294901760
        %v4482 = vsub.f32 %v378, %v4481
        %4483 = vmatpush1.msra.mxu0 %v4482
        %4484 = vmatprep.subr.mxu0 0.0
        %v4485 = vand.u32 %v377, 4294901760
        %v4486 = vsub.f32 %v377, %v4485
        %4487 = vmatpush1.msra.mxu0 %v4486
        %4488 = vmatprep.subr.mxu0 0.0
        %v4489 = vand.u32 %v376, 4294901760
        %v4490 = vsub.f32 %v376, %v4489
        %4491 = vmatpush1.msra.mxu0 %v4490
        %4492 = vmatprep.subr.mxu0 0.0
        %v4493 = vand.u32 %v375, 4294901760
        %v4494 = vsub.f32 %v375, %v4493
        %4495 = vmatpush1.msra.mxu0 %v4494
        %4496 = vmatprep.subr.mxu0 0.0
        %v4497 = vand.u32 %v374, 4294901760
        %v4498 = vsub.f32 %v374, %v4497
        %4499 = vmatpush1.msra.mxu0 %v4498
        %4500 = vmatprep.subr.mxu0 0.0
        %v4501 = vand.u32 %v373, 4294901760
        %v4502 = vsub.f32 %v373, %v4501
        %4503 = vmatpush1.msra.mxu0 %v4502
        %4504 = vmatprep.subr.mxu0 0.0
        %v4505 = vand.u32 %v372, 4294901760
        %v4506 = vsub.f32 %v372, %v4505
        %4507 = vmatpush1.msra.mxu0 %v4506
        %4508 = vmatprep.subr.mxu0 0.0
        %v4509 = vand.u32 %v403, 4294901760
        %v4510 = vsub.f32 %v403, %v4509
        %4511 = vmatpush2.msra.mxu0 %v4510
        %4512 = vmatprep.subr.mxu0 0.0
        %v4513 = vand.u32 %v402, 4294901760
        %v4514 = vsub.f32 %v402, %v4513
        %4515 = vmatpush2.msra.mxu0 %v4514
        %4516 = vmatprep.subr.mxu0 0.0
        %v4517 = vand.u32 %v401, 4294901760
        %v4518 = vsub.f32 %v401, %v4517
        %4519 = vmatpush2.msra.mxu0 %v4518
        %4520 = vmatprep.subr.mxu0 0.0
        %v4521 = vand.u32 %v400, 4294901760
        %v4522 = vsub.f32 %v400, %v4521
        %4523 = vmatpush2.msra.mxu0 %v4522
        %4524 = vmatprep.subr.mxu0 0.0
        %v4525 = vand.u32 %v399, 4294901760
        %v4526 = vsub.f32 %v399, %v4525
        %4527 = vmatpush2.msra.mxu0 %v4526
        %4528 = vmatprep.subr.mxu0 0.0
        %v4529 = vand.u32 %v398, 4294901760
        %v4530 = vsub.f32 %v398, %v4529
        %4531 = vmatpush2.msra.mxu0 %v4530
        %4532 = vmatprep.subr.mxu0 0.0
        %v4533 = vand.u32 %v397, 4294901760
        %v4534 = vsub.f32 %v397, %v4533
        %4535 = vmatpush2.msra.mxu0 %v4534
        %4536 = vmatprep.subr.mxu0 0.0
        %v4537 = vand.u32 %v396, 4294901760
        %v4538 = vsub.f32 %v396, %v4537
        %4539 = vmatpush2.msra.mxu0 %v4538
        %4540 = vmatprep.subr.mxu0 0.0
        %v4541 = vand.u32 %v395, 4294901760
        %v4542 = vsub.f32 %v395, %v4541
        %4543 = vmatpush2.msra.mxu0 %v4542
        %4544 = vmatprep.subr.mxu0 0.0
        %v4545 = vand.u32 %v394, 4294901760
        %v4546 = vsub.f32 %v394, %v4545
        %4547 = vmatpush2.msra.mxu0 %v4546
        %4548 = vmatprep.subr.mxu0 0.0
        %v4549 = vand.u32 %v393, 4294901760
        %v4550 = vsub.f32 %v393, %v4549
        %4551 = vmatpush2.msra.mxu0 %v4550
        %4552 = vmatprep.subr.mxu0 0.0
        %v4553 = vand.u32 %v392, 4294901760
        %v4554 = vsub.f32 %v392, %v4553
        %4555 = vmatpush2.msra.mxu0 %v4554
        %4556 = vmatprep.subr.mxu0 0.0
        %v4557 = vand.u32 %v391, 4294901760
        %v4558 = vsub.f32 %v391, %v4557
        %4559 = vmatpush2.msra.mxu0 %v4558
        %4560 = vmatprep.subr.mxu0 0.0
        %v4561 = vand.u32 %v390, 4294901760
        %v4562 = vsub.f32 %v390, %v4561
        %4563 = vmatpush2.msra.mxu0 %v4562
        %4564 = vmatprep.subr.mxu0 0.0
        %v4565 = vand.u32 %v389, 4294901760
        %v4566 = vsub.f32 %v389, %v4565
        %4567 = vmatpush2.msra.mxu0 %v4566
        %4568 = vmatprep.subr.mxu0 0.0
        %v4569 = vand.u32 %v388, 4294901760
        %v4570 = vsub.f32 %v388, %v4569
        %4571 = vmatpush2.msra.mxu0 %v4570
        %v4572 = vand.u32 %v233, 4294901760
        %v4573 = vsub.f32 %v233, %v4572
        %4574 = vmatprep.mubr.f32.mxu0 %v4573
        %v4575 = vand.u32 %v232, 4294901760
        %v4576 = vsub.f32 %v232, %v4575
        %4577 = vmatmul.mubr.f32.gmra.mxu0 %v4576
        %v4578 = vpop.f32.mrf.mxu0
        %v4579 = vadd.f32 %v4434, %v4578
        %v4580 = vpop.f32.mrf.mxu0
        %v4581 = vand.u32 %v243, 4294901760
        %v4582 = vsub.f32 %v243, %v4581
        %4583 = vmatprep.mubr.f32.mxu0 %v4582
        %v4584 = vand.u32 %v242, 4294901760
        %v4585 = vsub.f32 %v242, %v4584
        %4586 = vmatmul.mubr.f32.gmra.mxu0 %v4585
        %v4587 = vpop.f32.mrf.mxu0
        %v4588 = vadd.f32 %v4441, %v4587
        %v4589 = vpop.f32.mrf.mxu0
        %4590 = vdwg.mxu0
        %4591 = vmatprep.subr.mxu0 0.0
        %v4592 = vand.u32 %v387, 4294901760
        %4593 = vmatpush1.msra.mxu0 %v4592
        %4594 = vmatprep.subr.mxu0 0.0
        %v4595 = vand.u32 %v386, 4294901760
        %4596 = vmatpush1.msra.mxu0 %v4595
        %4597 = vmatprep.subr.mxu0 0.0
        %v4598 = vand.u32 %v385, 4294901760
        %4599 = vmatpush1.msra.mxu0 %v4598
        %4600 = vmatprep.subr.mxu0 0.0
        %v4601 = vand.u32 %v384, 4294901760
        %4602 = vmatpush1.msra.mxu0 %v4601
        %4603 = vmatprep.subr.mxu0 0.0
        %v4604 = vand.u32 %v383, 4294901760
        %4605 = vmatpush1.msra.mxu0 %v4604
        %4606 = vmatprep.subr.mxu0 0.0
        %v4607 = vand.u32 %v382, 4294901760
        %4608 = vmatpush1.msra.mxu0 %v4607
        %4609 = vmatprep.subr.mxu0 0.0
        %v4610 = vand.u32 %v381, 4294901760
        %4611 = vmatpush1.msra.mxu0 %v4610
        %4612 = vmatprep.subr.mxu0 0.0
        %v4613 = vand.u32 %v380, 4294901760
        %4614 = vmatpush1.msra.mxu0 %v4613
        %4615 = vmatprep.subr.mxu0 0.0
        %v4616 = vand.u32 %v379, 4294901760
        %4617 = vmatpush1.msra.mxu0 %v4616
        %4618 = vmatprep.subr.mxu0 0.0
        %v4619 = vand.u32 %v378, 4294901760
        %4620 = vmatpush1.msra.mxu0 %v4619
        %4621 = vmatprep.subr.mxu0 0.0
        %v4622 = vand.u32 %v377, 4294901760
        %4623 = vmatpush1.msra.mxu0 %v4622
        %4624 = vmatprep.subr.mxu0 0.0
        %v4625 = vand.u32 %v376, 4294901760
        %4626 = vmatpush1.msra.mxu0 %v4625
        %4627 = vmatprep.subr.mxu0 0.0
        %v4628 = vand.u32 %v375, 4294901760
        %4629 = vmatpush1.msra.mxu0 %v4628
        %4630 = vmatprep.subr.mxu0 0.0
        %v4631 = vand.u32 %v374, 4294901760
        %4632 = vmatpush1.msra.mxu0 %v4631
        %4633 = vmatprep.subr.mxu0 0.0
        %v4634 = vand.u32 %v373, 4294901760
        %4635 = vmatpush1.msra.mxu0 %v4634
        %4636 = vmatprep.subr.mxu0 0.0
        %v4637 = vand.u32 %v372, 4294901760
        %4638 = vmatpush1.msra.mxu0 %v4637
        %4639 = vmatprep.subr.mxu0 0.0
        %v4640 = vand.u32 %v403, 4294901760
        %4641 = vmatpush2.msra.mxu0 %v4640
        %4642 = vmatprep.subr.mxu0 0.0
        %v4643 = vand.u32 %v402, 4294901760
        %4644 = vmatpush2.msra.mxu0 %v4643
        %4645 = vmatprep.subr.mxu0 0.0
        %v4646 = vand.u32 %v401, 4294901760
        %4647 = vmatpush2.msra.mxu0 %v4646
        %4648 = vmatprep.subr.mxu0 0.0
        %v4649 = vand.u32 %v400, 4294901760
        %4650 = vmatpush2.msra.mxu0 %v4649
        %4651 = vmatprep.subr.mxu0 0.0
        %v4652 = vand.u32 %v399, 4294901760
        %4653 = vmatpush2.msra.mxu0 %v4652
        %4654 = vmatprep.subr.mxu0 0.0
        %v4655 = vand.u32 %v398, 4294901760
        %4656 = vmatpush2.msra.mxu0 %v4655
        %4657 = vmatprep.subr.mxu0 0.0
        %v4658 = vand.u32 %v397, 4294901760
        %4659 = vmatpush2.msra.mxu0 %v4658
        %4660 = vmatprep.subr.mxu0 0.0
        %v4661 = vand.u32 %v396, 4294901760
        %4662 = vmatpush2.msra.mxu0 %v4661
        %4663 = vmatprep.subr.mxu0 0.0
        %v4664 = vand.u32 %v395, 4294901760
        %4665 = vmatpush2.msra.mxu0 %v4664
        %4666 = vmatprep.subr.mxu0 0.0
        %v4667 = vand.u32 %v394, 4294901760
        %4668 = vmatpush2.msra.mxu0 %v4667
        %4669 = vmatprep.subr.mxu0 0.0
        %v4670 = vand.u32 %v393, 4294901760
        %4671 = vmatpush2.msra.mxu0 %v4670
        %4672 = vmatprep.subr.mxu0 0.0
        %v4673 = vand.u32 %v392, 4294901760
        %4674 = vmatpush2.msra.mxu0 %v4673
        %4675 = vmatprep.subr.mxu0 0.0
        %v4676 = vand.u32 %v391, 4294901760
        %4677 = vmatpush2.msra.mxu0 %v4676
        %4678 = vmatprep.subr.mxu0 0.0
        %v4679 = vand.u32 %v390, 4294901760
        %4680 = vmatpush2.msra.mxu0 %v4679
        %4681 = vmatprep.subr.mxu0 0.0
        %v4682 = vand.u32 %v389, 4294901760
        %4683 = vmatpush2.msra.mxu0 %v4682
        %4684 = vmatprep.subr.mxu0 0.0
        %v4685 = vand.u32 %v388, 4294901760
        %4686 = vmatpush2.msra.mxu0 %v4685
        %v4687 = vand.u32 %v233, 4294901760
        %v4688 = vsub.f32 %v233, %v4687
        %v4689 = vand.u32 %v4688, 4294901760
        %4690 = vmatprep.mubr.f32.mxu0 %v4689
        %v4691 = vand.u32 %v232, 4294901760
        %v4692 = vsub.f32 %v232, %v4691
        %v4693 = vand.u32 %v4692, 4294901760
        %4694 = vmatmul.mubr.f32.gmra.mxu0 %v4693
        %v4695 = vpop.f32.mrf.mxu0
        %v4696 = vadd.f32 %v4579, %v4695
        %v4697 = vpop.f32.mrf.mxu0
        %v4698 = vand.u32 %v243, 4294901760
        %v4699 = vsub.f32 %v243, %v4698
        %v4700 = vand.u32 %v4699, 4294901760
        %4701 = vmatprep.mubr.f32.mxu0 %v4700
        %v4702 = vand.u32 %v242, 4294901760
        %v4703 = vsub.f32 %v242, %v4702
        %v4704 = vand.u32 %v4703, 4294901760
        %4705 = vmatmul.mubr.f32.gmra.mxu0 %v4704
        %v4706 = vpop.f32.mrf.mxu0
        %v4707 = vadd.f32 %v4588, %v4706
        %v4708 = vpop.f32.mrf.mxu0
        %4709 = vdwg.mxu0
        %4710 = vmatprep.subr.mxu0 0.0
        %v4711 = vand.u32 %v387, 4294901760
        %v4712 = vsub.f32 %v387, %v4711
        %v4713 = vand.u32 %v4712, 4294901760
        %4714 = vmatpush1.msra.mxu0 %v4713
        %4715 = vmatprep.subr.mxu0 0.0
        %v4716 = vand.u32 %v386, 4294901760
        %v4717 = vsub.f32 %v386, %v4716
        %v4718 = vand.u32 %v4717, 4294901760
        %4719 = vmatpush1.msra.mxu0 %v4718
        %4720 = vmatprep.subr.mxu0 0.0
        %v4721 = vand.u32 %v385, 4294901760
        %v4722 = vsub.f32 %v385, %v4721
        %v4723 = vand.u32 %v4722, 4294901760
        %4724 = vmatpush1.msra.mxu0 %v4723
        %4725 = vmatprep.subr.mxu0 0.0
        %v4726 = vand.u32 %v384, 4294901760
        %v4727 = vsub.f32 %v384, %v4726
        %v4728 = vand.u32 %v4727, 4294901760
        %4729 = vmatpush1.msra.mxu0 %v4728
        %4730 = vmatprep.subr.mxu0 0.0
        %v4731 = vand.u32 %v383, 4294901760
        %v4732 = vsub.f32 %v383, %v4731
        %v4733 = vand.u32 %v4732, 4294901760
        %4734 = vmatpush1.msra.mxu0 %v4733
        %4735 = vmatprep.subr.mxu0 0.0
        %v4736 = vand.u32 %v382, 4294901760
        %v4737 = vsub.f32 %v382, %v4736
        %v4738 = vand.u32 %v4737, 4294901760
        %4739 = vmatpush1.msra.mxu0 %v4738
        %4740 = vmatprep.subr.mxu0 0.0
        %v4741 = vand.u32 %v381, 4294901760
        %v4742 = vsub.f32 %v381, %v4741
        %v4743 = vand.u32 %v4742, 4294901760
        %4744 = vmatpush1.msra.mxu0 %v4743
        %4745 = vmatprep.subr.mxu0 0.0
        %v4746 = vand.u32 %v380, 4294901760
        %v4747 = vsub.f32 %v380, %v4746
        %v4748 = vand.u32 %v4747, 4294901760
        %4749 = vmatpush1.msra.mxu0 %v4748
        %4750 = vmatprep.subr.mxu0 0.0
        %v4751 = vand.u32 %v379, 4294901760
        %v4752 = vsub.f32 %v379, %v4751
        %v4753 = vand.u32 %v4752, 4294901760
        %4754 = vmatpush1.msra.mxu0 %v4753
        %4755 = vmatprep.subr.mxu0 0.0
        %v4756 = vand.u32 %v378, 4294901760
        %v4757 = vsub.f32 %v378, %v4756
        %v4758 = vand.u32 %v4757, 4294901760
        %4759 = vmatpush1.msra.mxu0 %v4758
        %4760 = vmatprep.subr.mxu0 0.0
        %v4761 = vand.u32 %v377, 4294901760
        %v4762 = vsub.f32 %v377, %v4761
        %v4763 = vand.u32 %v4762, 4294901760
        %4764 = vmatpush1.msra.mxu0 %v4763
        %4765 = vmatprep.subr.mxu0 0.0
        %v4766 = vand.u32 %v376, 4294901760
        %v4767 = vsub.f32 %v376, %v4766
        %v4768 = vand.u32 %v4767, 4294901760
        %4769 = vmatpush1.msra.mxu0 %v4768
        %4770 = vmatprep.subr.mxu0 0.0
        %v4771 = vand.u32 %v375, 4294901760
        %v4772 = vsub.f32 %v375, %v4771
        %v4773 = vand.u32 %v4772, 4294901760
        %4774 = vmatpush1.msra.mxu0 %v4773
        %4775 = vmatprep.subr.mxu0 0.0
        %v4776 = vand.u32 %v374, 4294901760
        %v4777 = vsub.f32 %v374, %v4776
        %v4778 = vand.u32 %v4777, 4294901760
        %4779 = vmatpush1.msra.mxu0 %v4778
        %4780 = vmatprep.subr.mxu0 0.0
        %v4781 = vand.u32 %v373, 4294901760
        %v4782 = vsub.f32 %v373, %v4781
        %v4783 = vand.u32 %v4782, 4294901760
        %4784 = vmatpush1.msra.mxu0 %v4783
        %4785 = vmatprep.subr.mxu0 0.0
        %v4786 = vand.u32 %v372, 4294901760
        %v4787 = vsub.f32 %v372, %v4786
        %v4788 = vand.u32 %v4787, 4294901760
        %4789 = vmatpush1.msra.mxu0 %v4788
        %4790 = vmatprep.subr.mxu0 0.0
        %v4791 = vand.u32 %v403, 4294901760
        %v4792 = vsub.f32 %v403, %v4791
        %v4793 = vand.u32 %v4792, 4294901760
        %4794 = vmatpush2.msra.mxu0 %v4793
        %4795 = vmatprep.subr.mxu0 0.0
        %v4796 = vand.u32 %v402, 4294901760
        %v4797 = vsub.f32 %v402, %v4796
        %v4798 = vand.u32 %v4797, 4294901760
        %4799 = vmatpush2.msra.mxu0 %v4798
        %4800 = vmatprep.subr.mxu0 0.0
        %v4801 = vand.u32 %v401, 4294901760
        %v4802 = vsub.f32 %v401, %v4801
        %v4803 = vand.u32 %v4802, 4294901760
        %4804 = vmatpush2.msra.mxu0 %v4803
        %4805 = vmatprep.subr.mxu0 0.0
        %v4806 = vand.u32 %v400, 4294901760
        %v4807 = vsub.f32 %v400, %v4806
        %v4808 = vand.u32 %v4807, 4294901760
        %4809 = vmatpush2.msra.mxu0 %v4808
        %4810 = vmatprep.subr.mxu0 0.0
        %v4811 = vand.u32 %v399, 4294901760
        %v4812 = vsub.f32 %v399, %v4811
        %v4813 = vand.u32 %v4812, 4294901760
        %4814 = vmatpush2.msra.mxu0 %v4813
        %4815 = vmatprep.subr.mxu0 0.0
        %v4816 = vand.u32 %v398, 4294901760
        %v4817 = vsub.f32 %v398, %v4816
        %v4818 = vand.u32 %v4817, 4294901760
        %4819 = vmatpush2.msra.mxu0 %v4818
        %4820 = vmatprep.subr.mxu0 0.0
        %v4821 = vand.u32 %v397, 4294901760
        %v4822 = vsub.f32 %v397, %v4821
        %v4823 = vand.u32 %v4822, 4294901760
        %4824 = vmatpush2.msra.mxu0 %v4823
        %4825 = vmatprep.subr.mxu0 0.0
        %v4826 = vand.u32 %v396, 4294901760
        %v4827 = vsub.f32 %v396, %v4826
        %v4828 = vand.u32 %v4827, 4294901760
        %4829 = vmatpush2.msra.mxu0 %v4828
        %4830 = vmatprep.subr.mxu0 0.0
        %v4831 = vand.u32 %v395, 4294901760
        %v4832 = vsub.f32 %v395, %v4831
        %v4833 = vand.u32 %v4832, 4294901760
        %4834 = vmatpush2.msra.mxu0 %v4833
        %4835 = vmatprep.subr.mxu0 0.0
        %v4836 = vand.u32 %v394, 4294901760
        %v4837 = vsub.f32 %v394, %v4836
        %v4838 = vand.u32 %v4837, 4294901760
        %4839 = vmatpush2.msra.mxu0 %v4838
        %4840 = vmatprep.subr.mxu0 0.0
        %v4841 = vand.u32 %v393, 4294901760
        %v4842 = vsub.f32 %v393, %v4841
        %v4843 = vand.u32 %v4842, 4294901760
        %4844 = vmatpush2.msra.mxu0 %v4843
        %4845 = vmatprep.subr.mxu0 0.0
        %v4846 = vand.u32 %v392, 4294901760
        %v4847 = vsub.f32 %v392, %v4846
        %v4848 = vand.u32 %v4847, 4294901760
        %4849 = vmatpush2.msra.mxu0 %v4848
        %4850 = vmatprep.subr.mxu0 0.0
        %v4851 = vand.u32 %v391, 4294901760
        %v4852 = vsub.f32 %v391, %v4851
        %v4853 = vand.u32 %v4852, 4294901760
        %4854 = vmatpush2.msra.mxu0 %v4853
        %4855 = vmatprep.subr.mxu0 0.0
        %v4856 = vand.u32 %v390, 4294901760
        %v4857 = vsub.f32 %v390, %v4856
        %v4858 = vand.u32 %v4857, 4294901760
        %4859 = vmatpush2.msra.mxu0 %v4858
        %4860 = vmatprep.subr.mxu0 0.0
        %v4861 = vand.u32 %v389, 4294901760
        %v4862 = vsub.f32 %v389, %v4861
        %v4863 = vand.u32 %v4862, 4294901760
        %4864 = vmatpush2.msra.mxu0 %v4863
        %4865 = vmatprep.subr.mxu0 0.0
        %v4866 = vand.u32 %v388, 4294901760
        %v4867 = vsub.f32 %v388, %v4866
        %v4868 = vand.u32 %v4867, 4294901760
        %4869 = vmatpush2.msra.mxu0 %v4868
        %v4870 = vand.u32 %v233, 4294901760
        %4871 = vmatprep.mubr.f32.mxu0 %v4870
        %v4872 = vand.u32 %v232, 4294901760
        %4873 = vmatmul.mubr.f32.gmra.mxu0 %v4872
        %v4874 = vpop.f32.mrf.mxu0
        %v4875 = vadd.f32 %v4696, %v4874
        %v4876 = vpop.f32.mrf.mxu0
        %v4877 = vand.u32 %v243, 4294901760
        %4878 = vmatprep.mubr.f32.mxu0 %v4877
        %v4879 = vand.u32 %v242, 4294901760
        %4880 = vmatmul.mubr.f32.gmra.mxu0 %v4879
        %v4881 = vpop.f32.mrf.mxu0
        %v4882 = vadd.f32 %v4707, %v4881
        %v4883 = vpop.f32.mrf.mxu0
        %4884 = vdwg.mxu0
        %4885 = vmatprep.subr.mxu0 0.0
        %v4886 = vand.u32 %v387, 4294901760
        %4887 = vmatpush1.msra.mxu0 %v4886
        %4888 = vmatprep.subr.mxu0 0.0
        %v4889 = vand.u32 %v386, 4294901760
        %4890 = vmatpush1.msra.mxu0 %v4889
        %4891 = vmatprep.subr.mxu0 0.0
        %v4892 = vand.u32 %v385, 4294901760
        %4893 = vmatpush1.msra.mxu0 %v4892
        %4894 = vmatprep.subr.mxu0 0.0
        %v4895 = vand.u32 %v384, 4294901760
        %4896 = vmatpush1.msra.mxu0 %v4895
        %4897 = vmatprep.subr.mxu0 0.0
        %v4898 = vand.u32 %v383, 4294901760
        %4899 = vmatpush1.msra.mxu0 %v4898
        %4900 = vmatprep.subr.mxu0 0.0
        %v4901 = vand.u32 %v382, 4294901760
        %4902 = vmatpush1.msra.mxu0 %v4901
        %4903 = vmatprep.subr.mxu0 0.0
        %v4904 = vand.u32 %v381, 4294901760
        %4905 = vmatpush1.msra.mxu0 %v4904
        %4906 = vmatprep.subr.mxu0 0.0
        %v4907 = vand.u32 %v380, 4294901760
        %4908 = vmatpush1.msra.mxu0 %v4907
        %4909 = vmatprep.subr.mxu0 0.0
        %v4910 = vand.u32 %v379, 4294901760
        %4911 = vmatpush1.msra.mxu0 %v4910
        %4912 = vmatprep.subr.mxu0 0.0
        %v4913 = vand.u32 %v378, 4294901760
        %4914 = vmatpush1.msra.mxu0 %v4913
        %4915 = vmatprep.subr.mxu0 0.0
        %v4916 = vand.u32 %v377, 4294901760
        %4917 = vmatpush1.msra.mxu0 %v4916
        %4918 = vmatprep.subr.mxu0 0.0
        %v4919 = vand.u32 %v376, 4294901760
        %4920 = vmatpush1.msra.mxu0 %v4919
        %4921 = vmatprep.subr.mxu0 0.0
        %v4922 = vand.u32 %v375, 4294901760
        %4923 = vmatpush1.msra.mxu0 %v4922
        %4924 = vmatprep.subr.mxu0 0.0
        %v4925 = vand.u32 %v374, 4294901760
        %4926 = vmatpush1.msra.mxu0 %v4925
        %4927 = vmatprep.subr.mxu0 0.0
        %v4928 = vand.u32 %v373, 4294901760
        %4929 = vmatpush1.msra.mxu0 %v4928
        %4930 = vmatprep.subr.mxu0 0.0
        %v4931 = vand.u32 %v372, 4294901760
        %4932 = vmatpush1.msra.mxu0 %v4931
        %4933 = vmatprep.subr.mxu0 0.0
        %v4934 = vand.u32 %v403, 4294901760
        %4935 = vmatpush2.msra.mxu0 %v4934
        %4936 = vmatprep.subr.mxu0 0.0
        %v4937 = vand.u32 %v402, 4294901760
        %4938 = vmatpush2.msra.mxu0 %v4937
        %4939 = vmatprep.subr.mxu0 0.0
        %v4940 = vand.u32 %v401, 4294901760
        %4941 = vmatpush2.msra.mxu0 %v4940
        %4942 = vmatprep.subr.mxu0 0.0
        %v4943 = vand.u32 %v400, 4294901760
        %4944 = vmatpush2.msra.mxu0 %v4943
        %4945 = vmatprep.subr.mxu0 0.0
        %v4946 = vand.u32 %v399, 4294901760
        %4947 = vmatpush2.msra.mxu0 %v4946
        %4948 = vmatprep.subr.mxu0 0.0
        %v4949 = vand.u32 %v398, 4294901760
        %4950 = vmatpush2.msra.mxu0 %v4949
        %4951 = vmatprep.subr.mxu0 0.0
        %v4952 = vand.u32 %v397, 4294901760
        %4953 = vmatpush2.msra.mxu0 %v4952
        %4954 = vmatprep.subr.mxu0 0.0
        %v4955 = vand.u32 %v396, 4294901760
        %4956 = vmatpush2.msra.mxu0 %v4955
        %4957 = vmatprep.subr.mxu0 0.0
        %v4958 = vand.u32 %v395, 4294901760
        %4959 = vmatpush2.msra.mxu0 %v4958
        %4960 = vmatprep.subr.mxu0 0.0
        %v4961 = vand.u32 %v394, 4294901760
        %4962 = vmatpush2.msra.mxu0 %v4961
        %4963 = vmatprep.subr.mxu0 0.0
        %v4964 = vand.u32 %v393, 4294901760
        %4965 = vmatpush2.msra.mxu0 %v4964
        %4966 = vmatprep.subr.mxu0 0.0
        %v4967 = vand.u32 %v392, 4294901760
        %4968 = vmatpush2.msra.mxu0 %v4967
        %4969 = vmatprep.subr.mxu0 0.0
        %v4970 = vand.u32 %v391, 4294901760
        %4971 = vmatpush2.msra.mxu0 %v4970
        %4972 = vmatprep.subr.mxu0 0.0
        %v4973 = vand.u32 %v390, 4294901760
        %4974 = vmatpush2.msra.mxu0 %v4973
        %4975 = vmatprep.subr.mxu0 0.0
        %v4976 = vand.u32 %v389, 4294901760
        %4977 = vmatpush2.msra.mxu0 %v4976
        %4978 = vmatprep.subr.mxu0 0.0
        %v4979 = vand.u32 %v388, 4294901760
        %4980 = vmatpush2.msra.mxu0 %v4979
        %v4981 = vand.u32 %v233, 4294901760
        %4982 = vmatprep.mubr.f32.mxu0 %v4981
        %v4983 = vand.u32 %v232, 4294901760
        %4984 = vmatmul.mubr.f32.gmra.mxu0 %v4983
        %v4985 = vpop.f32.mrf.mxu0
        %v4986 = vadd.f32 %v4875, %v4985
        %v4987 = vpop.f32.mrf.mxu0
        %v4988 = vand.u32 %v243, 4294901760
        %4989 = vmatprep.mubr.f32.mxu0 %v4988
        %v4990 = vand.u32 %v242, 4294901760
        %4991 = vmatmul.mubr.f32.gmra.mxu0 %v4990
        %v4992 = vpop.f32.mrf.mxu0
        %v4993 = vadd.f32 %v4882, %v4992
        %v4994 = vpop.f32.mrf.mxu0
        %4995 = vdwg.mxu0
        %4996 = vst [vmem:[%s212] sm:$0xff] %v4986
        %4997 = vst [vmem:[%s212 + $0x8] sm:$0xff] %v4993
        %s4998 = sand.u32 %s98, 1
        %s4999 = scalar_lea.sflag [#allocation5], %s4998
        %s5000 = sand.u32 %s98, 1
        %s5001 = smul.addr %s5000, 16
        %s5002 = scalar_lea.vmem [#allocation8], %s5001
        // Predicated region
        $region41: #{tpu_custom_call.1} parent=31 // pred_check
          %p5003 = pneg %p108
        $region42: #{tpu_custom_call.1} parent=31 // pred_check_branch
          %5005 = sbr.rel (%p5003) target = $region44
        $region43: #{tpu_custom_call.1} parent=31 // pred_region
          %s5006 = smul.u32 2, %s22
          %s5007 = ssub.s32 3, %s5006
          %p5008 = scmp.lt.s32.totalorder %s5007, 2
          %s5009 = scalar_select %p5008, %s5007, 2
          %s5010 = smul.u32 128, %s5009
          %s5012 = ssub.s32 256, %s5010
          %5013 = vsyncadd %s4999, %s5012
          %p5014 = scmp.ne.s32.totalorder 0, %s5010
          %s5015 = smul.addr %s5006, 128
          %s5016 = scalar_lea.hbm %s3, %s5015
          %s5017 = smul.u32 8, %s5009
          %s5018 = sshll.u32 %s5002, 4
          %s5019 = int_to_ptr.vmem [resolvable:$true] %s5018
          %s5020 = sshll.u32 %s5017, 4
          %5024 = dma.vmem_to_hbm [thread:$0]  (%p5014), %s5019, %s5020, %s5016, %s4999, 128, 128, 8
        $region44: #{tpu_custom_call.1} parent=31 // pred_fallthru
          _
      $region32: #{tpu_custom_call.1} parent=5 // pred_fallthru
        _
      %p5025 = scmp.le.s32.totalorder 2, %s17
      // Predicated region
      $region45: #{tpu_custom_call.1} parent=5 // pred_check
        %p5026 = pneg %p5025
      $region46: #{tpu_custom_call.1} parent=5 // pred_check_branch
        %5028 = sbr.rel (%p5026) target = $region48
      $region47: #{tpu_custom_call.1} parent=5 // pred_region
        %s5029 = ssub.s32 %s17, 2
        // Predicated region
        $region49: #{tpu_custom_call.1} parent=47 // pred_check
          %p5030 = pneg %p114
        $region50: #{tpu_custom_call.1} parent=47 // pred_check_branch
          %5032 = sbr.rel (%p5030) target = $region52
        $region51: #{tpu_custom_call.1} parent=47 // pred_region
          %s5033 = sand.u32 %s99, 1
          %s5034 = scalar_lea.sflag [#allocation5], %s5033
          %s5035 = sand.u32 %s99, 1
          %s5036 = smul.addr %s5035, 16
          %s5037 = scalar_lea.vmem [#allocation8], %s5036
          %5038 = dma.done %s5034, 256
        $region52: #{tpu_custom_call.1} parent=47 // pred_fallthru
          _
      $region48: #{tpu_custom_call.1} parent=5 // pred_fallthru
        _
    $region6: #{tpu_custom_call.1} parent=1 // loop_footer
      %s21 = sadd.s32 1, %s17
    $region7: #{tpu_custom_call.1} parent=1 // loop_footer_branch
      %16 = sbr.rel target = $region3
    $region8: #{tpu_custom_call.1} parent=1 // loop_exit
      _
    %5039 = vsyncpa [#allocation4], 1
    %s5040 = scalar_lea.sflag [#allocation4], 1
    %5041 = vsyncpa %s5040, 1
    %5042 = vsyncpa [#allocation7], 1
    %5043 = vsyncpa [#allocation5], 1
    %s5044 = scalar_lea.sflag [#allocation5], 1
    %5045 = vsyncpa %s5044, 1

</llo_original>
